<compile_context>
chip_gen: v7x
topology: tpu7x:2x2x1
jax: 0.10.0
libtpu: 0.0.40
codegen_flags: <defaults>
</compile_context>

<pallas_src>
import jax
import jax.numpy as jnp
from jax.experimental import pallas as pl
from jax.experimental.pallas import tpu as pltpu


# Batch rows per grid step. 1024 = 8 sublane-tiles x 128 lanes, so each step
# emits exactly one lane-dense (8, 128) output tile. Per-step VMEM use is
# ~2 buffers x (TB*F + TB) * 4B  (<1 MiB at F=16), far under the 32 MiB scoped
# default on v7x (64 MiB physical) and trivially under v5e/v6e's 128 MiB, so
# the same tile size is safe on all three generations. Must be a multiple of
# 1024 so the output block stays (8k, 128)-tile aligned.
BLOCK_BATCH = 1024


def value_network_kernel(x_ref, w1_ref, b1_ref, w2_ref, b2_ref, w3_ref, b3_ref,
                         out_ref):
    # x_ref: (TB, F) streamed tile. Weights/biases are grid-invariant blocks,
    # so they are DMA'd once and stay resident across all batch tiles.
    x = x_ref[...]

    # Layer 1: Linear(F -> H) + tanh (MXU matmul, f32 accumulation; tanh on the
    # EUP in f32 -- required on v5e, free on v6e/v7x).
    h1 = jnp.tanh(jnp.dot(x, w1_ref[...],
                          preferred_element_type=jnp.float32) + b1_ref[...])

    # Layer 2: Linear(H -> H) + tanh.
    h2 = jnp.tanh(jnp.dot(h1, w2_ref[...],
                          preferred_element_type=jnp.float32) + b2_ref[...])

    # Output head Linear(H -> 1): an N=1 MXU matmul would burn a full MXU pass
    # for a single output column, so do it as a VPU multiply + XLU lane-reduce.
    # The (TB,) values are produced directly as an (TB//128, 128) tile with the
    # batch index on the lane axis -> unmasked, lane-dense stores.
    p = h2 * w3_ref[...]                                   # (TB, H) on the VPU
    p = p.reshape(out_ref.shape[0], out_ref.shape[1], p.shape[-1])
    v = jnp.sum(p, axis=-1) + b3_ref[0]                    # (TB//128, 128)
    out_ref[...] = v.astype(out_ref.dtype)

    # TODO(synk): for HBM-bound rollout batches, accept bf16 x/w1/w2 (keeping
    # f32 accumulation) to halve streamed bytes; kept f32 here to preserve the
    # 1e-5 parity with the PyTorch reference.


def value_network_forward(x, params, *, block_batch=BLOCK_BATCH):
    """x: [B, num_input] float32. params: dict of (w1, b1, w2, b2, w3, b3)."""
    w1, b1, w2, b2 = params["w1"], params["b1"], params["w2"], params["b2"]
    w3, b3 = params["w3"], params["b3"]

    B, F = x.shape
    H = w1.shape[1]
    TB = block_batch
    assert TB % 1024 == 0, "block_batch must be a multiple of 1024"

    num_blocks = (B + TB - 1) // TB
    B_pad = num_blocks * TB
    if B_pad != B:
        x = jnp.pad(x, ((0, B_pad - B), (0, 0)))

    w3_row = w3.reshape(1, H)   # (H, 1) -> (1, H) row for the VPU head
    b3_s = b3.reshape(1)        # scalar bias -> SMEM

    rows_per_block = TB // 128
    out_rows = B_pad // 128

    kernel = pl.pallas_call(
        value_network_kernel,
        out_shape=jax.ShapeDtypeStruct((out_rows, 128), jnp.float32),
        grid_spec=pltpu.PrefetchScalarGridSpec(
            num_scalar_prefetch=0,
            grid=(num_blocks,),
            in_specs=[
                pl.BlockSpec((TB, F), lambda i: (i, 0)),   # x: streamed tiles
                pl.BlockSpec((F, H), lambda i: (0, 0)),    # w1: VMEM-resident
                pl.BlockSpec((1, H), lambda i: (0, 0)),    # b1
                pl.BlockSpec((H, H), lambda i: (0, 0)),    # w2
                pl.BlockSpec((1, H), lambda i: (0, 0)),    # b2
                pl.BlockSpec((1, H), lambda i: (0, 0)),    # w3 row
                pl.BlockSpec(memory_space=pltpu.MemorySpace.SMEM),  # b3 scalar
            ],
            out_specs=pl.BlockSpec((rows_per_block, 128), lambda i: (i, 0)),
        ),
        compiler_params=pltpu.CompilerParams(
            dimension_semantics=("parallel",),   # shard batch tiles over TCs (v7x)
            vmem_limit_bytes=32 * 1024 * 1024,
        ),
        cost_estimate=pl.CostEstimate(
            flops=2 * B_pad * (F * H + H * H + H),
            transcendentals=2 * B_pad * H,
            bytes_accessed=4 * (B_pad * F + B_pad + F * H + H * H + 3 * H + 1),
        ),
    )
    out = kernel(x, w1, b1, w2, b2, w3_row, b3_s)
    # Lane-dense (out_rows, 128) slab -> (B, 1): pure layout plumbing in XLA.
    return out.reshape(B_pad, 1)[:B]


def init_value_network_params(key, num_input, num_hidden):
    """Deterministic init matching torch.nn.Linear's U(-1/sqrt(fan_in), ...)."""
    ks = jax.random.split(key, 6)

    def linear(kw, kb, fan_in, fan_out):
        bound = 1.0 / jnp.sqrt(jnp.float32(fan_in))
        w = jax.random.uniform(kw, (fan_in, fan_out), jnp.float32, -bound, bound)
        b = jax.random.uniform(kb, (1, fan_out), jnp.float32, -bound, bound)
        return w, b

    w1, b1 = linear(ks[0], ks[1], num_input, num_hidden)
    w2, b2 = linear(ks[2], ks[3], num_hidden, num_hidden)
    w3, b3 = linear(ks[4], ks[5], num_hidden, 1)
    return dict(w1=w1, b1=b1, w2=w2, b2=b2, w3=w3, b3=b3)


def value_network_ref(x, params):
    """Pure-JAX reference for correctness check."""
    h = jnp.tanh(x @ params["w1"] + params["b1"])
    h = jnp.tanh(h @ params["w2"] + params["b2"])
    return h @ params["w3"] + params["b3"]


if __name__ == "__main__":
    key = jax.random.PRNGKey(0)
    k_params, k_x = jax.random.split(key)

    batch = 8
    num_input = 16
    num_hidden = 32

    params = init_value_network_params(k_params, num_input, num_hidden)
    x = jax.random.normal(k_x, (batch, num_input), jnp.float32)

    value = value_network_forward(x, params)
    value = jax.block_until_ready(value)

    ref = value_network_ref(x, params)
    assert value.shape == (batch, 1), value.shape
    assert jnp.allclose(value, ref, atol=1e-4, rtol=1e-4), (
        f"max abs err {jnp.max(jnp.abs(value - ref))}")

    print("KERNEL_OK")
</pallas_src>

<mosaic_0001>
module attributes {stable_mosaic.version = 11 : i64} {
  func.func @value_network_kernel(%arg0: i32, %arg1: memref<1024x16xf32, #tpu.memory_space<vmem>>, %arg2: memref<16x32xf32, #tpu.memory_space<vmem>>, %arg3: memref<1x32xf32, #tpu.memory_space<vmem>>, %arg4: memref<32x32xf32, #tpu.memory_space<vmem>>, %arg5: memref<1x32xf32, #tpu.memory_space<vmem>>, %arg6: memref<1x32xf32, #tpu.memory_space<vmem>>, %arg7: memref<1xf32, #tpu.memory_space<smem>>, %arg8: memref<8x128xf32, #tpu.memory_space<vmem>>) attributes {dimension_semantics = [#tpu.dimension_semantics<parallel>], iteration_bounds = array<i64: 1>, scalar_prefetch = 0 : i64, scratch_operands = 0 : i64, tpu.core_type = #tpu.core_type<tc>, window_params = [{transform_indices = @transform_0, window_bounds = array<i64: 1024, 16>}, {pipeline_mode = #tpu.pipeline_mode<synchronous>, transform_indices = @transform_1, window_bounds = array<i64: 16, 32>}, {pipeline_mode = #tpu.pipeline_mode<synchronous>, transform_indices = @transform_2, window_bounds = array<i64: 1, 32>}, {pipeline_mode = #tpu.pipeline_mode<synchronous>, transform_indices = @transform_3, window_bounds = array<i64: 32, 32>}, {pipeline_mode = #tpu.pipeline_mode<synchronous>, transform_indices = @transform_4, window_bounds = array<i64: 1, 32>}, {pipeline_mode = #tpu.pipeline_mode<synchronous>, transform_indices = @transform_5, window_bounds = array<i64: 1, 32>}, {transform_indices = @transform_6, window_bounds = array<i64: 1>}, {transform_indices = @transform_7, window_bounds = array<i64: 8, 128>}]} {
    %c0 = arith.constant 0 : index
    %c0_0 = arith.constant 0 : index
    %0 = vector.load %arg1[%c0, %c0_0] : memref<1024x16xf32, #tpu.memory_space<vmem>>, vector<1024x16xf32>
    %c0_1 = arith.constant 0 : index
    %c0_2 = arith.constant 0 : index
    %1 = vector.load %arg2[%c0_1, %c0_2] : memref<16x32xf32, #tpu.memory_space<vmem>>, vector<16x32xf32>
    %cst = arith.constant dense<0.000000e+00> : vector<1024x32xf32>
    %2 = tpu.matmul %0, %1, %cst {dimension_numbers = #tpu.dot_dimension_numbers<[1], [0], [0], [1], [0, 0, 1, 1], [], []>} : vector<1024x16xf32>, vector<16x32xf32>, vector<1024x32xf32> -> vector<1024x32xf32>
    %c0_3 = arith.constant 0 : index
    %c0_4 = arith.constant 0 : index
    %3 = vector.load %arg3[%c0_3, %c0_4] : memref<1x32xf32, #tpu.memory_space<vmem>>, vector<1x32xf32>
    %4 = vector.broadcast %3 : vector<1x32xf32> to vector<1024x32xf32>
    %5 = arith.addf %2, %4 : vector<1024x32xf32>
    %6 = math.tanh %5 : vector<1024x32xf32>
    %c0_5 = arith.constant 0 : index
    %c0_6 = arith.constant 0 : index
    %7 = vector.load %arg4[%c0_5, %c0_6] : memref<32x32xf32, #tpu.memory_space<vmem>>, vector<32x32xf32>
    %cst_7 = arith.constant dense<0.000000e+00> : vector<1024x32xf32>
    %8 = tpu.matmul %6, %7, %cst_7 {dimension_numbers = #tpu.dot_dimension_numbers<[1], [0], [0], [1], [0, 0, 1, 1], [], []>} : vector<1024x32xf32>, vector<32x32xf32>, vector<1024x32xf32> -> vector<1024x32xf32>
    %c0_8 = arith.constant 0 : index
    %c0_9 = arith.constant 0 : index
    %9 = vector.load %arg5[%c0_8, %c0_9] : memref<1x32xf32, #tpu.memory_space<vmem>>, vector<1x32xf32>
    %10 = vector.broadcast %9 : vector<1x32xf32> to vector<1024x32xf32>
    %11 = arith.addf %8, %10 : vector<1024x32xf32>
    %12 = math.tanh %11 : vector<1024x32xf32>
    %c0_10 = arith.constant 0 : index
    %c0_11 = arith.constant 0 : index
    %13 = vector.load %arg6[%c0_10, %c0_11] : memref<1x32xf32, #tpu.memory_space<vmem>>, vector<1x32xf32>
    %14 = vector.broadcast %13 : vector<1x32xf32> to vector<1024x32xf32>
    %15 = arith.mulf %12, %14 : vector<1024x32xf32>
    %16 = vector.shape_cast %15 : vector<1024x32xf32> to vector<8x128x32xf32>
    %cst_12 = arith.constant dense<0.000000e+00> : vector<8x128xf32>
    %17 = vector.multi_reduction <add>, %16, %cst_12 [2] : vector<8x128x32xf32> to vector<8x128xf32>
    %c0_13 = arith.constant 0 : index
    %18 = memref.load %arg7[%c0_13] : memref<1xf32, #tpu.memory_space<smem>>
    %19 = vector.broadcast %18 : f32 to vector<8x128xf32>
    %20 = arith.addf %17, %19 : vector<8x128xf32>
    %c0_14 = arith.constant 0 : index
    %c0_15 = arith.constant 0 : index
    %21 = vector.load %arg8[%c0_14, %c0_15] : memref<8x128xf32, #tpu.memory_space<vmem>>, vector<8x128xf32>
    tpu.vector_store %arg8[%c0_14, %c0_15], %20 {strides = array<i32>} : memref<8x128xf32, #tpu.memory_space<vmem>>, vector<8x128xf32>,
    return
  }
  func.func @transform_0(%arg0: i32) -> (i32, i32) {
    %c0_i32 = arith.constant 0 : i32
    %c0_i32_0 = arith.constant 0 : i32
    return %arg0, %c0_i32 : i32, i32
  }
  func.func @transform_1(%arg0: i32) -> (i32, i32) {
    %c0_i32 = arith.constant 0 : i32
    %c0_i32_0 = arith.constant 0 : i32
    %c0_i32_1 = arith.constant 0 : i32
    return %c0_i32, %c0_i32_0 : i32, i32
  }
  func.func @transform_2(%arg0: i32) -> (i32, i32) {
    %c0_i32 = arith.constant 0 : i32
    %c0_i32_0 = arith.constant 0 : i32
    %c0_i32_1 = arith.constant 0 : i32
    return %c0_i32, %c0_i32_0 : i32, i32
  }
  func.func @transform_3(%arg0: i32) -> (i32, i32) {
    %c0_i32 = arith.constant 0 : i32
    %c0_i32_0 = arith.constant 0 : i32
    %c0_i32_1 = arith.constant 0 : i32
    return %c0_i32, %c0_i32_0 : i32, i32
  }
  func.func @transform_4(%arg0: i32) -> (i32, i32) {
    %c0_i32 = arith.constant 0 : i32
    %c0_i32_0 = arith.constant 0 : i32
    %c0_i32_1 = arith.constant 0 : i32
    return %c0_i32, %c0_i32_0 : i32, i32
  }
  func.func @transform_5(%arg0: i32) -> (i32, i32) {
    %c0_i32 = arith.constant 0 : i32
    %c0_i32_0 = arith.constant 0 : i32
    %c0_i32_1 = arith.constant 0 : i32
    return %c0_i32, %c0_i32_0 : i32, i32
  }
  func.func @transform_6(%arg0: i32) -> i32 {
    %c0_i32 = arith.constant 0 : i32
    %c0_i32_0 = arith.constant 0 : i32
    return %c0_i32 : i32
  }
  func.func @transform_7(%arg0: i32) -> (i32, i32) {
    %c0_i32 = arith.constant 0 : i32
    %c0_i32_0 = arith.constant 0 : i32
    return %arg0, %c0_i32 : i32, i32
  }
}

</mosaic_0001>

<llo_original>
// kernel: tpu_custom_call.1
$region0: #{tpu_custom_call.1}
  #allocation0 [shape = 'u32[]', space=smem, size = 0x4, offset = 0x4, fixed_abs, tag = 'smem constant byte address 0x4 - core index']
  #allocation1 [shape = 'u32[144,128]{1,0:T(1,128)}', space=vmem, size = 0x12000, scoped, tag = 'internal scratch']
  #allocation2 [shape = 'f32[1]{0:T(128)S(6)}', space=smem, size = 0x200, scoped, tag = 'scoped memory for tpu_custom_call.1']
  %s0 = inlined_call_operand.vmem [shape: f32[1024,16], index: 0, kind: input, shape index: {}]
  %s1 = inlined_call_operand.vmem [shape: f32[16,32], index: 1, kind: input, shape index: {}]
  %s2 = inlined_call_operand.vmem [shape: f32[1,32], index: 2, kind: input, shape index: {}]
  %s3 = inlined_call_operand.vmem [shape: f32[32,32], index: 3, kind: input, shape index: {}]
  %s4 = inlined_call_operand.vmem [shape: f32[1,32], index: 4, kind: input, shape index: {}]
  %s5 = inlined_call_operand.vmem [shape: f32[1,32], index: 5, kind: input, shape index: {}]
  %s6 = inlined_call_operand.<no memory space> [shape: f32[1], index: 6, kind: input, shape index: {}]
  %s7 = inlined_call_operand.hbm [shape: f32[8,128], index: 7, kind: output, shape index: {}]
  %s8 = sld [smem:[#allocation0]]
  $region38: #{tpu_custom_call.1} parent=0
    _
  %s10 = ssub.s32 1, %s8
  %s11 = scalar_select 0, %s10, %s8
  %12 = sst [smem:[#allocation2]] %s6
  $region1: #{tpu_custom_call.1} parent=0
    #allocation3 [shape = 'u8[4096]{0}', space=vmem, size = 0x1000, scoped, tag = 'output window, operand 0, single buffered']
    #allocation4 [shape = 's32[1]{0}', space=sflag, size = 0x4, scoped, tag = 'scoped memory for tpu_custom_call.1']
    %13 = vsyncpa [#allocation4], 0
    // Predicated region
    $region2: #{tpu_custom_call.1} parent=1 // pred_check
      _
    $region3: #{tpu_custom_call.1} parent=1 // pred_check_branch
      %15 = sbr.rel (0) target = $region5
    $region4: #{tpu_custom_call.1} parent=1 // pred_region
      _
    $region5: #{tpu_custom_call.1} parent=1 // pred_fallthru
      _
    // Predicated region
    $region6: #{tpu_custom_call.1} parent=1 // pred_check
      _
    $region7: #{tpu_custom_call.1} parent=1 // pred_check_branch
      %17 = sbr.rel (0) target = $region9
    $region8: #{tpu_custom_call.1} parent=1 // pred_region
      _
    $region9: #{tpu_custom_call.1} parent=1 // pred_fallthru
      _
    // Predicated region
    $region10: #{tpu_custom_call.1} parent=1 // pred_check
      _
    $region11: #{tpu_custom_call.1} parent=1 // pred_check_branch
      %19 = sbr.rel (0) target = $region13
    $region12: #{tpu_custom_call.1} parent=1 // pred_region
      _
    $region13: #{tpu_custom_call.1} parent=1 // pred_fallthru
      _
    // Predicated region
    $region14: #{tpu_custom_call.1} parent=1 // pred_check
      _
    $region15: #{tpu_custom_call.1} parent=1 // pred_check_branch
      %21 = sbr.rel (0) target = $region17
    $region16: #{tpu_custom_call.1} parent=1 // pred_region
      _
    $region17: #{tpu_custom_call.1} parent=1 // pred_fallthru
      _
    // Predicated region
    $region18: #{tpu_custom_call.1} parent=1 // pred_check
      _
    $region19: #{tpu_custom_call.1} parent=1 // pred_check_branch
      %23 = sbr.rel (0) target = $region21
    $region20: #{tpu_custom_call.1} parent=1 // pred_region
      _
    $region21: #{tpu_custom_call.1} parent=1 // pred_fallthru
      _
    // Predicated region
    $region22: #{tpu_custom_call.1} parent=1 // pred_check
      _
    $region23: #{tpu_custom_call.1} parent=1 // pred_check_branch
      %25 = sbr.rel (0) target = $region25
    $region24: #{tpu_custom_call.1} parent=1 // pred_region
      _
    $region25: #{tpu_custom_call.1} parent=1 // pred_fallthru
      _
    // Predicated region
    $region26: #{tpu_custom_call.1} parent=1 // pred_check
      _
    $region27: #{tpu_custom_call.1} parent=1 // pred_check_branch
      %27 = sbr.rel (0) target = $region29
    $region28: #{tpu_custom_call.1} parent=1 // pred_region
      _
    $region29: #{tpu_custom_call.1} parent=1 // pred_fallthru
      _
    %v28 = vld [vmem:[%s0] sm:$0xff]
    %v29 = vld [vmem:[%s0 + $0x8] sm:$0xff]
    %v30 = vld [vmem:[%s0 + $0x10] sm:$0xff]
    %v31 = vld [vmem:[%s0 + $0x18] sm:$0xff]
    %v32 = vld [vmem:[%s0 + $0x20] sm:$0xff]
    %v33 = vld [vmem:[%s0 + $0x28] sm:$0xff]
    %v34 = vld [vmem:[%s0 + $0x30] sm:$0xff]
    %v35 = vld [vmem:[%s0 + $0x38] sm:$0xff]
    %v36 = vld [vmem:[%s0 + $0x40] sm:$0xff]
    %v37 = vld [vmem:[%s0 + $0x48] sm:$0xff]
    %v38 = vld [vmem:[%s0 + $0x50] sm:$0xff]
    %v39 = vld [vmem:[%s0 + $0x58] sm:$0xff]
    %v40 = vld [vmem:[%s0 + $0x60] sm:$0xff]
    %v41 = vld [vmem:[%s0 + $0x68] sm:$0xff]
    %v42 = vld [vmem:[%s0 + $0x70] sm:$0xff]
    %v43 = vld [vmem:[%s0 + $0x78] sm:$0xff]
    %v44 = vld [vmem:[%s0 + $0x80] sm:$0xff]
    %v45 = vld [vmem:[%s0 + $0x88] sm:$0xff]
    %v46 = vld [vmem:[%s0 + $0x90] sm:$0xff]
    %v47 = vld [vmem:[%s0 + $0x98] sm:$0xff]
    %v48 = vld [vmem:[%s0 + $0xa0] sm:$0xff]
    %v49 = vld [vmem:[%s0 + $0xa8] sm:$0xff]
    %v50 = vld [vmem:[%s0 + $0xb0] sm:$0xff]
    %v51 = vld [vmem:[%s0 + $0xb8] sm:$0xff]
    %v52 = vld [vmem:[%s0 + $0xc0] sm:$0xff]
    %v53 = vld [vmem:[%s0 + $0xc8] sm:$0xff]
    %v54 = vld [vmem:[%s0 + $0xd0] sm:$0xff]
    %v55 = vld [vmem:[%s0 + $0xd8] sm:$0xff]
    %v56 = vld [vmem:[%s0 + $0xe0] sm:$0xff]
    %v57 = vld [vmem:[%s0 + $0xe8] sm:$0xff]
    %v58 = vld [vmem:[%s0 + $0xf0] sm:$0xff]
    %v59 = vld [vmem:[%s0 + $0xf8] sm:$0xff]
    %v60 = vld [vmem:[%s0 + $0x100] sm:$0xff]
    %v61 = vld [vmem:[%s0 + $0x108] sm:$0xff]
    %v62 = vld [vmem:[%s0 + $0x110] sm:$0xff]
    %v63 = vld [vmem:[%s0 + $0x118] sm:$0xff]
    %v64 = vld [vmem:[%s0 + $0x120] sm:$0xff]
    %v65 = vld [vmem:[%s0 + $0x128] sm:$0xff]
    %v66 = vld [vmem:[%s0 + $0x130] sm:$0xff]
    %v67 = vld [vmem:[%s0 + $0x138] sm:$0xff]
    %v68 = vld [vmem:[%s0 + $0x140] sm:$0xff]
    %v69 = vld [vmem:[%s0 + $0x148] sm:$0xff]
    %v70 = vld [vmem:[%s0 + $0x150] sm:$0xff]
    %v71 = vld [vmem:[%s0 + $0x158] sm:$0xff]
    %v72 = vld [vmem:[%s0 + $0x160] sm:$0xff]
    %v73 = vld [vmem:[%s0 + $0x168] sm:$0xff]
    %v74 = vld [vmem:[%s0 + $0x170] sm:$0xff]
    %v75 = vld [vmem:[%s0 + $0x178] sm:$0xff]
    %v76 = vld [vmem:[%s0 + $0x180] sm:$0xff]
    %v77 = vld [vmem:[%s0 + $0x188] sm:$0xff]
    %v78 = vld [vmem:[%s0 + $0x190] sm:$0xff]
    %v79 = vld [vmem:[%s0 + $0x198] sm:$0xff]
    %v80 = vld [vmem:[%s0 + $0x1a0] sm:$0xff]
    %v81 = vld [vmem:[%s0 + $0x1a8] sm:$0xff]
    %v82 = vld [vmem:[%s0 + $0x1b0] sm:$0xff]
    %v83 = vld [vmem:[%s0 + $0x1b8] sm:$0xff]
    %v84 = vld [vmem:[%s0 + $0x1c0] sm:$0xff]
    %v85 = vld [vmem:[%s0 + $0x1c8] sm:$0xff]
    %v86 = vld [vmem:[%s0 + $0x1d0] sm:$0xff]
    %v87 = vld [vmem:[%s0 + $0x1d8] sm:$0xff]
    %v88 = vld [vmem:[%s0 + $0x1e0] sm:$0xff]
    %v89 = vld [vmem:[%s0 + $0x1e8] sm:$0xff]
    %v90 = vld [vmem:[%s0 + $0x1f0] sm:$0xff]
    %v91 = vld [vmem:[%s0 + $0x1f8] sm:$0xff]
    %v92 = vld [vmem:[%s0 + $0x200] sm:$0xff]
    %v93 = vld [vmem:[%s0 + $0x208] sm:$0xff]
    %v94 = vld [vmem:[%s0 + $0x210] sm:$0xff]
    %v95 = vld [vmem:[%s0 + $0x218] sm:$0xff]
    %v96 = vld [vmem:[%s0 + $0x220] sm:$0xff]
    %v97 = vld [vmem:[%s0 + $0x228] sm:$0xff]
    %v98 = vld [vmem:[%s0 + $0x230] sm:$0xff]
    %v99 = vld [vmem:[%s0 + $0x238] sm:$0xff]
    %v100 = vld [vmem:[%s0 + $0x240] sm:$0xff]
    %v101 = vld [vmem:[%s0 + $0x248] sm:$0xff]
    %v102 = vld [vmem:[%s0 + $0x250] sm:$0xff]
    %v103 = vld [vmem:[%s0 + $0x258] sm:$0xff]
    %v104 = vld [vmem:[%s0 + $0x260] sm:$0xff]
    %v105 = vld [vmem:[%s0 + $0x268] sm:$0xff]
    %v106 = vld [vmem:[%s0 + $0x270] sm:$0xff]
    %v107 = vld [vmem:[%s0 + $0x278] sm:$0xff]
    %v108 = vld [vmem:[%s0 + $0x280] sm:$0xff]
    %v109 = vld [vmem:[%s0 + $0x288] sm:$0xff]
    %v110 = vld [vmem:[%s0 + $0x290] sm:$0xff]
    %v111 = vld [vmem:[%s0 + $0x298] sm:$0xff]
    %v112 = vld [vmem:[%s0 + $0x2a0] sm:$0xff]
    %v113 = vld [vmem:[%s0 + $0x2a8] sm:$0xff]
    %v114 = vld [vmem:[%s0 + $0x2b0] sm:$0xff]
    %v115 = vld [vmem:[%s0 + $0x2b8] sm:$0xff]
    %v116 = vld [vmem:[%s0 + $0x2c0] sm:$0xff]
    %v117 = vld [vmem:[%s0 + $0x2c8] sm:$0xff]
    %v118 = vld [vmem:[%s0 + $0x2d0] sm:$0xff]
    %v119 = vld [vmem:[%s0 + $0x2d8] sm:$0xff]
    %v120 = vld [vmem:[%s0 + $0x2e0] sm:$0xff]
    %v121 = vld [vmem:[%s0 + $0x2e8] sm:$0xff]
    %v122 = vld [vmem:[%s0 + $0x2f0] sm:$0xff]
    %v123 = vld [vmem:[%s0 + $0x2f8] sm:$0xff]
    %v124 = vld [vmem:[%s0 + $0x300] sm:$0xff]
    %v125 = vld [vmem:[%s0 + $0x308] sm:$0xff]
    %v126 = vld [vmem:[%s0 + $0x310] sm:$0xff]
    %v127 = vld [vmem:[%s0 + $0x318] sm:$0xff]
    %v128 = vld [vmem:[%s0 + $0x320] sm:$0xff]
    %v129 = vld [vmem:[%s0 + $0x328] sm:$0xff]
    %v130 = vld [vmem:[%s0 + $0x330] sm:$0xff]
    %v131 = vld [vmem:[%s0 + $0x338] sm:$0xff]
    %v132 = vld [vmem:[%s0 + $0x340] sm:$0xff]
    %v133 = vld [vmem:[%s0 + $0x348] sm:$0xff]
    %v134 = vld [vmem:[%s0 + $0x350] sm:$0xff]
    %v135 = vld [vmem:[%s0 + $0x358] sm:$0xff]
    %v136 = vld [vmem:[%s0 + $0x360] sm:$0xff]
    %v137 = vld [vmem:[%s0 + $0x368] sm:$0xff]
    %v138 = vld [vmem:[%s0 + $0x370] sm:$0xff]
    %v139 = vld [vmem:[%s0 + $0x378] sm:$0xff]
    %v140 = vld [vmem:[%s0 + $0x380] sm:$0xff]
    %v141 = vld [vmem:[%s0 + $0x388] sm:$0xff]
    %v142 = vld [vmem:[%s0 + $0x390] sm:$0xff]
    %v143 = vld [vmem:[%s0 + $0x398] sm:$0xff]
    %v144 = vld [vmem:[%s0 + $0x3a0] sm:$0xff]
    %v145 = vld [vmem:[%s0 + $0x3a8] sm:$0xff]
    %v146 = vld [vmem:[%s0 + $0x3b0] sm:$0xff]
    %v147 = vld [vmem:[%s0 + $0x3b8] sm:$0xff]
    %v148 = vld [vmem:[%s0 + $0x3c0] sm:$0xff]
    %v149 = vld [vmem:[%s0 + $0x3c8] sm:$0xff]
    %v150 = vld [vmem:[%s0 + $0x3d0] sm:$0xff]
    %v151 = vld [vmem:[%s0 + $0x3d8] sm:$0xff]
    %v152 = vld [vmem:[%s0 + $0x3e0] sm:$0xff]
    %v153 = vld [vmem:[%s0 + $0x3e8] sm:$0xff]
    %v154 = vld [vmem:[%s0 + $0x3f0] sm:$0xff]
    %v155 = vld [vmem:[%s0 + $0x3f8] sm:$0xff]
    %v156 = vld [vmem:[%s1] sm:$0xff]
    %v157 = vld [vmem:[%s1 + $0x8] sm:$0xff]
    %v158 = vld [vmem:[%s2] sm:$0x1]
    %v160 = vlaneseq
    %v161 = vshrl.u32 %v160, 7
    %v162 = vsub.s32 0, %v161
    %v163 = vrot.slane %v158, %v162
    %vm165 = vcmask 130048
    %v167 = vsel %vm165, %v28, 0
    %v170 = vsel %vm165, %v29, 0
    %v173 = vsel %vm165, %v30, 0
    %v176 = vsel %vm165, %v31, 0
    %v179 = vsel %vm165, %v32, 0
    %v182 = vsel %vm165, %v33, 0
    %v185 = vsel %vm165, %v34, 0
    %v188 = vsel %vm165, %v35, 0
    %v191 = vsel %vm165, %v36, 0
    %v194 = vsel %vm165, %v37, 0
    %v197 = vsel %vm165, %v38, 0
    %v200 = vsel %vm165, %v39, 0
    %v203 = vsel %vm165, %v40, 0
    %v206 = vsel %vm165, %v41, 0
    %v209 = vsel %vm165, %v42, 0
    %v212 = vsel %vm165, %v43, 0
    %v215 = vsel %vm165, %v44, 0
    %v218 = vsel %vm165, %v45, 0
    %v221 = vsel %vm165, %v46, 0
    %v224 = vsel %vm165, %v47, 0
    %v227 = vsel %vm165, %v48, 0
    %v230 = vsel %vm165, %v49, 0
    %v233 = vsel %vm165, %v50, 0
    %v236 = vsel %vm165, %v51, 0
    %v239 = vsel %vm165, %v52, 0
    %v242 = vsel %vm165, %v53, 0
    %v245 = vsel %vm165, %v54, 0
    %v248 = vsel %vm165, %v55, 0
    %v251 = vsel %vm165, %v56, 0
    %v254 = vsel %vm165, %v57, 0
    %v257 = vsel %vm165, %v58, 0
    %v260 = vsel %vm165, %v59, 0
    %v263 = vsel %vm165, %v60, 0
    %v266 = vsel %vm165, %v61, 0
    %v269 = vsel %vm165, %v62, 0
    %v272 = vsel %vm165, %v63, 0
    %v275 = vsel %vm165, %v64, 0
    %v278 = vsel %vm165, %v65, 0
    %v281 = vsel %vm165, %v66, 0
    %v284 = vsel %vm165, %v67, 0
    %v287 = vsel %vm165, %v68, 0
    %v290 = vsel %vm165, %v69, 0
    %v293 = vsel %vm165, %v70, 0
    %v296 = vsel %vm165, %v71, 0
    %v299 = vsel %vm165, %v72, 0
    %v302 = vsel %vm165, %v73, 0
    %v305 = vsel %vm165, %v74, 0
    %v308 = vsel %vm165, %v75, 0
    %v311 = vsel %vm165, %v76, 0
    %v314 = vsel %vm165, %v77, 0
    %v317 = vsel %vm165, %v78, 0
    %v320 = vsel %vm165, %v79, 0
    %v323 = vsel %vm165, %v80, 0
    %v326 = vsel %vm165, %v81, 0
    %v329 = vsel %vm165, %v82, 0
    %v332 = vsel %vm165, %v83, 0
    %v335 = vsel %vm165, %v84, 0
    %v338 = vsel %vm165, %v85, 0
    %v341 = vsel %vm165, %v86, 0
    %v344 = vsel %vm165, %v87, 0
    %v347 = vsel %vm165, %v88, 0
    %v350 = vsel %vm165, %v89, 0
    %v353 = vsel %vm165, %v90, 0
    %v356 = vsel %vm165, %v91, 0
    %v359 = vsel %vm165, %v92, 0
    %v362 = vsel %vm165, %v93, 0
    %v365 = vsel %vm165, %v94, 0
    %v368 = vsel %vm165, %v95, 0
    %v371 = vsel %vm165, %v96, 0
    %v374 = vsel %vm165, %v97, 0
    %v377 = vsel %vm165, %v98, 0
    %v380 = vsel %vm165, %v99, 0
    %v383 = vsel %vm165, %v100, 0
    %v386 = vsel %vm165, %v101, 0
    %v389 = vsel %vm165, %v102, 0
    %v392 = vsel %vm165, %v103, 0
    %v395 = vsel %vm165, %v104, 0
    %v398 = vsel %vm165, %v105, 0
    %v401 = vsel %vm165, %v106, 0
    %v404 = vsel %vm165, %v107, 0
    %v407 = vsel %vm165, %v108, 0
    %v410 = vsel %vm165, %v109, 0
    %v413 = vsel %vm165, %v110, 0
    %v416 = vsel %vm165, %v111, 0
    %v419 = vsel %vm165, %v112, 0
    %v422 = vsel %vm165, %v113, 0
    %v425 = vsel %vm165, %v114, 0
    %v428 = vsel %vm165, %v115, 0
    %v431 = vsel %vm165, %v116, 0
    %v434 = vsel %vm165, %v117, 0
    %v437 = vsel %vm165, %v118, 0
    %v440 = vsel %vm165, %v119, 0
    %v443 = vsel %vm165, %v120, 0
    %v446 = vsel %vm165, %v121, 0
    %v449 = vsel %vm165, %v122, 0
    %v452 = vsel %vm165, %v123, 0
    %v455 = vsel %vm165, %v124, 0
    %v458 = vsel %vm165, %v125, 0
    %v461 = vsel %vm165, %v126, 0
    %v464 = vsel %vm165, %v127, 0
    %v467 = vsel %vm165, %v128, 0
    %v470 = vsel %vm165, %v129, 0
    %v473 = vsel %vm165, %v130, 0
    %v476 = vsel %vm165, %v131, 0
    %v479 = vsel %vm165, %v132, 0
    %v482 = vsel %vm165, %v133, 0
    %v485 = vsel %vm165, %v134, 0
    %v488 = vsel %vm165, %v135, 0
    %v491 = vsel %vm165, %v136, 0
    %v494 = vsel %vm165, %v137, 0
    %v497 = vsel %vm165, %v138, 0
    %v500 = vsel %vm165, %v139, 0
    %v503 = vsel %vm165, %v140, 0
    %v506 = vsel %vm165, %v141, 0
    %v509 = vsel %vm165, %v142, 0
    %v512 = vsel %vm165, %v143, 0
    %v515 = vsel %vm165, %v144, 0
    %v518 = vsel %vm165, %v145, 0
    %v521 = vsel %vm165, %v146, 0
    %v524 = vsel %vm165, %v147, 0
    %v527 = vsel %vm165, %v148, 0
    %v530 = vsel %vm165, %v149, 0
    %v533 = vsel %vm165, %v150, 0
    %v536 = vsel %vm165, %v151, 0
    %v539 = vsel %vm165, %v152, 0
    %v542 = vsel %vm165, %v153, 0
    %v545 = vsel %vm165, %v154, 0
    %v548 = vsel %vm165, %v155, 0
    %550 = vmatprep.subr.mxu0 0.0
    %551 = vmatpush1.msra.mxu0 %v156
    %552 = vmatprep.subr.mxu0 0.0
    %553 = vmatpush1.msra.mxu0 %v157
    %554 = vmatprep.subr.mxu0 0.0
    %555 = vmatpush1.msra.mxu0 0.0
    %556 = vmatprep.subr.mxu0 0.0
    %557 = vmatpush1.msra.mxu0 0.0
    %558 = vmatprep.subr.mxu0 0.0
    %559 = vmatpush1.msra.mxu0 0.0
    %560 = vmatprep.subr.mxu0 0.0
    %561 = vmatpush1.msra.mxu0 0.0
    %562 = vmatprep.subr.mxu0 0.0
    %563 = vmatpush1.msra.mxu0 0.0
    %564 = vmatprep.subr.mxu0 0.0
    %565 = vmatpush1.msra.mxu0 0.0
    %566 = vmatprep.subr.mxu0 0.0
    %567 = vmatpush1.msra.mxu0 0.0
    %568 = vmatprep.subr.mxu0 0.0
    %569 = vmatpush1.msra.mxu0 0.0
    %570 = vmatprep.subr.mxu0 0.0
    %571 = vmatpush1.msra.mxu0 0.0
    %572 = vmatprep.subr.mxu0 0.0
    %573 = vmatpush1.msra.mxu0 0.0
    %574 = vmatprep.subr.mxu0 0.0
    %575 = vmatpush1.msra.mxu0 0.0
    %576 = vmatprep.subr.mxu0 0.0
    %577 = vmatpush1.msra.mxu0 0.0
    %578 = vmatprep.subr.mxu0 0.0
    %579 = vmatpush1.msra.mxu0 0.0
    %580 = vmatprep.subr.mxu0 0.0
    %581 = vmatpush1.msra.mxu0 0.0
    %582 = vmatprep.subr.mxu0 0.0
    %583 = vmatpush1.msra.mxu0 0.0
    %584 = vmatprep.subr.mxu0 0.0
    %585 = vmatpush1.msra.mxu0 0.0
    %586 = vmatprep.subr.mxu0 0.0
    %587 = vmatpush1.msra.mxu0 0.0
    %588 = vmatprep.subr.mxu0 0.0
    %589 = vmatpush1.msra.mxu0 0.0
    %590 = vmatprep.subr.mxu0 0.0
    %591 = vmatpush1.msra.mxu0 0.0
    %592 = vmatprep.subr.mxu0 0.0
    %593 = vmatpush1.msra.mxu0 0.0
    %594 = vmatprep.subr.mxu0 0.0
    %595 = vmatpush1.msra.mxu0 0.0
    %596 = vmatprep.subr.mxu0 0.0
    %597 = vmatpush1.msra.mxu0 0.0
    %598 = vmatprep.subr.mxu0 0.0
    %599 = vmatpush1.msra.mxu0 0.0
    %600 = vmatprep.subr.mxu0 0.0
    %601 = vmatpush1.msra.mxu0 0.0
    %602 = vmatprep.subr.mxu0 0.0
    %603 = vmatpush1.msra.mxu0 0.0
    %604 = vmatprep.subr.mxu0 0.0
    %605 = vmatpush1.msra.mxu0 0.0
    %606 = vmatprep.subr.mxu0 0.0
    %607 = vmatpush1.msra.mxu0 0.0
    %608 = vmatprep.subr.mxu0 0.0
    %609 = vmatpush1.msra.mxu0 0.0
    %610 = vmatprep.subr.mxu0 0.0
    %611 = vmatpush1.msra.mxu0 0.0
    %612 = vmatprep.subr.mxu0 0.0
    %613 = vmatpush1.msra.mxu0 0.0
    %614 = vmatprep.mubr.f32.mxu0 0.0
    %615 = vmatmul.mubr.f32.gmra.mrb[0].mxu0 %v167
    %v616 = vpop.f32.mrb[0].mxu0
    %v617 = vadd.f32 %v163, %v616
    %v618 = vpop.f32.mrb[0].mxu0
    %619 = vmatprep.mubr.f32.mxu0 0.0
    %620 = vmatmul.mubr.f32.gmra.mrb[0].mxu0 %v170
    %v621 = vpop.f32.mrb[0].mxu0
    %v622 = vadd.f32 %v163, %v621
    %v623 = vpop.f32.mrb[0].mxu0
    %624 = vmatprep.mubr.f32.mxu0 0.0
    %625 = vmatmul.mubr.f32.gmra.mrb[0].mxu0 %v173
    %v626 = vpop.f32.mrb[0].mxu0
    %v627 = vadd.f32 %v163, %v626
    %v628 = vpop.f32.mrb[0].mxu0
    %629 = vmatprep.mubr.f32.mxu0 0.0
    %630 = vmatmul.mubr.f32.gmra.mrb[0].mxu0 %v176
    %v631 = vpop.f32.mrb[0].mxu0
    %v632 = vadd.f32 %v163, %v631
    %v633 = vpop.f32.mrb[0].mxu0
    %634 = vmatprep.mubr.f32.mxu0 0.0
    %635 = vmatmul.mubr.f32.gmra.mrb[0].mxu0 %v179
    %v636 = vpop.f32.mrb[0].mxu0
    %v637 = vadd.f32 %v163, %v636
    %v638 = vpop.f32.mrb[0].mxu0
    %639 = vmatprep.mubr.f32.mxu0 0.0
    %640 = vmatmul.mubr.f32.gmra.mrb[0].mxu0 %v182
    %v641 = vpop.f32.mrb[0].mxu0
    %v642 = vadd.f32 %v163, %v641
    %v643 = vpop.f32.mrb[0].mxu0
    %644 = vmatprep.mubr.f32.mxu0 0.0
    %645 = vmatmul.mubr.f32.gmra.mrb[0].mxu0 %v185
    %v646 = vpop.f32.mrb[0].mxu0
    %v647 = vadd.f32 %v163, %v646
    %v648 = vpop.f32.mrb[0].mxu0
    %649 = vmatprep.mubr.f32.mxu0 0.0
    %650 = vmatmul.mubr.f32.gmra.mrb[0].mxu0 %v188
    %v651 = vpop.f32.mrb[0].mxu0
    %v652 = vadd.f32 %v163, %v651
    %v653 = vpop.f32.mrb[0].mxu0
    %654 = vmatprep.mubr.f32.mxu0 0.0
    %655 = vmatmul.mubr.f32.gmra.mrb[0].mxu0 %v191
    %v656 = vpop.f32.mrb[0].mxu0
    %v657 = vadd.f32 %v163, %v656
    %v658 = vpop.f32.mrb[0].mxu0
    %659 = vmatprep.mubr.f32.mxu0 0.0
    %660 = vmatmul.mubr.f32.gmra.mrb[0].mxu0 %v194
    %v661 = vpop.f32.mrb[0].mxu0
    %v662 = vadd.f32 %v163, %v661
    %v663 = vpop.f32.mrb[0].mxu0
    %664 = vmatprep.mubr.f32.mxu0 0.0
    %665 = vmatmul.mubr.f32.gmra.mrb[0].mxu0 %v197
    %v666 = vpop.f32.mrb[0].mxu0
    %v667 = vadd.f32 %v163, %v666
    %v668 = vpop.f32.mrb[0].mxu0
    %669 = vmatprep.mubr.f32.mxu0 0.0
    %670 = vmatmul.mubr.f32.gmra.mrb[0].mxu0 %v200
    %v671 = vpop.f32.mrb[0].mxu0
    %v672 = vadd.f32 %v163, %v671
    %v673 = vpop.f32.mrb[0].mxu0
    %674 = vmatprep.mubr.f32.mxu0 0.0
    %675 = vmatmul.mubr.f32.gmra.mrb[0].mxu0 %v203
    %v676 = vpop.f32.mrb[0].mxu0
    %v677 = vadd.f32 %v163, %v676
    %v678 = vpop.f32.mrb[0].mxu0
    %679 = vmatprep.mubr.f32.mxu0 0.0
    %680 = vmatmul.mubr.f32.gmra.mrb[0].mxu0 %v206
    %v681 = vpop.f32.mrb[0].mxu0
    %v682 = vadd.f32 %v163, %v681
    %v683 = vpop.f32.mrb[0].mxu0
    %684 = vmatprep.mubr.f32.mxu0 0.0
    %685 = vmatmul.mubr.f32.gmra.mrb[0].mxu0 %v209
    %v686 = vpop.f32.mrb[0].mxu0
    %v687 = vadd.f32 %v163, %v686
    %v688 = vpop.f32.mrb[0].mxu0
    %689 = vmatprep.mubr.f32.mxu0 0.0
    %690 = vmatmul.mubr.f32.gmra.mrb[0].mxu0 %v212
    %v691 = vpop.f32.mrb[0].mxu0
    %v692 = vadd.f32 %v163, %v691
    %v693 = vpop.f32.mrb[0].mxu0
    %694 = vmatprep.mubr.f32.mxu0 0.0
    %695 = vmatmul.mubr.f32.gmra.mrb[0].mxu0 %v215
    %v696 = vpop.f32.mrb[0].mxu0
    %v697 = vadd.f32 %v163, %v696
    %v698 = vpop.f32.mrb[0].mxu0
    %699 = vmatprep.mubr.f32.mxu0 0.0
    %700 = vmatmul.mubr.f32.gmra.mrb[0].mxu0 %v218
    %v701 = vpop.f32.mrb[0].mxu0
    %v702 = vadd.f32 %v163, %v701
    %v703 = vpop.f32.mrb[0].mxu0
    %704 = vmatprep.mubr.f32.mxu0 0.0
    %705 = vmatmul.mubr.f32.gmra.mrb[0].mxu0 %v221
    %v706 = vpop.f32.mrb[0].mxu0
    %v707 = vadd.f32 %v163, %v706
    %v708 = vpop.f32.mrb[0].mxu0
    %709 = vmatprep.mubr.f32.mxu0 0.0
    %710 = vmatmul.mubr.f32.gmra.mrb[0].mxu0 %v224
    %v711 = vpop.f32.mrb[0].mxu0
    %v712 = vadd.f32 %v163, %v711
    %v713 = vpop.f32.mrb[0].mxu0
    %714 = vmatprep.mubr.f32.mxu0 0.0
    %715 = vmatmul.mubr.f32.gmra.mrb[0].mxu0 %v227
    %v716 = vpop.f32.mrb[0].mxu0
    %v717 = vadd.f32 %v163, %v716
    %v718 = vpop.f32.mrb[0].mxu0
    %719 = vmatprep.mubr.f32.mxu0 0.0
    %720 = vmatmul.mubr.f32.gmra.mrb[0].mxu0 %v230
    %v721 = vpop.f32.mrb[0].mxu0
    %v722 = vadd.f32 %v163, %v721
    %v723 = vpop.f32.mrb[0].mxu0
    %724 = vmatprep.mubr.f32.mxu0 0.0
    %725 = vmatmul.mubr.f32.gmra.mrb[0].mxu0 %v233
    %v726 = vpop.f32.mrb[0].mxu0
    %v727 = vadd.f32 %v163, %v726
    %v728 = vpop.f32.mrb[0].mxu0
    %729 = vmatprep.mubr.f32.mxu0 0.0
    %730 = vmatmul.mubr.f32.gmra.mrb[0].mxu0 %v236
    %v731 = vpop.f32.mrb[0].mxu0
    %v732 = vadd.f32 %v163, %v731
    %v733 = vpop.f32.mrb[0].mxu0
    %734 = vmatprep.mubr.f32.mxu0 0.0
    %735 = vmatmul.mubr.f32.gmra.mrb[0].mxu0 %v239
    %v736 = vpop.f32.mrb[0].mxu0
    %v737 = vadd.f32 %v163, %v736
    %v738 = vpop.f32.mrb[0].mxu0
    %739 = vmatprep.mubr.f32.mxu0 0.0
    %740 = vmatmul.mubr.f32.gmra.mrb[0].mxu0 %v242
    %v741 = vpop.f32.mrb[0].mxu0
    %v742 = vadd.f32 %v163, %v741
    %v743 = vpop.f32.mrb[0].mxu0
    %744 = vmatprep.mubr.f32.mxu0 0.0
    %745 = vmatmul.mubr.f32.gmra.mrb[0].mxu0 %v245
    %v746 = vpop.f32.mrb[0].mxu0
    %v747 = vadd.f32 %v163, %v746
    %v748 = vpop.f32.mrb[0].mxu0
    %749 = vmatprep.mubr.f32.mxu0 0.0
    %750 = vmatmul.mubr.f32.gmra.mrb[0].mxu0 %v248
    %v751 = vpop.f32.mrb[0].mxu0
    %v752 = vadd.f32 %v163, %v751
    %v753 = vpop.f32.mrb[0].mxu0
    %754 = vmatprep.mubr.f32.mxu0 0.0
    %755 = vmatmul.mubr.f32.gmra.mrb[0].mxu0 %v251
    %v756 = vpop.f32.mrb[0].mxu0
    %v757 = vadd.f32 %v163, %v756
    %v758 = vpop.f32.mrb[0].mxu0
    %759 = vmatprep.mubr.f32.mxu0 0.0
    %760 = vmatmul.mubr.f32.gmra.mrb[0].mxu0 %v254
    %v761 = vpop.f32.mrb[0].mxu0
    %v762 = vadd.f32 %v163, %v761
    %v763 = vpop.f32.mrb[0].mxu0
    %764 = vmatprep.mubr.f32.mxu0 0.0
    %765 = vmatmul.mubr.f32.gmra.mrb[0].mxu0 %v257
    %v766 = vpop.f32.mrb[0].mxu0
    %v767 = vadd.f32 %v163, %v766
    %v768 = vpop.f32.mrb[0].mxu0
    %769 = vmatprep.mubr.f32.mxu0 0.0
    %770 = vmatmul.mubr.f32.gmra.mrb[0].mxu0 %v260
    %v771 = vpop.f32.mrb[0].mxu0
    %v772 = vadd.f32 %v163, %v771
    %v773 = vpop.f32.mrb[0].mxu0
    %774 = vmatprep.mubr.f32.mxu0 0.0
    %775 = vmatmul.mubr.f32.gmra.mrb[0].mxu0 %v263
    %v776 = vpop.f32.mrb[0].mxu0
    %v777 = vadd.f32 %v163, %v776
    %v778 = vpop.f32.mrb[0].mxu0
    %779 = vmatprep.mubr.f32.mxu0 0.0
    %780 = vmatmul.mubr.f32.gmra.mrb[0].mxu0 %v266
    %v781 = vpop.f32.mrb[0].mxu0
    %v782 = vadd.f32 %v163, %v781
    %v783 = vpop.f32.mrb[0].mxu0
    %784 = vmatprep.mubr.f32.mxu0 0.0
    %785 = vmatmul.mubr.f32.gmra.mrb[0].mxu0 %v269
    %v786 = vpop.f32.mrb[0].mxu0
    %v787 = vadd.f32 %v163, %v786
    %v788 = vpop.f32.mrb[0].mxu0
    %789 = vmatprep.mubr.f32.mxu0 0.0
    %790 = vmatmul.mubr.f32.gmra.mrb[0].mxu0 %v272
    %v791 = vpop.f32.mrb[0].mxu0
    %v792 = vadd.f32 %v163, %v791
    %v793 = vpop.f32.mrb[0].mxu0
    %794 = vmatprep.mubr.f32.mxu0 0.0
    %795 = vmatmul.mubr.f32.gmra.mrb[0].mxu0 %v275
    %v796 = vpop.f32.mrb[0].mxu0
    %v797 = vadd.f32 %v163, %v796
    %v798 = vpop.f32.mrb[0].mxu0
    %799 = vmatprep.mubr.f32.mxu0 0.0
    %800 = vmatmul.mubr.f32.gmra.mrb[0].mxu0 %v278
    %v801 = vpop.f32.mrb[0].mxu0
    %v802 = vadd.f32 %v163, %v801
    %v803 = vpop.f32.mrb[0].mxu0
    %804 = vmatprep.mubr.f32.mxu0 0.0
    %805 = vmatmul.mubr.f32.gmra.mrb[0].mxu0 %v281
    %v806 = vpop.f32.mrb[0].mxu0
    %v807 = vadd.f32 %v163, %v806
    %v808 = vpop.f32.mrb[0].mxu0
    %809 = vmatprep.mubr.f32.mxu0 0.0
    %810 = vmatmul.mubr.f32.gmra.mrb[0].mxu0 %v284
    %v811 = vpop.f32.mrb[0].mxu0
    %v812 = vadd.f32 %v163, %v811
    %v813 = vpop.f32.mrb[0].mxu0
    %814 = vmatprep.mubr.f32.mxu0 0.0
    %815 = vmatmul.mubr.f32.gmra.mrb[0].mxu0 %v287
    %v816 = vpop.f32.mrb[0].mxu0
    %v817 = vadd.f32 %v163, %v816
    %v818 = vpop.f32.mrb[0].mxu0
    %819 = vmatprep.mubr.f32.mxu0 0.0
    %820 = vmatmul.mubr.f32.gmra.mrb[0].mxu0 %v290
    %v821 = vpop.f32.mrb[0].mxu0
    %v822 = vadd.f32 %v163, %v821
    %v823 = vpop.f32.mrb[0].mxu0
    %824 = vmatprep.mubr.f32.mxu0 0.0
    %825 = vmatmul.mubr.f32.gmra.mrb[0].mxu0 %v293
    %v826 = vpop.f32.mrb[0].mxu0
    %v827 = vadd.f32 %v163, %v826
    %v828 = vpop.f32.mrb[0].mxu0
    %829 = vmatprep.mubr.f32.mxu0 0.0
    %830 = vmatmul.mubr.f32.gmra.mrb[0].mxu0 %v296
    %v831 = vpop.f32.mrb[0].mxu0
    %v832 = vadd.f32 %v163, %v831
    %v833 = vpop.f32.mrb[0].mxu0
    %834 = vmatprep.mubr.f32.mxu0 0.0
    %835 = vmatmul.mubr.f32.gmra.mrb[0].mxu0 %v299
    %v836 = vpop.f32.mrb[0].mxu0
    %v837 = vadd.f32 %v163, %v836
    %v838 = vpop.f32.mrb[0].mxu0
    %839 = vmatprep.mubr.f32.mxu0 0.0
    %840 = vmatmul.mubr.f32.gmra.mrb[0].mxu0 %v302
    %v841 = vpop.f32.mrb[0].mxu0
    %v842 = vadd.f32 %v163, %v841
    %v843 = vpop.f32.mrb[0].mxu0
    %844 = vmatprep.mubr.f32.mxu0 0.0
    %845 = vmatmul.mubr.f32.gmra.mrb[0].mxu0 %v305
    %v846 = vpop.f32.mrb[0].mxu0
    %v847 = vadd.f32 %v163, %v846
    %v848 = vpop.f32.mrb[0].mxu0
    %849 = vmatprep.mubr.f32.mxu0 0.0
    %850 = vmatmul.mubr.f32.gmra.mrb[0].mxu0 %v308
    %v851 = vpop.f32.mrb[0].mxu0
    %v852 = vadd.f32 %v163, %v851
    %v853 = vpop.f32.mrb[0].mxu0
    %854 = vmatprep.mubr.f32.mxu0 0.0
    %855 = vmatmul.mubr.f32.gmra.mrb[0].mxu0 %v311
    %v856 = vpop.f32.mrb[0].mxu0
    %v857 = vadd.f32 %v163, %v856
    %v858 = vpop.f32.mrb[0].mxu0
    %859 = vmatprep.mubr.f32.mxu0 0.0
    %860 = vmatmul.mubr.f32.gmra.mrb[0].mxu0 %v314
    %v861 = vpop.f32.mrb[0].mxu0
    %v862 = vadd.f32 %v163, %v861
    %v863 = vpop.f32.mrb[0].mxu0
    %864 = vmatprep.mubr.f32.mxu0 0.0
    %865 = vmatmul.mubr.f32.gmra.mrb[0].mxu0 %v317
    %v866 = vpop.f32.mrb[0].mxu0
    %v867 = vadd.f32 %v163, %v866
    %v868 = vpop.f32.mrb[0].mxu0
    %869 = vmatprep.mubr.f32.mxu0 0.0
    %870 = vmatmul.mubr.f32.gmra.mrb[0].mxu0 %v320
    %v871 = vpop.f32.mrb[0].mxu0
    %v872 = vadd.f32 %v163, %v871
    %v873 = vpop.f32.mrb[0].mxu0
    %874 = vmatprep.mubr.f32.mxu0 0.0
    %875 = vmatmul.mubr.f32.gmra.mrb[0].mxu0 %v323
    %v876 = vpop.f32.mrb[0].mxu0
    %v877 = vadd.f32 %v163, %v876
    %v878 = vpop.f32.mrb[0].mxu0
    %879 = vmatprep.mubr.f32.mxu0 0.0
    %880 = vmatmul.mubr.f32.gmra.mrb[0].mxu0 %v326
    %v881 = vpop.f32.mrb[0].mxu0
    %v882 = vadd.f32 %v163, %v881
    %v883 = vpop.f32.mrb[0].mxu0
    %884 = vmatprep.mubr.f32.mxu0 0.0
    %885 = vmatmul.mubr.f32.gmra.mrb[0].mxu0 %v329
    %v886 = vpop.f32.mrb[0].mxu0
    %v887 = vadd.f32 %v163, %v886
    %v888 = vpop.f32.mrb[0].mxu0
    %889 = vmatprep.mubr.f32.mxu0 0.0
    %890 = vmatmul.mubr.f32.gmra.mrb[0].mxu0 %v332
    %v891 = vpop.f32.mrb[0].mxu0
    %v892 = vadd.f32 %v163, %v891
    %v893 = vpop.f32.mrb[0].mxu0
    %894 = vmatprep.mubr.f32.mxu0 0.0
    %895 = vmatmul.mubr.f32.gmra.mrb[0].mxu0 %v335
    %v896 = vpop.f32.mrb[0].mxu0
    %v897 = vadd.f32 %v163, %v896
    %v898 = vpop.f32.mrb[0].mxu0
    %899 = vmatprep.mubr.f32.mxu0 0.0
    %900 = vmatmul.mubr.f32.gmra.mrb[0].mxu0 %v338
    %v901 = vpop.f32.mrb[0].mxu0
    %v902 = vadd.f32 %v163, %v901
    %v903 = vpop.f32.mrb[0].mxu0
    %904 = vmatprep.mubr.f32.mxu0 0.0
    %905 = vmatmul.mubr.f32.gmra.mrb[0].mxu0 %v341
    %v906 = vpop.f32.mrb[0].mxu0
    %v907 = vadd.f32 %v163, %v906
    %v908 = vpop.f32.mrb[0].mxu0
    %909 = vmatprep.mubr.f32.mxu0 0.0
    %910 = vmatmul.mubr.f32.gmra.mrb[0].mxu0 %v344
    %v911 = vpop.f32.mrb[0].mxu0
    %v912 = vadd.f32 %v163, %v911
    %v913 = vpop.f32.mrb[0].mxu0
    %914 = vmatprep.mubr.f32.mxu0 0.0
    %915 = vmatmul.mubr.f32.gmra.mrb[0].mxu0 %v347
    %v916 = vpop.f32.mrb[0].mxu0
    %v917 = vadd.f32 %v163, %v916
    %v918 = vpop.f32.mrb[0].mxu0
    %919 = vmatprep.mubr.f32.mxu0 0.0
    %920 = vmatmul.mubr.f32.gmra.mrb[0].mxu0 %v350
    %v921 = vpop.f32.mrb[0].mxu0
    %v922 = vadd.f32 %v163, %v921
    %v923 = vpop.f32.mrb[0].mxu0
    %924 = vmatprep.mubr.f32.mxu0 0.0
    %925 = vmatmul.mubr.f32.gmra.mrb[0].mxu0 %v353
    %v926 = vpop.f32.mrb[0].mxu0
    %v927 = vadd.f32 %v163, %v926
    %v928 = vpop.f32.mrb[0].mxu0
    %929 = vmatprep.mubr.f32.mxu0 0.0
    %930 = vmatmul.mubr.f32.gmra.mrb[0].mxu0 %v356
    %v931 = vpop.f32.mrb[0].mxu0
    %v932 = vadd.f32 %v163, %v931
    %v933 = vpop.f32.mrb[0].mxu0
    %934 = vmatprep.mubr.f32.mxu0 0.0
    %935 = vmatmul.mubr.f32.gmra.mrb[0].mxu0 %v359
    %v936 = vpop.f32.mrb[0].mxu0
    %v937 = vadd.f32 %v163, %v936
    %v938 = vpop.f32.mrb[0].mxu0
    %939 = vmatprep.mubr.f32.mxu0 0.0
    %940 = vmatmul.mubr.f32.gmra.mrb[0].mxu0 %v362
    %v941 = vpop.f32.mrb[0].mxu0
    %v942 = vadd.f32 %v163, %v941
    %v943 = vpop.f32.mrb[0].mxu0
    %944 = vmatprep.mubr.f32.mxu0 0.0
    %945 = vmatmul.mubr.f32.gmra.mrb[0].mxu0 %v365
    %v946 = vpop.f32.mrb[0].mxu0
    %v947 = vadd.f32 %v163, %v946
    %v948 = vpop.f32.mrb[0].mxu0
    %949 = vmatprep.mubr.f32.mxu0 0.0
    %950 = vmatmul.mubr.f32.gmra.mrb[0].mxu0 %v368
    %v951 = vpop.f32.mrb[0].mxu0
    %v952 = vadd.f32 %v163, %v951
    %v953 = vpop.f32.mrb[0].mxu0
    %954 = vmatprep.mubr.f32.mxu0 0.0
    %955 = vmatmul.mubr.f32.gmra.mrb[0].mxu0 %v371
    %v956 = vpop.f32.mrb[0].mxu0
    %v957 = vadd.f32 %v163, %v956
    %v958 = vpop.f32.mrb[0].mxu0
    %959 = vmatprep.mubr.f32.mxu0 0.0
    %960 = vmatmul.mubr.f32.gmra.mrb[0].mxu0 %v374
    %v961 = vpop.f32.mrb[0].mxu0
    %v962 = vadd.f32 %v163, %v961
    %v963 = vpop.f32.mrb[0].mxu0
    %964 = vmatprep.mubr.f32.mxu0 0.0
    %965 = vmatmul.mubr.f32.gmra.mrb[0].mxu0 %v377
    %v966 = vpop.f32.mrb[0].mxu0
    %v967 = vadd.f32 %v163, %v966
    %v968 = vpop.f32.mrb[0].mxu0
    %969 = vmatprep.mubr.f32.mxu0 0.0
    %970 = vmatmul.mubr.f32.gmra.mrb[0].mxu0 %v380
    %v971 = vpop.f32.mrb[0].mxu0
    %v972 = vadd.f32 %v163, %v971
    %v973 = vpop.f32.mrb[0].mxu0
    %974 = vmatprep.mubr.f32.mxu0 0.0
    %975 = vmatmul.mubr.f32.gmra.mrb[0].mxu0 %v383
    %v976 = vpop.f32.mrb[0].mxu0
    %v977 = vadd.f32 %v163, %v976
    %v978 = vpop.f32.mrb[0].mxu0
    %979 = vmatprep.mubr.f32.mxu0 0.0
    %980 = vmatmul.mubr.f32.gmra.mrb[0].mxu0 %v386
    %v981 = vpop.f32.mrb[0].mxu0
    %v982 = vadd.f32 %v163, %v981
    %v983 = vpop.f32.mrb[0].mxu0
    %984 = vmatprep.mubr.f32.mxu0 0.0
    %985 = vmatmul.mubr.f32.gmra.mrb[0].mxu0 %v389
    %v986 = vpop.f32.mrb[0].mxu0
    %v987 = vadd.f32 %v163, %v986
    %v988 = vpop.f32.mrb[0].mxu0
    %989 = vmatprep.mubr.f32.mxu0 0.0
    %990 = vmatmul.mubr.f32.gmra.mrb[0].mxu0 %v392
    %v991 = vpop.f32.mrb[0].mxu0
    %v992 = vadd.f32 %v163, %v991
    %v993 = vpop.f32.mrb[0].mxu0
    %994 = vmatprep.mubr.f32.mxu0 0.0
    %995 = vmatmul.mubr.f32.gmra.mrb[0].mxu0 %v395
    %v996 = vpop.f32.mrb[0].mxu0
    %v997 = vadd.f32 %v163, %v996
    %v998 = vpop.f32.mrb[0].mxu0
    %999 = vmatprep.mubr.f32.mxu0 0.0
    %1000 = vmatmul.mubr.f32.gmra.mrb[0].mxu0 %v398
    %v1001 = vpop.f32.mrb[0].mxu0
    %v1002 = vadd.f32 %v163, %v1001
    %v1003 = vpop.f32.mrb[0].mxu0
    %1004 = vmatprep.mubr.f32.mxu0 0.0
    %1005 = vmatmul.mubr.f32.gmra.mrb[0].mxu0 %v401
    %v1006 = vpop.f32.mrb[0].mxu0
    %v1007 = vadd.f32 %v163, %v1006
    %v1008 = vpop.f32.mrb[0].mxu0
    %1009 = vmatprep.mubr.f32.mxu0 0.0
    %1010 = vmatmul.mubr.f32.gmra.mrb[0].mxu0 %v404
    %v1011 = vpop.f32.mrb[0].mxu0
    %v1012 = vadd.f32 %v163, %v1011
    %v1013 = vpop.f32.mrb[0].mxu0
    %1014 = vmatprep.mubr.f32.mxu0 0.0
    %1015 = vmatmul.mubr.f32.gmra.mrb[0].mxu0 %v407
    %v1016 = vpop.f32.mrb[0].mxu0
    %v1017 = vadd.f32 %v163, %v1016
    %v1018 = vpop.f32.mrb[0].mxu0
    %1019 = vmatprep.mubr.f32.mxu0 0.0
    %1020 = vmatmul.mubr.f32.gmra.mrb[0].mxu0 %v410
    %v1021 = vpop.f32.mrb[0].mxu0
    %v1022 = vadd.f32 %v163, %v1021
    %v1023 = vpop.f32.mrb[0].mxu0
    %1024 = vmatprep.mubr.f32.mxu0 0.0
    %1025 = vmatmul.mubr.f32.gmra.mrb[0].mxu0 %v413
    %v1026 = vpop.f32.mrb[0].mxu0
    %v1027 = vadd.f32 %v163, %v1026
    %v1028 = vpop.f32.mrb[0].mxu0
    %1029 = vmatprep.mubr.f32.mxu0 0.0
    %1030 = vmatmul.mubr.f32.gmra.mrb[0].mxu0 %v416
    %v1031 = vpop.f32.mrb[0].mxu0
    %v1032 = vadd.f32 %v163, %v1031
    %v1033 = vpop.f32.mrb[0].mxu0
    %1034 = vmatprep.mubr.f32.mxu0 0.0
    %1035 = vmatmul.mubr.f32.gmra.mrb[0].mxu0 %v419
    %v1036 = vpop.f32.mrb[0].mxu0
    %v1037 = vadd.f32 %v163, %v1036
    %v1038 = vpop.f32.mrb[0].mxu0
    %1039 = vmatprep.mubr.f32.mxu0 0.0
    %1040 = vmatmul.mubr.f32.gmra.mrb[0].mxu0 %v422
    %v1041 = vpop.f32.mrb[0].mxu0
    %v1042 = vadd.f32 %v163, %v1041
    %v1043 = vpop.f32.mrb[0].mxu0
    %1044 = vmatprep.mubr.f32.mxu0 0.0
    %1045 = vmatmul.mubr.f32.gmra.mrb[0].mxu0 %v425
    %v1046 = vpop.f32.mrb[0].mxu0
    %v1047 = vadd.f32 %v163, %v1046
    %v1048 = vpop.f32.mrb[0].mxu0
    %1049 = vmatprep.mubr.f32.mxu0 0.0
    %1050 = vmatmul.mubr.f32.gmra.mrb[0].mxu0 %v428
    %v1051 = vpop.f32.mrb[0].mxu0
    %v1052 = vadd.f32 %v163, %v1051
    %v1053 = vpop.f32.mrb[0].mxu0
    %1054 = vmatprep.mubr.f32.mxu0 0.0
    %1055 = vmatmul.mubr.f32.gmra.mrb[0].mxu0 %v431
    %v1056 = vpop.f32.mrb[0].mxu0
    %v1057 = vadd.f32 %v163, %v1056
    %v1058 = vpop.f32.mrb[0].mxu0
    %1059 = vmatprep.mubr.f32.mxu0 0.0
    %1060 = vmatmul.mubr.f32.gmra.mrb[0].mxu0 %v434
    %v1061 = vpop.f32.mrb[0].mxu0
    %v1062 = vadd.f32 %v163, %v1061
    %v1063 = vpop.f32.mrb[0].mxu0
    %1064 = vmatprep.mubr.f32.mxu0 0.0
    %1065 = vmatmul.mubr.f32.gmra.mrb[0].mxu0 %v437
    %v1066 = vpop.f32.mrb[0].mxu0
    %v1067 = vadd.f32 %v163, %v1066
    %v1068 = vpop.f32.mrb[0].mxu0
    %1069 = vmatprep.mubr.f32.mxu0 0.0
    %1070 = vmatmul.mubr.f32.gmra.mrb[0].mxu0 %v440
    %v1071 = vpop.f32.mrb[0].mxu0
    %v1072 = vadd.f32 %v163, %v1071
    %v1073 = vpop.f32.mrb[0].mxu0
    %1074 = vmatprep.mubr.f32.mxu0 0.0
    %1075 = vmatmul.mubr.f32.gmra.mrb[0].mxu0 %v443
    %v1076 = vpop.f32.mrb[0].mxu0
    %v1077 = vadd.f32 %v163, %v1076
    %v1078 = vpop.f32.mrb[0].mxu0
    %1079 = vmatprep.mubr.f32.mxu0 0.0
    %1080 = vmatmul.mubr.f32.gmra.mrb[0].mxu0 %v446
    %v1081 = vpop.f32.mrb[0].mxu0
    %v1082 = vadd.f32 %v163, %v1081
    %v1083 = vpop.f32.mrb[0].mxu0
    %1084 = vmatprep.mubr.f32.mxu0 0.0
    %1085 = vmatmul.mubr.f32.gmra.mrb[0].mxu0 %v449
    %v1086 = vpop.f32.mrb[0].mxu0
    %v1087 = vadd.f32 %v163, %v1086
    %v1088 = vpop.f32.mrb[0].mxu0
    %1089 = vmatprep.mubr.f32.mxu0 0.0
    %1090 = vmatmul.mubr.f32.gmra.mrb[0].mxu0 %v452
    %v1091 = vpop.f32.mrb[0].mxu0
    %v1092 = vadd.f32 %v163, %v1091
    %v1093 = vpop.f32.mrb[0].mxu0
    %1094 = vmatprep.mubr.f32.mxu0 0.0
    %1095 = vmatmul.mubr.f32.gmra.mrb[0].mxu0 %v455
    %v1096 = vpop.f32.mrb[0].mxu0
    %v1097 = vadd.f32 %v163, %v1096
    %v1098 = vpop.f32.mrb[0].mxu0
    %1099 = vmatprep.mubr.f32.mxu0 0.0
    %1100 = vmatmul.mubr.f32.gmra.mrb[0].mxu0 %v458
    %v1101 = vpop.f32.mrb[0].mxu0
    %v1102 = vadd.f32 %v163, %v1101
    %v1103 = vpop.f32.mrb[0].mxu0
    %1104 = vmatprep.mubr.f32.mxu0 0.0
    %1105 = vmatmul.mubr.f32.gmra.mrb[0].mxu0 %v461
    %v1106 = vpop.f32.mrb[0].mxu0
    %v1107 = vadd.f32 %v163, %v1106
    %v1108 = vpop.f32.mrb[0].mxu0
    %1109 = vmatprep.mubr.f32.mxu0 0.0
    %1110 = vmatmul.mubr.f32.gmra.mrb[0].mxu0 %v464
    %v1111 = vpop.f32.mrb[0].mxu0
    %v1112 = vadd.f32 %v163, %v1111
    %v1113 = vpop.f32.mrb[0].mxu0
    %1114 = vmatprep.mubr.f32.mxu0 0.0
    %1115 = vmatmul.mubr.f32.gmra.mrb[0].mxu0 %v467
    %v1116 = vpop.f32.mrb[0].mxu0
    %v1117 = vadd.f32 %v163, %v1116
    %v1118 = vpop.f32.mrb[0].mxu0
    %1119 = vmatprep.mubr.f32.mxu0 0.0
    %1120 = vmatmul.mubr.f32.gmra.mrb[0].mxu0 %v470
    %v1121 = vpop.f32.mrb[0].mxu0
    %v1122 = vadd.f32 %v163, %v1121
    %v1123 = vpop.f32.mrb[0].mxu0
    %1124 = vmatprep.mubr.f32.mxu0 0.0
    %1125 = vmatmul.mubr.f32.gmra.mrb[0].mxu0 %v473
    %v1126 = vpop.f32.mrb[0].mxu0
    %v1127 = vadd.f32 %v163, %v1126
    %v1128 = vpop.f32.mrb[0].mxu0
    %1129 = vmatprep.mubr.f32.mxu0 0.0
    %1130 = vmatmul.mubr.f32.gmra.mrb[0].mxu0 %v476
    %v1131 = vpop.f32.mrb[0].mxu0
    %v1132 = vadd.f32 %v163, %v1131
    %v1133 = vpop.f32.mrb[0].mxu0
    %1134 = vmatprep.mubr.f32.mxu0 0.0
    %1135 = vmatmul.mubr.f32.gmra.mrb[0].mxu0 %v479
    %v1136 = vpop.f32.mrb[0].mxu0
    %v1137 = vadd.f32 %v163, %v1136
    %v1138 = vpop.f32.mrb[0].mxu0
    %1139 = vmatprep.mubr.f32.mxu0 0.0
    %1140 = vmatmul.mubr.f32.gmra.mrb[0].mxu0 %v482
    %v1141 = vpop.f32.mrb[0].mxu0
    %v1142 = vadd.f32 %v163, %v1141
    %v1143 = vpop.f32.mrb[0].mxu0
    %1144 = vmatprep.mubr.f32.mxu0 0.0
    %1145 = vmatmul.mubr.f32.gmra.mrb[0].mxu0 %v485
    %v1146 = vpop.f32.mrb[0].mxu0
    %v1147 = vadd.f32 %v163, %v1146
    %v1148 = vpop.f32.mrb[0].mxu0
    %1149 = vmatprep.mubr.f32.mxu0 0.0
    %1150 = vmatmul.mubr.f32.gmra.mrb[0].mxu0 %v488
    %v1151 = vpop.f32.mrb[0].mxu0
    %v1152 = vadd.f32 %v163, %v1151
    %v1153 = vpop.f32.mrb[0].mxu0
    %1154 = vmatprep.mubr.f32.mxu0 0.0
    %1155 = vmatmul.mubr.f32.gmra.mrb[0].mxu0 %v491
    %v1156 = vpop.f32.mrb[0].mxu0
    %v1157 = vadd.f32 %v163, %v1156
    %v1158 = vpop.f32.mrb[0].mxu0
    %1159 = vmatprep.mubr.f32.mxu0 0.0
    %1160 = vmatmul.mubr.f32.gmra.mrb[0].mxu0 %v494
    %v1161 = vpop.f32.mrb[0].mxu0
    %v1162 = vadd.f32 %v163, %v1161
    %v1163 = vpop.f32.mrb[0].mxu0
    %1164 = vmatprep.mubr.f32.mxu0 0.0
    %1165 = vmatmul.mubr.f32.gmra.mrb[0].mxu0 %v497
    %v1166 = vpop.f32.mrb[0].mxu0
    %v1167 = vadd.f32 %v163, %v1166
    %v1168 = vpop.f32.mrb[0].mxu0
    %1169 = vmatprep.mubr.f32.mxu0 0.0
    %1170 = vmatmul.mubr.f32.gmra.mrb[0].mxu0 %v500
    %v1171 = vpop.f32.mrb[0].mxu0
    %v1172 = vadd.f32 %v163, %v1171
    %v1173 = vpop.f32.mrb[0].mxu0
    %1174 = vmatprep.mubr.f32.mxu0 0.0
    %1175 = vmatmul.mubr.f32.gmra.mrb[0].mxu0 %v503
    %v1176 = vpop.f32.mrb[0].mxu0
    %v1177 = vadd.f32 %v163, %v1176
    %v1178 = vpop.f32.mrb[0].mxu0
    %1179 = vmatprep.mubr.f32.mxu0 0.0
    %1180 = vmatmul.mubr.f32.gmra.mrb[0].mxu0 %v506
    %v1181 = vpop.f32.mrb[0].mxu0
    %v1182 = vadd.f32 %v163, %v1181
    %v1183 = vpop.f32.mrb[0].mxu0
    %1184 = vmatprep.mubr.f32.mxu0 0.0
    %1185 = vmatmul.mubr.f32.gmra.mrb[0].mxu0 %v509
    %v1186 = vpop.f32.mrb[0].mxu0
    %v1187 = vadd.f32 %v163, %v1186
    %v1188 = vpop.f32.mrb[0].mxu0
    %1189 = vmatprep.mubr.f32.mxu0 0.0
    %1190 = vmatmul.mubr.f32.gmra.mrb[0].mxu0 %v512
    %v1191 = vpop.f32.mrb[0].mxu0
    %v1192 = vadd.f32 %v163, %v1191
    %v1193 = vpop.f32.mrb[0].mxu0
    %1194 = vmatprep.mubr.f32.mxu0 0.0
    %1195 = vmatmul.mubr.f32.gmra.mrb[0].mxu0 %v515
    %v1196 = vpop.f32.mrb[0].mxu0
    %v1197 = vadd.f32 %v163, %v1196
    %v1198 = vpop.f32.mrb[0].mxu0
    %1199 = vmatprep.mubr.f32.mxu0 0.0
    %1200 = vmatmul.mubr.f32.gmra.mrb[0].mxu0 %v518
    %v1201 = vpop.f32.mrb[0].mxu0
    %v1202 = vadd.f32 %v163, %v1201
    %v1203 = vpop.f32.mrb[0].mxu0
    %1204 = vmatprep.mubr.f32.mxu0 0.0
    %1205 = vmatmul.mubr.f32.gmra.mrb[0].mxu0 %v521
    %v1206 = vpop.f32.mrb[0].mxu0
    %v1207 = vadd.f32 %v163, %v1206
    %v1208 = vpop.f32.mrb[0].mxu0
    %1209 = vmatprep.mubr.f32.mxu0 0.0
    %1210 = vmatmul.mubr.f32.gmra.mrb[0].mxu0 %v524
    %v1211 = vpop.f32.mrb[0].mxu0
    %v1212 = vadd.f32 %v163, %v1211
    %v1213 = vpop.f32.mrb[0].mxu0
    %1214 = vmatprep.mubr.f32.mxu0 0.0
    %1215 = vmatmul.mubr.f32.gmra.mrb[0].mxu0 %v527
    %v1216 = vpop.f32.mrb[0].mxu0
    %v1217 = vadd.f32 %v163, %v1216
    %v1218 = vpop.f32.mrb[0].mxu0
    %1219 = vmatprep.mubr.f32.mxu0 0.0
    %1220 = vmatmul.mubr.f32.gmra.mrb[0].mxu0 %v530
    %v1221 = vpop.f32.mrb[0].mxu0
    %v1222 = vadd.f32 %v163, %v1221
    %v1223 = vpop.f32.mrb[0].mxu0
    %1224 = vmatprep.mubr.f32.mxu0 0.0
    %1225 = vmatmul.mubr.f32.gmra.mrb[0].mxu0 %v533
    %v1226 = vpop.f32.mrb[0].mxu0
    %v1227 = vadd.f32 %v163, %v1226
    %v1228 = vpop.f32.mrb[0].mxu0
    %1229 = vmatprep.mubr.f32.mxu0 0.0
    %1230 = vmatmul.mubr.f32.gmra.mrb[0].mxu0 %v536
    %v1231 = vpop.f32.mrb[0].mxu0
    %v1232 = vadd.f32 %v163, %v1231
    %v1233 = vpop.f32.mrb[0].mxu0
    %1234 = vmatprep.mubr.f32.mxu0 0.0
    %1235 = vmatmul.mubr.f32.gmra.mrb[0].mxu0 %v539
    %v1236 = vpop.f32.mrb[0].mxu0
    %v1237 = vadd.f32 %v163, %v1236
    %v1238 = vpop.f32.mrb[0].mxu0
    %1239 = vmatprep.mubr.f32.mxu0 0.0
    %1240 = vmatmul.mubr.f32.gmra.mrb[0].mxu0 %v542
    %v1241 = vpop.f32.mrb[0].mxu0
    %v1242 = vadd.f32 %v163, %v1241
    %v1243 = vpop.f32.mrb[0].mxu0
    %1244 = vmatprep.mubr.f32.mxu0 0.0
    %1245 = vmatmul.mubr.f32.gmra.mrb[0].mxu0 %v545
    %v1246 = vpop.f32.mrb[0].mxu0
    %v1247 = vadd.f32 %v163, %v1246
    %v1248 = vpop.f32.mrb[0].mxu0
    %1249 = vmatprep.mubr.f32.mxu0 0.0
    %1250 = vmatmul.mubr.f32.gmra.mrb[0].mxu0 %v548
    %v1251 = vpop.f32.mrb[0].mxu0
    %v1252 = vadd.f32 %v163, %v1251
    %v1253 = vpop.f32.mrb[0].mxu0
    %1254 = vdwg.mxu0
    %v1255 = vtanh.pop %v617
    %v1256 = vtanh.pop %v622
    %v1257 = vtanh.pop %v627
    %v1258 = vtanh.pop %v632
    %v1259 = vtanh.pop %v637
    %v1260 = vtanh.pop %v642
    %v1261 = vtanh.pop %v647
    %v1262 = vtanh.pop %v652
    %v1263 = vtanh.pop %v657
    %v1264 = vtanh.pop %v662
    %v1265 = vtanh.pop %v667
    %v1266 = vtanh.pop %v672
    %v1267 = vtanh.pop %v677
    %v1268 = vtanh.pop %v682
    %v1269 = vtanh.pop %v687
    %v1270 = vtanh.pop %v692
    %v1271 = vtanh.pop %v697
    %v1272 = vtanh.pop %v702
    %v1273 = vtanh.pop %v707
    %v1274 = vtanh.pop %v712
    %v1275 = vtanh.pop %v717
    %v1276 = vtanh.pop %v722
    %v1277 = vtanh.pop %v727
    %v1278 = vtanh.pop %v732
    %v1279 = vtanh.pop %v737
    %v1280 = vtanh.pop %v742
    %v1281 = vtanh.pop %v747
    %v1282 = vtanh.pop %v752
    %v1283 = vtanh.pop %v757
    %v1284 = vtanh.pop %v762
    %v1285 = vtanh.pop %v767
    %v1286 = vtanh.pop %v772
    %v1287 = vtanh.pop %v777
    %v1288 = vtanh.pop %v782
    %v1289 = vtanh.pop %v787
    %v1290 = vtanh.pop %v792
    %v1291 = vtanh.pop %v797
    %v1292 = vtanh.pop %v802
    %v1293 = vtanh.pop %v807
    %v1294 = vtanh.pop %v812
    %v1295 = vtanh.pop %v817
    %v1296 = vtanh.pop %v822
    %v1297 = vtanh.pop %v827
    %v1298 = vtanh.pop %v832
    %v1299 = vtanh.pop %v837
    %v1300 = vtanh.pop %v842
    %v1301 = vtanh.pop %v847
    %v1302 = vtanh.pop %v852
    %v1303 = vtanh.pop %v857
    %v1304 = vtanh.pop %v862
    %v1305 = vtanh.pop %v867
    %v1306 = vtanh.pop %v872
    %v1307 = vtanh.pop %v877
    %v1308 = vtanh.pop %v882
    %v1309 = vtanh.pop %v887
    %v1310 = vtanh.pop %v892
    %v1311 = vtanh.pop %v897
    %v1312 = vtanh.pop %v902
    %v1313 = vtanh.pop %v907
    %v1314 = vtanh.pop %v912
    %v1315 = vtanh.pop %v917
    %v1316 = vtanh.pop %v922
    %v1317 = vtanh.pop %v927
    %v1318 = vtanh.pop %v932
    %v1319 = vtanh.pop %v937
    %v1320 = vtanh.pop %v942
    %v1321 = vtanh.pop %v947
    %v1322 = vtanh.pop %v952
    %v1323 = vtanh.pop %v957
    %v1324 = vtanh.pop %v962
    %v1325 = vtanh.pop %v967
    %v1326 = vtanh.pop %v972
    %v1327 = vtanh.pop %v977
    %v1328 = vtanh.pop %v982
    %v1329 = vtanh.pop %v987
    %v1330 = vtanh.pop %v992
    %v1331 = vtanh.pop %v997
    %v1332 = vtanh.pop %v1002
    %v1333 = vtanh.pop %v1007
    %v1334 = vtanh.pop %v1012
    %v1335 = vtanh.pop %v1017
    %v1336 = vtanh.pop %v1022
    %v1337 = vtanh.pop %v1027
    %v1338 = vtanh.pop %v1032
    %v1339 = vtanh.pop %v1037
    %v1340 = vtanh.pop %v1042
    %v1341 = vtanh.pop %v1047
    %v1342 = vtanh.pop %v1052
    %v1343 = vtanh.pop %v1057
    %v1344 = vtanh.pop %v1062
    %v1345 = vtanh.pop %v1067
    %v1346 = vtanh.pop %v1072
    %v1347 = vtanh.pop %v1077
    %v1348 = vtanh.pop %v1082
    %v1349 = vtanh.pop %v1087
    %v1350 = vtanh.pop %v1092
    %v1351 = vtanh.pop %v1097
    %v1352 = vtanh.pop %v1102
    %v1353 = vtanh.pop %v1107
    %v1354 = vtanh.pop %v1112
    %v1355 = vtanh.pop %v1117
    %v1356 = vtanh.pop %v1122
    %v1357 = vtanh.pop %v1127
    %v1358 = vtanh.pop %v1132
    %v1359 = vtanh.pop %v1137
    %v1360 = vtanh.pop %v1142
    %v1361 = vtanh.pop %v1147
    %v1362 = vtanh.pop %v1152
    %v1363 = vtanh.pop %v1157
    %v1364 = vtanh.pop %v1162
    %v1365 = vtanh.pop %v1167
    %v1366 = vtanh.pop %v1172
    %v1367 = vtanh.pop %v1177
    %v1368 = vtanh.pop %v1182
    %v1369 = vtanh.pop %v1187
    %v1370 = vtanh.pop %v1192
    %v1371 = vtanh.pop %v1197
    %v1372 = vtanh.pop %v1202
    %v1373 = vtanh.pop %v1207
    %v1374 = vtanh.pop %v1212
    %v1375 = vtanh.pop %v1217
    %v1376 = vtanh.pop %v1222
    %v1377 = vtanh.pop %v1227
    %v1378 = vtanh.pop %v1232
    %v1379 = vtanh.pop %v1237
    %v1380 = vtanh.pop %v1242
    %v1381 = vtanh.pop %v1247
    %v1382 = vtanh.pop %v1252
    %v1383 = vld [vmem:[%s3] sm:$0xff]
    %v1384 = vld [vmem:[%s3 + $0x8] sm:$0xff]
    %v1385 = vld [vmem:[%s3 + $0x10] sm:$0xff]
    %v1386 = vld [vmem:[%s3 + $0x18] sm:$0xff]
    %v1387 = vld [vmem:[%s4] sm:$0x1]
    %v1389 = vlaneseq
    %v1390 = vshrl.u32 %v1389, 7
    %v1391 = vsub.s32 0, %v1390
    %v1392 = vrot.slane %v1387, %v1391
    %vm1394 = vcmask 261120
    %v1396 = vsel %vm1394, %v1255, 0
    %v1399 = vsel %vm1394, %v1256, 0
    %v1402 = vsel %vm1394, %v1257, 0
    %v1405 = vsel %vm1394, %v1258, 0
    %v1408 = vsel %vm1394, %v1259, 0
    %v1411 = vsel %vm1394, %v1260, 0
    %v1414 = vsel %vm1394, %v1261, 0
    %v1417 = vsel %vm1394, %v1262, 0
    %v1420 = vsel %vm1394, %v1263, 0
    %v1423 = vsel %vm1394, %v1264, 0
    %v1426 = vsel %vm1394, %v1265, 0
    %v1429 = vsel %vm1394, %v1266, 0
    %v1432 = vsel %vm1394, %v1267, 0
    %v1435 = vsel %vm1394, %v1268, 0
    %v1438 = vsel %vm1394, %v1269, 0
    %v1441 = vsel %vm1394, %v1270, 0
    %v1444 = vsel %vm1394, %v1271, 0
    %v1447 = vsel %vm1394, %v1272, 0
    %v1450 = vsel %vm1394, %v1273, 0
    %v1453 = vsel %vm1394, %v1274, 0
    %v1456 = vsel %vm1394, %v1275, 0
    %v1459 = vsel %vm1394, %v1276, 0
    %v1462 = vsel %vm1394, %v1277, 0
    %v1465 = vsel %vm1394, %v1278, 0
    %v1468 = vsel %vm1394, %v1279, 0
    %v1471 = vsel %vm1394, %v1280, 0
    %v1474 = vsel %vm1394, %v1281, 0
    %v1477 = vsel %vm1394, %v1282, 0
    %v1480 = vsel %vm1394, %v1283, 0
    %v1483 = vsel %vm1394, %v1284, 0
    %v1486 = vsel %vm1394, %v1285, 0
    %v1489 = vsel %vm1394, %v1286, 0
    %v1492 = vsel %vm1394, %v1287, 0
    %v1495 = vsel %vm1394, %v1288, 0
    %v1498 = vsel %vm1394, %v1289, 0
    %v1501 = vsel %vm1394, %v1290, 0
    %v1504 = vsel %vm1394, %v1291, 0
    %v1507 = vsel %vm1394, %v1292, 0
    %v1510 = vsel %vm1394, %v1293, 0
    %v1513 = vsel %vm1394, %v1294, 0
    %v1516 = vsel %vm1394, %v1295, 0
    %v1519 = vsel %vm1394, %v1296, 0
    %v1522 = vsel %vm1394, %v1297, 0
    %v1525 = vsel %vm1394, %v1298, 0
    %v1528 = vsel %vm1394, %v1299, 0
    %v1531 = vsel %vm1394, %v1300, 0
    %v1534 = vsel %vm1394, %v1301, 0
    %v1537 = vsel %vm1394, %v1302, 0
    %v1540 = vsel %vm1394, %v1303, 0
    %v1543 = vsel %vm1394, %v1304, 0
    %v1546 = vsel %vm1394, %v1305, 0
    %v1549 = vsel %vm1394, %v1306, 0
    %v1552 = vsel %vm1394, %v1307, 0
    %v1555 = vsel %vm1394, %v1308, 0
    %v1558 = vsel %vm1394, %v1309, 0
    %v1561 = vsel %vm1394, %v1310, 0
    %v1564 = vsel %vm1394, %v1311, 0
    %v1567 = vsel %vm1394, %v1312, 0
    %v1570 = vsel %vm1394, %v1313, 0
    %v1573 = vsel %vm1394, %v1314, 0
    %v1576 = vsel %vm1394, %v1315, 0
    %v1579 = vsel %vm1394, %v1316, 0
    %v1582 = vsel %vm1394, %v1317, 0
    %v1585 = vsel %vm1394, %v1318, 0
    %v1588 = vsel %vm1394, %v1319, 0
    %v1591 = vsel %vm1394, %v1320, 0
    %v1594 = vsel %vm1394, %v1321, 0
    %v1597 = vsel %vm1394, %v1322, 0
    %v1600 = vsel %vm1394, %v1323, 0
    %v1603 = vsel %vm1394, %v1324, 0
    %v1606 = vsel %vm1394, %v1325, 0
    %v1609 = vsel %vm1394, %v1326, 0
    %v1612 = vsel %vm1394, %v1327, 0
    %v1615 = vsel %vm1394, %v1328, 0
    %v1618 = vsel %vm1394, %v1329, 0
    %v1621 = vsel %vm1394, %v1330, 0
    %v1624 = vsel %vm1394, %v1331, 0
    %v1627 = vsel %vm1394, %v1332, 0
    %v1630 = vsel %vm1394, %v1333, 0
    %v1633 = vsel %vm1394, %v1334, 0
    %v1636 = vsel %vm1394, %v1335, 0
    %v1639 = vsel %vm1394, %v1336, 0
    %v1642 = vsel %vm1394, %v1337, 0
    %v1645 = vsel %vm1394, %v1338, 0
    %v1648 = vsel %vm1394, %v1339, 0
    %v1651 = vsel %vm1394, %v1340, 0
    %v1654 = vsel %vm1394, %v1341, 0
    %v1657 = vsel %vm1394, %v1342, 0
    %v1660 = vsel %vm1394, %v1343, 0
    %v1663 = vsel %vm1394, %v1344, 0
    %v1666 = vsel %vm1394, %v1345, 0
    %v1669 = vsel %vm1394, %v1346, 0
    %v1672 = vsel %vm1394, %v1347, 0
    %v1675 = vsel %vm1394, %v1348, 0
    %v1678 = vsel %vm1394, %v1349, 0
    %v1681 = vsel %vm1394, %v1350, 0
    %v1684 = vsel %vm1394, %v1351, 0
    %v1687 = vsel %vm1394, %v1352, 0
    %v1690 = vsel %vm1394, %v1353, 0
    %v1693 = vsel %vm1394, %v1354, 0
    %v1696 = vsel %vm1394, %v1355, 0
    %v1699 = vsel %vm1394, %v1356, 0
    %v1702 = vsel %vm1394, %v1357, 0
    %v1705 = vsel %vm1394, %v1358, 0
    %v1708 = vsel %vm1394, %v1359, 0
    %v1711 = vsel %vm1394, %v1360, 0
    %v1714 = vsel %vm1394, %v1361, 0
    %v1717 = vsel %vm1394, %v1362, 0
    %v1720 = vsel %vm1394, %v1363, 0
    %v1723 = vsel %vm1394, %v1364, 0
    %v1726 = vsel %vm1394, %v1365, 0
    %v1729 = vsel %vm1394, %v1366, 0
    %v1732 = vsel %vm1394, %v1367, 0
    %v1735 = vsel %vm1394, %v1368, 0
    %v1738 = vsel %vm1394, %v1369, 0
    %v1741 = vsel %vm1394, %v1370, 0
    %v1744 = vsel %vm1394, %v1371, 0
    %v1747 = vsel %vm1394, %v1372, 0
    %v1750 = vsel %vm1394, %v1373, 0
    %v1753 = vsel %vm1394, %v1374, 0
    %v1756 = vsel %vm1394, %v1375, 0
    %v1759 = vsel %vm1394, %v1376, 0
    %v1762 = vsel %vm1394, %v1377, 0
    %v1765 = vsel %vm1394, %v1378, 0
    %v1768 = vsel %vm1394, %v1379, 0
    %v1771 = vsel %vm1394, %v1380, 0
    %v1774 = vsel %vm1394, %v1381, 0
    %v1777 = vsel %vm1394, %v1382, 0
    %1779 = vmatprep.subr.mxu0 0.0
    %1780 = vmatpush1.msra.mxu0 %v1383
    %1781 = vmatprep.subr.mxu0 0.0
    %1782 = vmatpush1.msra.mxu0 %v1384
    %1783 = vmatprep.subr.mxu0 0.0
    %1784 = vmatpush1.msra.mxu0 %v1385
    %1785 = vmatprep.subr.mxu0 0.0
    %1786 = vmatpush1.msra.mxu0 %v1386
    %1787 = vmatprep.subr.mxu0 0.0
    %1788 = vmatpush1.msra.mxu0 0.0
    %1789 = vmatprep.subr.mxu0 0.0
    %1790 = vmatpush1.msra.mxu0 0.0
    %1791 = vmatprep.subr.mxu0 0.0
    %1792 = vmatpush1.msra.mxu0 0.0
    %1793 = vmatprep.subr.mxu0 0.0
    %1794 = vmatpush1.msra.mxu0 0.0
    %1795 = vmatprep.subr.mxu0 0.0
    %1796 = vmatpush1.msra.mxu0 0.0
    %1797 = vmatprep.subr.mxu0 0.0
    %1798 = vmatpush1.msra.mxu0 0.0
    %1799 = vmatprep.subr.mxu0 0.0
    %1800 = vmatpush1.msra.mxu0 0.0
    %1801 = vmatprep.subr.mxu0 0.0
    %1802 = vmatpush1.msra.mxu0 0.0
    %1803 = vmatprep.subr.mxu0 0.0
    %1804 = vmatpush1.msra.mxu0 0.0
    %1805 = vmatprep.subr.mxu0 0.0
    %1806 = vmatpush1.msra.mxu0 0.0
    %1807 = vmatprep.subr.mxu0 0.0
    %1808 = vmatpush1.msra.mxu0 0.0
    %1809 = vmatprep.subr.mxu0 0.0
    %1810 = vmatpush1.msra.mxu0 0.0
    %1811 = vmatprep.subr.mxu0 0.0
    %1812 = vmatpush1.msra.mxu0 0.0
    %1813 = vmatprep.subr.mxu0 0.0
    %1814 = vmatpush1.msra.mxu0 0.0
    %1815 = vmatprep.subr.mxu0 0.0
    %1816 = vmatpush1.msra.mxu0 0.0
    %1817 = vmatprep.subr.mxu0 0.0
    %1818 = vmatpush1.msra.mxu0 0.0
    %1819 = vmatprep.subr.mxu0 0.0
    %1820 = vmatpush1.msra.mxu0 0.0
    %1821 = vmatprep.subr.mxu0 0.0
    %1822 = vmatpush1.msra.mxu0 0.0
    %1823 = vmatprep.subr.mxu0 0.0
    %1824 = vmatpush1.msra.mxu0 0.0
    %1825 = vmatprep.subr.mxu0 0.0
    %1826 = vmatpush1.msra.mxu0 0.0
    %1827 = vmatprep.subr.mxu0 0.0
    %1828 = vmatpush1.msra.mxu0 0.0
    %1829 = vmatprep.subr.mxu0 0.0
    %1830 = vmatpush1.msra.mxu0 0.0
    %1831 = vmatprep.subr.mxu0 0.0
    %1832 = vmatpush1.msra.mxu0 0.0
    %1833 = vmatprep.subr.mxu0 0.0
    %1834 = vmatpush1.msra.mxu0 0.0
    %1835 = vmatprep.subr.mxu0 0.0
    %1836 = vmatpush1.msra.mxu0 0.0
    %1837 = vmatprep.subr.mxu0 0.0
    %1838 = vmatpush1.msra.mxu0 0.0
    %1839 = vmatprep.subr.mxu0 0.0
    %1840 = vmatpush1.msra.mxu0 0.0
    %1841 = vmatprep.subr.mxu0 0.0
    %1842 = vmatpush1.msra.mxu0 0.0
    %1843 = vmatprep.mubr.f32.mxu0 0.0
    %1844 = vmatmul.mubr.f32.gmra.mrb[0].mxu0 %v1396
    %v1845 = vpop.f32.mrb[0].mxu0
    %v1846 = vadd.f32 %v1392, %v1845
    %v1847 = vpop.f32.mrb[0].mxu0
    %1848 = vmatprep.mubr.f32.mxu0 0.0
    %1849 = vmatmul.mubr.f32.gmra.mrb[0].mxu0 %v1399
    %v1850 = vpop.f32.mrb[0].mxu0
    %v1851 = vadd.f32 %v1392, %v1850
    %v1852 = vpop.f32.mrb[0].mxu0
    %1853 = vmatprep.mubr.f32.mxu0 0.0
    %1854 = vmatmul.mubr.f32.gmra.mrb[0].mxu0 %v1402
    %v1855 = vpop.f32.mrb[0].mxu0
    %v1856 = vadd.f32 %v1392, %v1855
    %v1857 = vpop.f32.mrb[0].mxu0
    %1858 = vmatprep.mubr.f32.mxu0 0.0
    %1859 = vmatmul.mubr.f32.gmra.mrb[0].mxu0 %v1405
    %v1860 = vpop.f32.mrb[0].mxu0
    %v1861 = vadd.f32 %v1392, %v1860
    %v1862 = vpop.f32.mrb[0].mxu0
    %1863 = vmatprep.mubr.f32.mxu0 0.0
    %1864 = vmatmul.mubr.f32.gmra.mrb[0].mxu0 %v1408
    %v1865 = vpop.f32.mrb[0].mxu0
    %v1866 = vadd.f32 %v1392, %v1865
    %v1867 = vpop.f32.mrb[0].mxu0
    %1868 = vmatprep.mubr.f32.mxu0 0.0
    %1869 = vmatmul.mubr.f32.gmra.mrb[0].mxu0 %v1411
    %v1870 = vpop.f32.mrb[0].mxu0
    %v1871 = vadd.f32 %v1392, %v1870
    %v1872 = vpop.f32.mrb[0].mxu0
    %1873 = vmatprep.mubr.f32.mxu0 0.0
    %1874 = vmatmul.mubr.f32.gmra.mrb[0].mxu0 %v1414
    %v1875 = vpop.f32.mrb[0].mxu0
    %v1876 = vadd.f32 %v1392, %v1875
    %v1877 = vpop.f32.mrb[0].mxu0
    %1878 = vmatprep.mubr.f32.mxu0 0.0
    %1879 = vmatmul.mubr.f32.gmra.mrb[0].mxu0 %v1417
    %v1880 = vpop.f32.mrb[0].mxu0
    %v1881 = vadd.f32 %v1392, %v1880
    %v1882 = vpop.f32.mrb[0].mxu0
    %1883 = vmatprep.mubr.f32.mxu0 0.0
    %1884 = vmatmul.mubr.f32.gmra.mrb[0].mxu0 %v1420
    %v1885 = vpop.f32.mrb[0].mxu0
    %v1886 = vadd.f32 %v1392, %v1885
    %v1887 = vpop.f32.mrb[0].mxu0
    %1888 = vmatprep.mubr.f32.mxu0 0.0
    %1889 = vmatmul.mubr.f32.gmra.mrb[0].mxu0 %v1423
    %v1890 = vpop.f32.mrb[0].mxu0
    %v1891 = vadd.f32 %v1392, %v1890
    %v1892 = vpop.f32.mrb[0].mxu0
    %1893 = vmatprep.mubr.f32.mxu0 0.0
    %1894 = vmatmul.mubr.f32.gmra.mrb[0].mxu0 %v1426
    %v1895 = vpop.f32.mrb[0].mxu0
    %v1896 = vadd.f32 %v1392, %v1895
    %v1897 = vpop.f32.mrb[0].mxu0
    %1898 = vmatprep.mubr.f32.mxu0 0.0
    %1899 = vmatmul.mubr.f32.gmra.mrb[0].mxu0 %v1429
    %v1900 = vpop.f32.mrb[0].mxu0
    %v1901 = vadd.f32 %v1392, %v1900
    %v1902 = vpop.f32.mrb[0].mxu0
    %1903 = vmatprep.mubr.f32.mxu0 0.0
    %1904 = vmatmul.mubr.f32.gmra.mrb[0].mxu0 %v1432
    %v1905 = vpop.f32.mrb[0].mxu0
    %v1906 = vadd.f32 %v1392, %v1905
    %v1907 = vpop.f32.mrb[0].mxu0
    %1908 = vmatprep.mubr.f32.mxu0 0.0
    %1909 = vmatmul.mubr.f32.gmra.mrb[0].mxu0 %v1435
    %v1910 = vpop.f32.mrb[0].mxu0
    %v1911 = vadd.f32 %v1392, %v1910
    %v1912 = vpop.f32.mrb[0].mxu0
    %1913 = vmatprep.mubr.f32.mxu0 0.0
    %1914 = vmatmul.mubr.f32.gmra.mrb[0].mxu0 %v1438
    %v1915 = vpop.f32.mrb[0].mxu0
    %v1916 = vadd.f32 %v1392, %v1915
    %v1917 = vpop.f32.mrb[0].mxu0
    %1918 = vmatprep.mubr.f32.mxu0 0.0
    %1919 = vmatmul.mubr.f32.gmra.mrb[0].mxu0 %v1441
    %v1920 = vpop.f32.mrb[0].mxu0
    %v1921 = vadd.f32 %v1392, %v1920
    %v1922 = vpop.f32.mrb[0].mxu0
    %1923 = vmatprep.mubr.f32.mxu0 0.0
    %1924 = vmatmul.mubr.f32.gmra.mrb[0].mxu0 %v1444
    %v1925 = vpop.f32.mrb[0].mxu0
    %v1926 = vadd.f32 %v1392, %v1925
    %v1927 = vpop.f32.mrb[0].mxu0
    %1928 = vmatprep.mubr.f32.mxu0 0.0
    %1929 = vmatmul.mubr.f32.gmra.mrb[0].mxu0 %v1447
    %v1930 = vpop.f32.mrb[0].mxu0
    %v1931 = vadd.f32 %v1392, %v1930
    %v1932 = vpop.f32.mrb[0].mxu0
    %1933 = vmatprep.mubr.f32.mxu0 0.0
    %1934 = vmatmul.mubr.f32.gmra.mrb[0].mxu0 %v1450
    %v1935 = vpop.f32.mrb[0].mxu0
    %v1936 = vadd.f32 %v1392, %v1935
    %v1937 = vpop.f32.mrb[0].mxu0
    %1938 = vmatprep.mubr.f32.mxu0 0.0
    %1939 = vmatmul.mubr.f32.gmra.mrb[0].mxu0 %v1453
    %v1940 = vpop.f32.mrb[0].mxu0
    %v1941 = vadd.f32 %v1392, %v1940
    %v1942 = vpop.f32.mrb[0].mxu0
    %1943 = vmatprep.mubr.f32.mxu0 0.0
    %1944 = vmatmul.mubr.f32.gmra.mrb[0].mxu0 %v1456
    %v1945 = vpop.f32.mrb[0].mxu0
    %v1946 = vadd.f32 %v1392, %v1945
    %v1947 = vpop.f32.mrb[0].mxu0
    %1948 = vmatprep.mubr.f32.mxu0 0.0
    %1949 = vmatmul.mubr.f32.gmra.mrb[0].mxu0 %v1459
    %v1950 = vpop.f32.mrb[0].mxu0
    %v1951 = vadd.f32 %v1392, %v1950
    %v1952 = vpop.f32.mrb[0].mxu0
    %1953 = vmatprep.mubr.f32.mxu0 0.0
    %1954 = vmatmul.mubr.f32.gmra.mrb[0].mxu0 %v1462
    %v1955 = vpop.f32.mrb[0].mxu0
    %v1956 = vadd.f32 %v1392, %v1955
    %v1957 = vpop.f32.mrb[0].mxu0
    %1958 = vmatprep.mubr.f32.mxu0 0.0
    %1959 = vmatmul.mubr.f32.gmra.mrb[0].mxu0 %v1465
    %v1960 = vpop.f32.mrb[0].mxu0
    %v1961 = vadd.f32 %v1392, %v1960
    %v1962 = vpop.f32.mrb[0].mxu0
    %1963 = vmatprep.mubr.f32.mxu0 0.0
    %1964 = vmatmul.mubr.f32.gmra.mrb[0].mxu0 %v1468
    %v1965 = vpop.f32.mrb[0].mxu0
    %v1966 = vadd.f32 %v1392, %v1965
    %v1967 = vpop.f32.mrb[0].mxu0
    %1968 = vmatprep.mubr.f32.mxu0 0.0
    %1969 = vmatmul.mubr.f32.gmra.mrb[0].mxu0 %v1471
    %v1970 = vpop.f32.mrb[0].mxu0
    %v1971 = vadd.f32 %v1392, %v1970
    %v1972 = vpop.f32.mrb[0].mxu0
    %1973 = vmatprep.mubr.f32.mxu0 0.0
    %1974 = vmatmul.mubr.f32.gmra.mrb[0].mxu0 %v1474
    %v1975 = vpop.f32.mrb[0].mxu0
    %v1976 = vadd.f32 %v1392, %v1975
    %v1977 = vpop.f32.mrb[0].mxu0
    %1978 = vmatprep.mubr.f32.mxu0 0.0
    %1979 = vmatmul.mubr.f32.gmra.mrb[0].mxu0 %v1477
    %v1980 = vpop.f32.mrb[0].mxu0
    %v1981 = vadd.f32 %v1392, %v1980
    %v1982 = vpop.f32.mrb[0].mxu0
    %1983 = vmatprep.mubr.f32.mxu0 0.0
    %1984 = vmatmul.mubr.f32.gmra.mrb[0].mxu0 %v1480
    %v1985 = vpop.f32.mrb[0].mxu0
    %v1986 = vadd.f32 %v1392, %v1985
    %v1987 = vpop.f32.mrb[0].mxu0
    %1988 = vmatprep.mubr.f32.mxu0 0.0
    %1989 = vmatmul.mubr.f32.gmra.mrb[0].mxu0 %v1483
    %v1990 = vpop.f32.mrb[0].mxu0
    %v1991 = vadd.f32 %v1392, %v1990
    %v1992 = vpop.f32.mrb[0].mxu0
    %1993 = vmatprep.mubr.f32.mxu0 0.0
    %1994 = vmatmul.mubr.f32.gmra.mrb[0].mxu0 %v1486
    %v1995 = vpop.f32.mrb[0].mxu0
    %v1996 = vadd.f32 %v1392, %v1995
    %v1997 = vpop.f32.mrb[0].mxu0
    %1998 = vmatprep.mubr.f32.mxu0 0.0
    %1999 = vmatmul.mubr.f32.gmra.mrb[0].mxu0 %v1489
    %v2000 = vpop.f32.mrb[0].mxu0
    %v2001 = vadd.f32 %v1392, %v2000
    %v2002 = vpop.f32.mrb[0].mxu0
    %2003 = vmatprep.mubr.f32.mxu0 0.0
    %2004 = vmatmul.mubr.f32.gmra.mrb[0].mxu0 %v1492
    %v2005 = vpop.f32.mrb[0].mxu0
    %v2006 = vadd.f32 %v1392, %v2005
    %v2007 = vpop.f32.mrb[0].mxu0
    %2008 = vmatprep.mubr.f32.mxu0 0.0
    %2009 = vmatmul.mubr.f32.gmra.mrb[0].mxu0 %v1495
    %v2010 = vpop.f32.mrb[0].mxu0
    %v2011 = vadd.f32 %v1392, %v2010
    %v2012 = vpop.f32.mrb[0].mxu0
    %2013 = vmatprep.mubr.f32.mxu0 0.0
    %2014 = vmatmul.mubr.f32.gmra.mrb[0].mxu0 %v1498
    %v2015 = vpop.f32.mrb[0].mxu0
    %v2016 = vadd.f32 %v1392, %v2015
    %v2017 = vpop.f32.mrb[0].mxu0
    %2018 = vmatprep.mubr.f32.mxu0 0.0
    %2019 = vmatmul.mubr.f32.gmra.mrb[0].mxu0 %v1501
    %v2020 = vpop.f32.mrb[0].mxu0
    %v2021 = vadd.f32 %v1392, %v2020
    %v2022 = vpop.f32.mrb[0].mxu0
    %2023 = vmatprep.mubr.f32.mxu0 0.0
    %2024 = vmatmul.mubr.f32.gmra.mrb[0].mxu0 %v1504
    %v2025 = vpop.f32.mrb[0].mxu0
    %v2026 = vadd.f32 %v1392, %v2025
    %v2027 = vpop.f32.mrb[0].mxu0
    %2028 = vmatprep.mubr.f32.mxu0 0.0
    %2029 = vmatmul.mubr.f32.gmra.mrb[0].mxu0 %v1507
    %v2030 = vpop.f32.mrb[0].mxu0
    %v2031 = vadd.f32 %v1392, %v2030
    %v2032 = vpop.f32.mrb[0].mxu0
    %2033 = vmatprep.mubr.f32.mxu0 0.0
    %2034 = vmatmul.mubr.f32.gmra.mrb[0].mxu0 %v1510
    %v2035 = vpop.f32.mrb[0].mxu0
    %v2036 = vadd.f32 %v1392, %v2035
    %v2037 = vpop.f32.mrb[0].mxu0
    %2038 = vmatprep.mubr.f32.mxu0 0.0
    %2039 = vmatmul.mubr.f32.gmra.mrb[0].mxu0 %v1513
    %v2040 = vpop.f32.mrb[0].mxu0
    %v2041 = vadd.f32 %v1392, %v2040
    %v2042 = vpop.f32.mrb[0].mxu0
    %2043 = vmatprep.mubr.f32.mxu0 0.0
    %2044 = vmatmul.mubr.f32.gmra.mrb[0].mxu0 %v1516
    %v2045 = vpop.f32.mrb[0].mxu0
    %v2046 = vadd.f32 %v1392, %v2045
    %v2047 = vpop.f32.mrb[0].mxu0
    %2048 = vmatprep.mubr.f32.mxu0 0.0
    %2049 = vmatmul.mubr.f32.gmra.mrb[0].mxu0 %v1519
    %v2050 = vpop.f32.mrb[0].mxu0
    %v2051 = vadd.f32 %v1392, %v2050
    %v2052 = vpop.f32.mrb[0].mxu0
    %2053 = vmatprep.mubr.f32.mxu0 0.0
    %2054 = vmatmul.mubr.f32.gmra.mrb[0].mxu0 %v1522
    %v2055 = vpop.f32.mrb[0].mxu0
    %v2056 = vadd.f32 %v1392, %v2055
    %v2057 = vpop.f32.mrb[0].mxu0
    %2058 = vmatprep.mubr.f32.mxu0 0.0
    %2059 = vmatmul.mubr.f32.gmra.mrb[0].mxu0 %v1525
    %v2060 = vpop.f32.mrb[0].mxu0
    %v2061 = vadd.f32 %v1392, %v2060
    %v2062 = vpop.f32.mrb[0].mxu0
    %2063 = vmatprep.mubr.f32.mxu0 0.0
    %2064 = vmatmul.mubr.f32.gmra.mrb[0].mxu0 %v1528
    %v2065 = vpop.f32.mrb[0].mxu0
    %v2066 = vadd.f32 %v1392, %v2065
    %v2067 = vpop.f32.mrb[0].mxu0
    %2068 = vmatprep.mubr.f32.mxu0 0.0
    %2069 = vmatmul.mubr.f32.gmra.mrb[0].mxu0 %v1531
    %v2070 = vpop.f32.mrb[0].mxu0
    %v2071 = vadd.f32 %v1392, %v2070
    %v2072 = vpop.f32.mrb[0].mxu0
    %2073 = vmatprep.mubr.f32.mxu0 0.0
    %2074 = vmatmul.mubr.f32.gmra.mrb[0].mxu0 %v1534
    %v2075 = vpop.f32.mrb[0].mxu0
    %v2076 = vadd.f32 %v1392, %v2075
    %v2077 = vpop.f32.mrb[0].mxu0
    %2078 = vmatprep.mubr.f32.mxu0 0.0
    %2079 = vmatmul.mubr.f32.gmra.mrb[0].mxu0 %v1537
    %v2080 = vpop.f32.mrb[0].mxu0
    %v2081 = vadd.f32 %v1392, %v2080
    %v2082 = vpop.f32.mrb[0].mxu0
    %2083 = vmatprep.mubr.f32.mxu0 0.0
    %2084 = vmatmul.mubr.f32.gmra.mrb[0].mxu0 %v1540
    %v2085 = vpop.f32.mrb[0].mxu0
    %v2086 = vadd.f32 %v1392, %v2085
    %v2087 = vpop.f32.mrb[0].mxu0
    %2088 = vmatprep.mubr.f32.mxu0 0.0
    %2089 = vmatmul.mubr.f32.gmra.mrb[0].mxu0 %v1543
    %v2090 = vpop.f32.mrb[0].mxu0
    %v2091 = vadd.f32 %v1392, %v2090
    %v2092 = vpop.f32.mrb[0].mxu0
    %2093 = vmatprep.mubr.f32.mxu0 0.0
    %2094 = vmatmul.mubr.f32.gmra.mrb[0].mxu0 %v1546
    %v2095 = vpop.f32.mrb[0].mxu0
    %v2096 = vadd.f32 %v1392, %v2095
    %v2097 = vpop.f32.mrb[0].mxu0
    %2098 = vmatprep.mubr.f32.mxu0 0.0
    %2099 = vmatmul.mubr.f32.gmra.mrb[0].mxu0 %v1549
    %v2100 = vpop.f32.mrb[0].mxu0
    %v2101 = vadd.f32 %v1392, %v2100
    %v2102 = vpop.f32.mrb[0].mxu0
    %2103 = vmatprep.mubr.f32.mxu0 0.0
    %2104 = vmatmul.mubr.f32.gmra.mrb[0].mxu0 %v1552
    %v2105 = vpop.f32.mrb[0].mxu0
    %v2106 = vadd.f32 %v1392, %v2105
    %v2107 = vpop.f32.mrb[0].mxu0
    %2108 = vmatprep.mubr.f32.mxu0 0.0
    %2109 = vmatmul.mubr.f32.gmra.mrb[0].mxu0 %v1555
    %v2110 = vpop.f32.mrb[0].mxu0
    %v2111 = vadd.f32 %v1392, %v2110
    %v2112 = vpop.f32.mrb[0].mxu0
    %2113 = vmatprep.mubr.f32.mxu0 0.0
    %2114 = vmatmul.mubr.f32.gmra.mrb[0].mxu0 %v1558
    %v2115 = vpop.f32.mrb[0].mxu0
    %v2116 = vadd.f32 %v1392, %v2115
    %v2117 = vpop.f32.mrb[0].mxu0
    %2118 = vmatprep.mubr.f32.mxu0 0.0
    %2119 = vmatmul.mubr.f32.gmra.mrb[0].mxu0 %v1561
    %v2120 = vpop.f32.mrb[0].mxu0
    %v2121 = vadd.f32 %v1392, %v2120
    %v2122 = vpop.f32.mrb[0].mxu0
    %2123 = vmatprep.mubr.f32.mxu0 0.0
    %2124 = vmatmul.mubr.f32.gmra.mrb[0].mxu0 %v1564
    %v2125 = vpop.f32.mrb[0].mxu0
    %v2126 = vadd.f32 %v1392, %v2125
    %v2127 = vpop.f32.mrb[0].mxu0
    %2128 = vmatprep.mubr.f32.mxu0 0.0
    %2129 = vmatmul.mubr.f32.gmra.mrb[0].mxu0 %v1567
    %v2130 = vpop.f32.mrb[0].mxu0
    %v2131 = vadd.f32 %v1392, %v2130
    %v2132 = vpop.f32.mrb[0].mxu0
    %2133 = vmatprep.mubr.f32.mxu0 0.0
    %2134 = vmatmul.mubr.f32.gmra.mrb[0].mxu0 %v1570
    %v2135 = vpop.f32.mrb[0].mxu0
    %v2136 = vadd.f32 %v1392, %v2135
    %v2137 = vpop.f32.mrb[0].mxu0
    %2138 = vmatprep.mubr.f32.mxu0 0.0
    %2139 = vmatmul.mubr.f32.gmra.mrb[0].mxu0 %v1573
    %v2140 = vpop.f32.mrb[0].mxu0
    %v2141 = vadd.f32 %v1392, %v2140
    %v2142 = vpop.f32.mrb[0].mxu0
    %2143 = vmatprep.mubr.f32.mxu0 0.0
    %2144 = vmatmul.mubr.f32.gmra.mrb[0].mxu0 %v1576
    %v2145 = vpop.f32.mrb[0].mxu0
    %v2146 = vadd.f32 %v1392, %v2145
    %v2147 = vpop.f32.mrb[0].mxu0
    %2148 = vmatprep.mubr.f32.mxu0 0.0
    %2149 = vmatmul.mubr.f32.gmra.mrb[0].mxu0 %v1579
    %v2150 = vpop.f32.mrb[0].mxu0
    %v2151 = vadd.f32 %v1392, %v2150
    %v2152 = vpop.f32.mrb[0].mxu0
    %2153 = vmatprep.mubr.f32.mxu0 0.0
    %2154 = vmatmul.mubr.f32.gmra.mrb[0].mxu0 %v1582
    %v2155 = vpop.f32.mrb[0].mxu0
    %v2156 = vadd.f32 %v1392, %v2155
    %v2157 = vpop.f32.mrb[0].mxu0
    %2158 = vmatprep.mubr.f32.mxu0 0.0
    %2159 = vmatmul.mubr.f32.gmra.mrb[0].mxu0 %v1585
    %v2160 = vpop.f32.mrb[0].mxu0
    %v2161 = vadd.f32 %v1392, %v2160
    %v2162 = vpop.f32.mrb[0].mxu0
    %2163 = vmatprep.mubr.f32.mxu0 0.0
    %2164 = vmatmul.mubr.f32.gmra.mrb[0].mxu0 %v1588
    %v2165 = vpop.f32.mrb[0].mxu0
    %v2166 = vadd.f32 %v1392, %v2165
    %v2167 = vpop.f32.mrb[0].mxu0
    %2168 = vmatprep.mubr.f32.mxu0 0.0
    %2169 = vmatmul.mubr.f32.gmra.mrb[0].mxu0 %v1591
    %v2170 = vpop.f32.mrb[0].mxu0
    %v2171 = vadd.f32 %v1392, %v2170
    %v2172 = vpop.f32.mrb[0].mxu0
    %2173 = vmatprep.mubr.f32.mxu0 0.0
    %2174 = vmatmul.mubr.f32.gmra.mrb[0].mxu0 %v1594
    %v2175 = vpop.f32.mrb[0].mxu0
    %v2176 = vadd.f32 %v1392, %v2175
    %v2177 = vpop.f32.mrb[0].mxu0
    %2178 = vmatprep.mubr.f32.mxu0 0.0
    %2179 = vmatmul.mubr.f32.gmra.mrb[0].mxu0 %v1597
    %v2180 = vpop.f32.mrb[0].mxu0
    %v2181 = vadd.f32 %v1392, %v2180
    %v2182 = vpop.f32.mrb[0].mxu0
    %2183 = vmatprep.mubr.f32.mxu0 0.0
    %2184 = vmatmul.mubr.f32.gmra.mrb[0].mxu0 %v1600
    %v2185 = vpop.f32.mrb[0].mxu0
    %v2186 = vadd.f32 %v1392, %v2185
    %v2187 = vpop.f32.mrb[0].mxu0
    %2188 = vmatprep.mubr.f32.mxu0 0.0
    %2189 = vmatmul.mubr.f32.gmra.mrb[0].mxu0 %v1603
    %v2190 = vpop.f32.mrb[0].mxu0
    %v2191 = vadd.f32 %v1392, %v2190
    %v2192 = vpop.f32.mrb[0].mxu0
    %2193 = vmatprep.mubr.f32.mxu0 0.0
    %2194 = vmatmul.mubr.f32.gmra.mrb[0].mxu0 %v1606
    %v2195 = vpop.f32.mrb[0].mxu0
    %v2196 = vadd.f32 %v1392, %v2195
    %v2197 = vpop.f32.mrb[0].mxu0
    %2198 = vmatprep.mubr.f32.mxu0 0.0
    %2199 = vmatmul.mubr.f32.gmra.mrb[0].mxu0 %v1609
    %v2200 = vpop.f32.mrb[0].mxu0
    %v2201 = vadd.f32 %v1392, %v2200
    %v2202 = vpop.f32.mrb[0].mxu0
    %2203 = vmatprep.mubr.f32.mxu0 0.0
    %2204 = vmatmul.mubr.f32.gmra.mrb[0].mxu0 %v1612
    %v2205 = vpop.f32.mrb[0].mxu0
    %v2206 = vadd.f32 %v1392, %v2205
    %v2207 = vpop.f32.mrb[0].mxu0
    %2208 = vmatprep.mubr.f32.mxu0 0.0
    %2209 = vmatmul.mubr.f32.gmra.mrb[0].mxu0 %v1615
    %v2210 = vpop.f32.mrb[0].mxu0
    %v2211 = vadd.f32 %v1392, %v2210
    %v2212 = vpop.f32.mrb[0].mxu0
    %2213 = vmatprep.mubr.f32.mxu0 0.0
    %2214 = vmatmul.mubr.f32.gmra.mrb[0].mxu0 %v1618
    %v2215 = vpop.f32.mrb[0].mxu0
    %v2216 = vadd.f32 %v1392, %v2215
    %v2217 = vpop.f32.mrb[0].mxu0
    %2218 = vmatprep.mubr.f32.mxu0 0.0
    %2219 = vmatmul.mubr.f32.gmra.mrb[0].mxu0 %v1621
    %v2220 = vpop.f32.mrb[0].mxu0
    %v2221 = vadd.f32 %v1392, %v2220
    %v2222 = vpop.f32.mrb[0].mxu0
    %2223 = vmatprep.mubr.f32.mxu0 0.0
    %2224 = vmatmul.mubr.f32.gmra.mrb[0].mxu0 %v1624
    %v2225 = vpop.f32.mrb[0].mxu0
    %v2226 = vadd.f32 %v1392, %v2225
    %v2227 = vpop.f32.mrb[0].mxu0
    %2228 = vmatprep.mubr.f32.mxu0 0.0
    %2229 = vmatmul.mubr.f32.gmra.mrb[0].mxu0 %v1627
    %v2230 = vpop.f32.mrb[0].mxu0
    %v2231 = vadd.f32 %v1392, %v2230
    %v2232 = vpop.f32.mrb[0].mxu0
    %2233 = vmatprep.mubr.f32.mxu0 0.0
    %2234 = vmatmul.mubr.f32.gmra.mrb[0].mxu0 %v1630
    %v2235 = vpop.f32.mrb[0].mxu0
    %v2236 = vadd.f32 %v1392, %v2235
    %v2237 = vpop.f32.mrb[0].mxu0
    %2238 = vmatprep.mubr.f32.mxu0 0.0
    %2239 = vmatmul.mubr.f32.gmra.mrb[0].mxu0 %v1633
    %v2240 = vpop.f32.mrb[0].mxu0
    %v2241 = vadd.f32 %v1392, %v2240
    %v2242 = vpop.f32.mrb[0].mxu0
    %2243 = vmatprep.mubr.f32.mxu0 0.0
    %2244 = vmatmul.mubr.f32.gmra.mrb[0].mxu0 %v1636
    %v2245 = vpop.f32.mrb[0].mxu0
    %v2246 = vadd.f32 %v1392, %v2245
    %v2247 = vpop.f32.mrb[0].mxu0
    %2248 = vmatprep.mubr.f32.mxu0 0.0
    %2249 = vmatmul.mubr.f32.gmra.mrb[0].mxu0 %v1639
    %v2250 = vpop.f32.mrb[0].mxu0
    %v2251 = vadd.f32 %v1392, %v2250
    %v2252 = vpop.f32.mrb[0].mxu0
    %2253 = vmatprep.mubr.f32.mxu0 0.0
    %2254 = vmatmul.mubr.f32.gmra.mrb[0].mxu0 %v1642
    %v2255 = vpop.f32.mrb[0].mxu0
    %v2256 = vadd.f32 %v1392, %v2255
    %v2257 = vpop.f32.mrb[0].mxu0
    %2258 = vmatprep.mubr.f32.mxu0 0.0
    %2259 = vmatmul.mubr.f32.gmra.mrb[0].mxu0 %v1645
    %v2260 = vpop.f32.mrb[0].mxu0
    %v2261 = vadd.f32 %v1392, %v2260
    %v2262 = vpop.f32.mrb[0].mxu0
    %2263 = vmatprep.mubr.f32.mxu0 0.0
    %2264 = vmatmul.mubr.f32.gmra.mrb[0].mxu0 %v1648
    %v2265 = vpop.f32.mrb[0].mxu0
    %v2266 = vadd.f32 %v1392, %v2265
    %v2267 = vpop.f32.mrb[0].mxu0
    %2268 = vmatprep.mubr.f32.mxu0 0.0
    %2269 = vmatmul.mubr.f32.gmra.mrb[0].mxu0 %v1651
    %v2270 = vpop.f32.mrb[0].mxu0
    %v2271 = vadd.f32 %v1392, %v2270
    %v2272 = vpop.f32.mrb[0].mxu0
    %2273 = vmatprep.mubr.f32.mxu0 0.0
    %2274 = vmatmul.mubr.f32.gmra.mrb[0].mxu0 %v1654
    %v2275 = vpop.f32.mrb[0].mxu0
    %v2276 = vadd.f32 %v1392, %v2275
    %v2277 = vpop.f32.mrb[0].mxu0
    %2278 = vmatprep.mubr.f32.mxu0 0.0
    %2279 = vmatmul.mubr.f32.gmra.mrb[0].mxu0 %v1657
    %v2280 = vpop.f32.mrb[0].mxu0
    %v2281 = vadd.f32 %v1392, %v2280
    %v2282 = vpop.f32.mrb[0].mxu0
    %2283 = vmatprep.mubr.f32.mxu0 0.0
    %2284 = vmatmul.mubr.f32.gmra.mrb[0].mxu0 %v1660
    %v2285 = vpop.f32.mrb[0].mxu0
    %v2286 = vadd.f32 %v1392, %v2285
    %v2287 = vpop.f32.mrb[0].mxu0
    %2288 = vmatprep.mubr.f32.mxu0 0.0
    %2289 = vmatmul.mubr.f32.gmra.mrb[0].mxu0 %v1663
    %v2290 = vpop.f32.mrb[0].mxu0
    %v2291 = vadd.f32 %v1392, %v2290
    %v2292 = vpop.f32.mrb[0].mxu0
    %2293 = vmatprep.mubr.f32.mxu0 0.0
    %2294 = vmatmul.mubr.f32.gmra.mrb[0].mxu0 %v1666
    %v2295 = vpop.f32.mrb[0].mxu0
    %v2296 = vadd.f32 %v1392, %v2295
    %v2297 = vpop.f32.mrb[0].mxu0
    %2298 = vmatprep.mubr.f32.mxu0 0.0
    %2299 = vmatmul.mubr.f32.gmra.mrb[0].mxu0 %v1669
    %v2300 = vpop.f32.mrb[0].mxu0
    %v2301 = vadd.f32 %v1392, %v2300
    %v2302 = vpop.f32.mrb[0].mxu0
    %2303 = vmatprep.mubr.f32.mxu0 0.0
    %2304 = vmatmul.mubr.f32.gmra.mrb[0].mxu0 %v1672
    %v2305 = vpop.f32.mrb[0].mxu0
    %v2306 = vadd.f32 %v1392, %v2305
    %v2307 = vpop.f32.mrb[0].mxu0
    %2308 = vmatprep.mubr.f32.mxu0 0.0
    %2309 = vmatmul.mubr.f32.gmra.mrb[0].mxu0 %v1675
    %v2310 = vpop.f32.mrb[0].mxu0
    %v2311 = vadd.f32 %v1392, %v2310
    %v2312 = vpop.f32.mrb[0].mxu0
    %2313 = vmatprep.mubr.f32.mxu0 0.0
    %2314 = vmatmul.mubr.f32.gmra.mrb[0].mxu0 %v1678
    %v2315 = vpop.f32.mrb[0].mxu0
    %v2316 = vadd.f32 %v1392, %v2315
    %v2317 = vpop.f32.mrb[0].mxu0
    %2318 = vmatprep.mubr.f32.mxu0 0.0
    %2319 = vmatmul.mubr.f32.gmra.mrb[0].mxu0 %v1681
    %v2320 = vpop.f32.mrb[0].mxu0
    %v2321 = vadd.f32 %v1392, %v2320
    %v2322 = vpop.f32.mrb[0].mxu0
    %2323 = vmatprep.mubr.f32.mxu0 0.0
    %2324 = vmatmul.mubr.f32.gmra.mrb[0].mxu0 %v1684
    %v2325 = vpop.f32.mrb[0].mxu0
    %v2326 = vadd.f32 %v1392, %v2325
    %v2327 = vpop.f32.mrb[0].mxu0
    %2328 = vmatprep.mubr.f32.mxu0 0.0
    %2329 = vmatmul.mubr.f32.gmra.mrb[0].mxu0 %v1687
    %v2330 = vpop.f32.mrb[0].mxu0
    %v2331 = vadd.f32 %v1392, %v2330
    %v2332 = vpop.f32.mrb[0].mxu0
    %2333 = vmatprep.mubr.f32.mxu0 0.0
    %2334 = vmatmul.mubr.f32.gmra.mrb[0].mxu0 %v1690
    %v2335 = vpop.f32.mrb[0].mxu0
    %v2336 = vadd.f32 %v1392, %v2335
    %v2337 = vpop.f32.mrb[0].mxu0
    %2338 = vmatprep.mubr.f32.mxu0 0.0
    %2339 = vmatmul.mubr.f32.gmra.mrb[0].mxu0 %v1693
    %v2340 = vpop.f32.mrb[0].mxu0
    %v2341 = vadd.f32 %v1392, %v2340
    %v2342 = vpop.f32.mrb[0].mxu0
    %2343 = vmatprep.mubr.f32.mxu0 0.0
    %2344 = vmatmul.mubr.f32.gmra.mrb[0].mxu0 %v1696
    %v2345 = vpop.f32.mrb[0].mxu0
    %v2346 = vadd.f32 %v1392, %v2345
    %v2347 = vpop.f32.mrb[0].mxu0
    %2348 = vmatprep.mubr.f32.mxu0 0.0
    %2349 = vmatmul.mubr.f32.gmra.mrb[0].mxu0 %v1699
    %v2350 = vpop.f32.mrb[0].mxu0
    %v2351 = vadd.f32 %v1392, %v2350
    %v2352 = vpop.f32.mrb[0].mxu0
    %2353 = vmatprep.mubr.f32.mxu0 0.0
    %2354 = vmatmul.mubr.f32.gmra.mrb[0].mxu0 %v1702
    %v2355 = vpop.f32.mrb[0].mxu0
    %v2356 = vadd.f32 %v1392, %v2355
    %v2357 = vpop.f32.mrb[0].mxu0
    %2358 = vmatprep.mubr.f32.mxu0 0.0
    %2359 = vmatmul.mubr.f32.gmra.mrb[0].mxu0 %v1705
    %v2360 = vpop.f32.mrb[0].mxu0
    %v2361 = vadd.f32 %v1392, %v2360
    %v2362 = vpop.f32.mrb[0].mxu0
    %2363 = vmatprep.mubr.f32.mxu0 0.0
    %2364 = vmatmul.mubr.f32.gmra.mrb[0].mxu0 %v1708
    %v2365 = vpop.f32.mrb[0].mxu0
    %v2366 = vadd.f32 %v1392, %v2365
    %v2367 = vpop.f32.mrb[0].mxu0
    %2368 = vmatprep.mubr.f32.mxu0 0.0
    %2369 = vmatmul.mubr.f32.gmra.mrb[0].mxu0 %v1711
    %v2370 = vpop.f32.mrb[0].mxu0
    %v2371 = vadd.f32 %v1392, %v2370
    %v2372 = vpop.f32.mrb[0].mxu0
    %2373 = vmatprep.mubr.f32.mxu0 0.0
    %2374 = vmatmul.mubr.f32.gmra.mrb[0].mxu0 %v1714
    %v2375 = vpop.f32.mrb[0].mxu0
    %v2376 = vadd.f32 %v1392, %v2375
    %v2377 = vpop.f32.mrb[0].mxu0
    %2378 = vmatprep.mubr.f32.mxu0 0.0
    %2379 = vmatmul.mubr.f32.gmra.mrb[0].mxu0 %v1717
    %v2380 = vpop.f32.mrb[0].mxu0
    %v2381 = vadd.f32 %v1392, %v2380
    %v2382 = vpop.f32.mrb[0].mxu0
    %2383 = vmatprep.mubr.f32.mxu0 0.0
    %2384 = vmatmul.mubr.f32.gmra.mrb[0].mxu0 %v1720
    %v2385 = vpop.f32.mrb[0].mxu0
    %v2386 = vadd.f32 %v1392, %v2385
    %v2387 = vpop.f32.mrb[0].mxu0
    %2388 = vmatprep.mubr.f32.mxu0 0.0
    %2389 = vmatmul.mubr.f32.gmra.mrb[0].mxu0 %v1723
    %v2390 = vpop.f32.mrb[0].mxu0
    %v2391 = vadd.f32 %v1392, %v2390
    %v2392 = vpop.f32.mrb[0].mxu0
    %2393 = vmatprep.mubr.f32.mxu0 0.0
    %2394 = vmatmul.mubr.f32.gmra.mrb[0].mxu0 %v1726
    %v2395 = vpop.f32.mrb[0].mxu0
    %v2396 = vadd.f32 %v1392, %v2395
    %v2397 = vpop.f32.mrb[0].mxu0
    %2398 = vmatprep.mubr.f32.mxu0 0.0
    %2399 = vmatmul.mubr.f32.gmra.mrb[0].mxu0 %v1729
    %v2400 = vpop.f32.mrb[0].mxu0
    %v2401 = vadd.f32 %v1392, %v2400
    %v2402 = vpop.f32.mrb[0].mxu0
    %2403 = vmatprep.mubr.f32.mxu0 0.0
    %2404 = vmatmul.mubr.f32.gmra.mrb[0].mxu0 %v1732
    %v2405 = vpop.f32.mrb[0].mxu0
    %v2406 = vadd.f32 %v1392, %v2405
    %v2407 = vpop.f32.mrb[0].mxu0
    %2408 = vmatprep.mubr.f32.mxu0 0.0
    %2409 = vmatmul.mubr.f32.gmra.mrb[0].mxu0 %v1735
    %v2410 = vpop.f32.mrb[0].mxu0
    %v2411 = vadd.f32 %v1392, %v2410
    %v2412 = vpop.f32.mrb[0].mxu0
    %2413 = vmatprep.mubr.f32.mxu0 0.0
    %2414 = vmatmul.mubr.f32.gmra.mrb[0].mxu0 %v1738
    %v2415 = vpop.f32.mrb[0].mxu0
    %v2416 = vadd.f32 %v1392, %v2415
    %v2417 = vpop.f32.mrb[0].mxu0
    %2418 = vmatprep.mubr.f32.mxu0 0.0
    %2419 = vmatmul.mubr.f32.gmra.mrb[0].mxu0 %v1741
    %v2420 = vpop.f32.mrb[0].mxu0
    %v2421 = vadd.f32 %v1392, %v2420
    %v2422 = vpop.f32.mrb[0].mxu0
    %2423 = vmatprep.mubr.f32.mxu0 0.0
    %2424 = vmatmul.mubr.f32.gmra.mrb[0].mxu0 %v1744
    %v2425 = vpop.f32.mrb[0].mxu0
    %v2426 = vadd.f32 %v1392, %v2425
    %v2427 = vpop.f32.mrb[0].mxu0
    %2428 = vmatprep.mubr.f32.mxu0 0.0
    %2429 = vmatmul.mubr.f32.gmra.mrb[0].mxu0 %v1747
    %v2430 = vpop.f32.mrb[0].mxu0
    %v2431 = vadd.f32 %v1392, %v2430
    %v2432 = vpop.f32.mrb[0].mxu0
    %2433 = vmatprep.mubr.f32.mxu0 0.0
    %2434 = vmatmul.mubr.f32.gmra.mrb[0].mxu0 %v1750
    %v2435 = vpop.f32.mrb[0].mxu0
    %v2436 = vadd.f32 %v1392, %v2435
    %v2437 = vpop.f32.mrb[0].mxu0
    %2438 = vmatprep.mubr.f32.mxu0 0.0
    %2439 = vmatmul.mubr.f32.gmra.mrb[0].mxu0 %v1753
    %v2440 = vpop.f32.mrb[0].mxu0
    %v2441 = vadd.f32 %v1392, %v2440
    %v2442 = vpop.f32.mrb[0].mxu0
    %2443 = vmatprep.mubr.f32.mxu0 0.0
    %2444 = vmatmul.mubr.f32.gmra.mrb[0].mxu0 %v1756
    %v2445 = vpop.f32.mrb[0].mxu0
    %v2446 = vadd.f32 %v1392, %v2445
    %v2447 = vpop.f32.mrb[0].mxu0
    %2448 = vmatprep.mubr.f32.mxu0 0.0
    %2449 = vmatmul.mubr.f32.gmra.mrb[0].mxu0 %v1759
    %v2450 = vpop.f32.mrb[0].mxu0
    %v2451 = vadd.f32 %v1392, %v2450
    %v2452 = vpop.f32.mrb[0].mxu0
    %2453 = vmatprep.mubr.f32.mxu0 0.0
    %2454 = vmatmul.mubr.f32.gmra.mrb[0].mxu0 %v1762
    %v2455 = vpop.f32.mrb[0].mxu0
    %v2456 = vadd.f32 %v1392, %v2455
    %v2457 = vpop.f32.mrb[0].mxu0
    %2458 = vmatprep.mubr.f32.mxu0 0.0
    %2459 = vmatmul.mubr.f32.gmra.mrb[0].mxu0 %v1765
    %v2460 = vpop.f32.mrb[0].mxu0
    %v2461 = vadd.f32 %v1392, %v2460
    %v2462 = vpop.f32.mrb[0].mxu0
    %2463 = vmatprep.mubr.f32.mxu0 0.0
    %2464 = vmatmul.mubr.f32.gmra.mrb[0].mxu0 %v1768
    %v2465 = vpop.f32.mrb[0].mxu0
    %v2466 = vadd.f32 %v1392, %v2465
    %v2467 = vpop.f32.mrb[0].mxu0
    %2468 = vmatprep.mubr.f32.mxu0 0.0
    %2469 = vmatmul.mubr.f32.gmra.mrb[0].mxu0 %v1771
    %v2470 = vpop.f32.mrb[0].mxu0
    %v2471 = vadd.f32 %v1392, %v2470
    %v2472 = vpop.f32.mrb[0].mxu0
    %2473 = vmatprep.mubr.f32.mxu0 0.0
    %2474 = vmatmul.mubr.f32.gmra.mrb[0].mxu0 %v1774
    %v2475 = vpop.f32.mrb[0].mxu0
    %v2476 = vadd.f32 %v1392, %v2475
    %v2477 = vpop.f32.mrb[0].mxu0
    %2478 = vmatprep.mubr.f32.mxu0 0.0
    %2479 = vmatmul.mubr.f32.gmra.mrb[0].mxu0 %v1777
    %v2480 = vpop.f32.mrb[0].mxu0
    %v2481 = vadd.f32 %v1392, %v2480
    %v2482 = vpop.f32.mrb[0].mxu0
    %2483 = vdwg.mxu0
    %v2484 = vtanh.pop %v1846
    %v2485 = vtanh.pop %v1851
    %v2486 = vtanh.pop %v1856
    %v2487 = vtanh.pop %v1861
    %v2488 = vtanh.pop %v1866
    %v2489 = vtanh.pop %v1871
    %v2490 = vtanh.pop %v1876
    %v2491 = vtanh.pop %v1881
    %v2492 = vtanh.pop %v1886
    %v2493 = vtanh.pop %v1891
    %v2494 = vtanh.pop %v1896
    %v2495 = vtanh.pop %v1901
    %v2496 = vtanh.pop %v1906
    %v2497 = vtanh.pop %v1911
    %v2498 = vtanh.pop %v1916
    %v2499 = vtanh.pop %v1921
    %v2500 = vtanh.pop %v1926
    %v2501 = vtanh.pop %v1931
    %v2502 = vtanh.pop %v1936
    %v2503 = vtanh.pop %v1941
    %v2504 = vtanh.pop %v1946
    %v2505 = vtanh.pop %v1951
    %v2506 = vtanh.pop %v1956
    %v2507 = vtanh.pop %v1961
    %v2508 = vtanh.pop %v1966
    %v2509 = vtanh.pop %v1971
    %v2510 = vtanh.pop %v1976
    %v2511 = vtanh.pop %v1981
    %v2512 = vtanh.pop %v1986
    %v2513 = vtanh.pop %v1991
    %v2514 = vtanh.pop %v1996
    %v2515 = vtanh.pop %v2001
    %v2516 = vtanh.pop %v2006
    %v2517 = vtanh.pop %v2011
    %v2518 = vtanh.pop %v2016
    %v2519 = vtanh.pop %v2021
    %v2520 = vtanh.pop %v2026
    %v2521 = vtanh.pop %v2031
    %v2522 = vtanh.pop %v2036
    %v2523 = vtanh.pop %v2041
    %v2524 = vtanh.pop %v2046
    %v2525 = vtanh.pop %v2051
    %v2526 = vtanh.pop %v2056
    %v2527 = vtanh.pop %v2061
    %v2528 = vtanh.pop %v2066
    %v2529 = vtanh.pop %v2071
    %v2530 = vtanh.pop %v2076
    %v2531 = vtanh.pop %v2081
    %v2532 = vtanh.pop %v2086
    %v2533 = vtanh.pop %v2091
    %v2534 = vtanh.pop %v2096
    %v2535 = vtanh.pop %v2101
    %v2536 = vtanh.pop %v2106
    %v2537 = vtanh.pop %v2111
    %v2538 = vtanh.pop %v2116
    %v2539 = vtanh.pop %v2121
    %v2540 = vtanh.pop %v2126
    %v2541 = vtanh.pop %v2131
    %v2542 = vtanh.pop %v2136
    %v2543 = vtanh.pop %v2141
    %v2544 = vtanh.pop %v2146
    %v2545 = vtanh.pop %v2151
    %v2546 = vtanh.pop %v2156
    %v2547 = vtanh.pop %v2161
    %v2548 = vtanh.pop %v2166
    %v2549 = vtanh.pop %v2171
    %v2550 = vtanh.pop %v2176
    %v2551 = vtanh.pop %v2181
    %v2552 = vtanh.pop %v2186
    %v2553 = vtanh.pop %v2191
    %v2554 = vtanh.pop %v2196
    %v2555 = vtanh.pop %v2201
    %v2556 = vtanh.pop %v2206
    %v2557 = vtanh.pop %v2211
    %v2558 = vtanh.pop %v2216
    %v2559 = vtanh.pop %v2221
    %v2560 = vtanh.pop %v2226
    %v2561 = vtanh.pop %v2231
    %v2562 = vtanh.pop %v2236
    %v2563 = vtanh.pop %v2241
    %v2564 = vtanh.pop %v2246
    %v2565 = vtanh.pop %v2251
    %v2566 = vtanh.pop %v2256
    %v2567 = vtanh.pop %v2261
    %v2568 = vtanh.pop %v2266
    %v2569 = vtanh.pop %v2271
    %v2570 = vtanh.pop %v2276
    %v2571 = vtanh.pop %v2281
    %v2572 = vtanh.pop %v2286
    %v2573 = vtanh.pop %v2291
    %v2574 = vtanh.pop %v2296
    %v2575 = vtanh.pop %v2301
    %v2576 = vtanh.pop %v2306
    %v2577 = vtanh.pop %v2311
    %v2578 = vtanh.pop %v2316
    %v2579 = vtanh.pop %v2321
    %v2580 = vtanh.pop %v2326
    %v2581 = vtanh.pop %v2331
    %v2582 = vtanh.pop %v2336
    %v2583 = vtanh.pop %v2341
    %v2584 = vtanh.pop %v2346
    %v2585 = vtanh.pop %v2351
    %v2586 = vtanh.pop %v2356
    %v2587 = vtanh.pop %v2361
    %v2588 = vtanh.pop %v2366
    %v2589 = vtanh.pop %v2371
    %v2590 = vtanh.pop %v2376
    %v2591 = vtanh.pop %v2381
    %v2592 = vtanh.pop %v2386
    %v2593 = vtanh.pop %v2391
    %v2594 = vtanh.pop %v2396
    %v2595 = vtanh.pop %v2401
    %v2596 = vtanh.pop %v2406
    %v2597 = vtanh.pop %v2411
    %v2598 = vtanh.pop %v2416
    %v2599 = vtanh.pop %v2421
    %v2600 = vtanh.pop %v2426
    %v2601 = vtanh.pop %v2431
    %v2602 = vtanh.pop %v2436
    %v2603 = vtanh.pop %v2441
    %v2604 = vtanh.pop %v2446
    %v2605 = vtanh.pop %v2451
    %v2606 = vtanh.pop %v2456
    %v2607 = vtanh.pop %v2461
    %v2608 = vtanh.pop %v2466
    %v2609 = vtanh.pop %v2471
    %v2610 = vtanh.pop %v2476
    %v2611 = vtanh.pop %v2481
    %v2612 = vld [vmem:[%s5] sm:$0x1]
    %v2614 = vlaneseq
    %v2615 = vshrl.u32 %v2614, 7
    %v2616 = vsub.s32 0, %v2615
    %v2617 = vrot.slane %v2612, %v2616
    %v2619 = vmul.f32 %v2484, %v2617
    %v2620 = vmul.f32 %v2485, %v2617
    %v2621 = vmul.f32 %v2486, %v2617
    %v2622 = vmul.f32 %v2487, %v2617
    %v2623 = vmul.f32 %v2488, %v2617
    %v2624 = vmul.f32 %v2489, %v2617
    %v2625 = vmul.f32 %v2490, %v2617
    %v2626 = vmul.f32 %v2491, %v2617
    %v2627 = vmul.f32 %v2492, %v2617
    %v2628 = vmul.f32 %v2493, %v2617
    %v2629 = vmul.f32 %v2494, %v2617
    %v2630 = vmul.f32 %v2495, %v2617
    %v2631 = vmul.f32 %v2496, %v2617
    %v2632 = vmul.f32 %v2497, %v2617
    %v2633 = vmul.f32 %v2498, %v2617
    %v2634 = vmul.f32 %v2499, %v2617
    %v2635 = vmul.f32 %v2500, %v2617
    %v2636 = vmul.f32 %v2501, %v2617
    %v2637 = vmul.f32 %v2502, %v2617
    %v2638 = vmul.f32 %v2503, %v2617
    %v2639 = vmul.f32 %v2504, %v2617
    %v2640 = vmul.f32 %v2505, %v2617
    %v2641 = vmul.f32 %v2506, %v2617
    %v2642 = vmul.f32 %v2507, %v2617
    %v2643 = vmul.f32 %v2508, %v2617
    %v2644 = vmul.f32 %v2509, %v2617
    %v2645 = vmul.f32 %v2510, %v2617
    %v2646 = vmul.f32 %v2511, %v2617
    %v2647 = vmul.f32 %v2512, %v2617
    %v2648 = vmul.f32 %v2513, %v2617
    %v2649 = vmul.f32 %v2514, %v2617
    %v2650 = vmul.f32 %v2515, %v2617
    %v2651 = vmul.f32 %v2516, %v2617
    %v2652 = vmul.f32 %v2517, %v2617
    %v2653 = vmul.f32 %v2518, %v2617
    %v2654 = vmul.f32 %v2519, %v2617
    %v2655 = vmul.f32 %v2520, %v2617
    %v2656 = vmul.f32 %v2521, %v2617
    %v2657 = vmul.f32 %v2522, %v2617
    %v2658 = vmul.f32 %v2523, %v2617
    %v2659 = vmul.f32 %v2524, %v2617
    %v2660 = vmul.f32 %v2525, %v2617
    %v2661 = vmul.f32 %v2526, %v2617
    %v2662 = vmul.f32 %v2527, %v2617
    %v2663 = vmul.f32 %v2528, %v2617
    %v2664 = vmul.f32 %v2529, %v2617
    %v2665 = vmul.f32 %v2530, %v2617
    %v2666 = vmul.f32 %v2531, %v2617
    %v2667 = vmul.f32 %v2532, %v2617
    %v2668 = vmul.f32 %v2533, %v2617
    %v2669 = vmul.f32 %v2534, %v2617
    %v2670 = vmul.f32 %v2535, %v2617
    %v2671 = vmul.f32 %v2536, %v2617
    %v2672 = vmul.f32 %v2537, %v2617
    %v2673 = vmul.f32 %v2538, %v2617
    %v2674 = vmul.f32 %v2539, %v2617
    %v2675 = vmul.f32 %v2540, %v2617
    %v2676 = vmul.f32 %v2541, %v2617
    %v2677 = vmul.f32 %v2542, %v2617
    %v2678 = vmul.f32 %v2543, %v2617
    %v2679 = vmul.f32 %v2544, %v2617
    %v2680 = vmul.f32 %v2545, %v2617
    %v2681 = vmul.f32 %v2546, %v2617
    %v2682 = vmul.f32 %v2547, %v2617
    %v2683 = vmul.f32 %v2548, %v2617
    %v2684 = vmul.f32 %v2549, %v2617
    %v2685 = vmul.f32 %v2550, %v2617
    %v2686 = vmul.f32 %v2551, %v2617
    %v2687 = vmul.f32 %v2552, %v2617
    %v2688 = vmul.f32 %v2553, %v2617
    %v2689 = vmul.f32 %v2554, %v2617
    %v2690 = vmul.f32 %v2555, %v2617
    %v2691 = vmul.f32 %v2556, %v2617
    %v2692 = vmul.f32 %v2557, %v2617
    %v2693 = vmul.f32 %v2558, %v2617
    %v2694 = vmul.f32 %v2559, %v2617
    %v2695 = vmul.f32 %v2560, %v2617
    %v2696 = vmul.f32 %v2561, %v2617
    %v2697 = vmul.f32 %v2562, %v2617
    %v2698 = vmul.f32 %v2563, %v2617
    %v2699 = vmul.f32 %v2564, %v2617
    %v2700 = vmul.f32 %v2565, %v2617
    %v2701 = vmul.f32 %v2566, %v2617
    %v2702 = vmul.f32 %v2567, %v2617
    %v2703 = vmul.f32 %v2568, %v2617
    %v2704 = vmul.f32 %v2569, %v2617
    %v2705 = vmul.f32 %v2570, %v2617
    %v2706 = vmul.f32 %v2571, %v2617
    %v2707 = vmul.f32 %v2572, %v2617
    %v2708 = vmul.f32 %v2573, %v2617
    %v2709 = vmul.f32 %v2574, %v2617
    %v2710 = vmul.f32 %v2575, %v2617
    %v2711 = vmul.f32 %v2576, %v2617
    %v2712 = vmul.f32 %v2577, %v2617
    %v2713 = vmul.f32 %v2578, %v2617
    %v2714 = vmul.f32 %v2579, %v2617
    %v2715 = vmul.f32 %v2580, %v2617
    %v2716 = vmul.f32 %v2581, %v2617
    %v2717 = vmul.f32 %v2582, %v2617
    %v2718 = vmul.f32 %v2583, %v2617
    %v2719 = vmul.f32 %v2584, %v2617
    %v2720 = vmul.f32 %v2585, %v2617
    %v2721 = vmul.f32 %v2586, %v2617
    %v2722 = vmul.f32 %v2587, %v2617
    %v2723 = vmul.f32 %v2588, %v2617
    %v2724 = vmul.f32 %v2589, %v2617
    %v2725 = vmul.f32 %v2590, %v2617
    %v2726 = vmul.f32 %v2591, %v2617
    %v2727 = vmul.f32 %v2592, %v2617
    %v2728 = vmul.f32 %v2593, %v2617
    %v2729 = vmul.f32 %v2594, %v2617
    %v2730 = vmul.f32 %v2595, %v2617
    %v2731 = vmul.f32 %v2596, %v2617
    %v2732 = vmul.f32 %v2597, %v2617
    %v2733 = vmul.f32 %v2598, %v2617
    %v2734 = vmul.f32 %v2599, %v2617
    %v2735 = vmul.f32 %v2600, %v2617
    %v2736 = vmul.f32 %v2601, %v2617
    %v2737 = vmul.f32 %v2602, %v2617
    %v2738 = vmul.f32 %v2603, %v2617
    %v2739 = vmul.f32 %v2604, %v2617
    %v2740 = vmul.f32 %v2605, %v2617
    %v2741 = vmul.f32 %v2606, %v2617
    %v2742 = vmul.f32 %v2607, %v2617
    %v2743 = vmul.f32 %v2608, %v2617
    %v2744 = vmul.f32 %v2609, %v2617
    %v2745 = vmul.f32 %v2610, %v2617
    %v2746 = vmul.f32 %v2611, %v2617
    %v2747 = vsel %vm1394, %v2619, 0.0
    %2748 = vadd.xlane.f32.xlu0 %v2747
    %v2749 = vpop.xlane.xlu0 %2748
    %v2750 = vsel %vm1394, %v2620, 0.0
    %2751 = vadd.xlane.f32.xlu0 %v2750
    %v2752 = vpop.xlane.xlu0 %2751
    %v2753 = vsel %vm1394, %v2621, 0.0
    %2754 = vadd.xlane.f32.xlu0 %v2753
    %v2755 = vpop.xlane.xlu0 %2754
    %v2756 = vsel %vm1394, %v2622, 0.0
    %2757 = vadd.xlane.f32.xlu0 %v2756
    %v2758 = vpop.xlane.xlu0 %2757
    %v2759 = vsel %vm1394, %v2623, 0.0
    %2760 = vadd.xlane.f32.xlu0 %v2759
    %v2761 = vpop.xlane.xlu0 %2760
    %v2762 = vsel %vm1394, %v2624, 0.0
    %2763 = vadd.xlane.f32.xlu0 %v2762
    %v2764 = vpop.xlane.xlu0 %2763
    %v2765 = vsel %vm1394, %v2625, 0.0
    %2766 = vadd.xlane.f32.xlu0 %v2765
    %v2767 = vpop.xlane.xlu0 %2766
    %v2768 = vsel %vm1394, %v2626, 0.0
    %2769 = vadd.xlane.f32.xlu0 %v2768
    %v2770 = vpop.xlane.xlu0 %2769
    %v2771 = vsel %vm1394, %v2627, 0.0
    %2772 = vadd.xlane.f32.xlu0 %v2771
    %v2773 = vpop.xlane.xlu0 %2772
    %v2774 = vsel %vm1394, %v2628, 0.0
    %2775 = vadd.xlane.f32.xlu0 %v2774
    %v2776 = vpop.xlane.xlu0 %2775
    %v2777 = vsel %vm1394, %v2629, 0.0
    %2778 = vadd.xlane.f32.xlu0 %v2777
    %v2779 = vpop.xlane.xlu0 %2778
    %v2780 = vsel %vm1394, %v2630, 0.0
    %2781 = vadd.xlane.f32.xlu0 %v2780
    %v2782 = vpop.xlane.xlu0 %2781
    %v2783 = vsel %vm1394, %v2631, 0.0
    %2784 = vadd.xlane.f32.xlu0 %v2783
    %v2785 = vpop.xlane.xlu0 %2784
    %v2786 = vsel %vm1394, %v2632, 0.0
    %2787 = vadd.xlane.f32.xlu0 %v2786
    %v2788 = vpop.xlane.xlu0 %2787
    %v2789 = vsel %vm1394, %v2633, 0.0
    %2790 = vadd.xlane.f32.xlu0 %v2789
    %v2791 = vpop.xlane.xlu0 %2790
    %v2792 = vsel %vm1394, %v2634, 0.0
    %2793 = vadd.xlane.f32.xlu0 %v2792
    %v2794 = vpop.xlane.xlu0 %2793
    %v2795 = vsel %vm1394, %v2635, 0.0
    %2796 = vadd.xlane.f32.xlu0 %v2795
    %v2797 = vpop.xlane.xlu0 %2796
    %v2798 = vsel %vm1394, %v2636, 0.0
    %2799 = vadd.xlane.f32.xlu0 %v2798
    %v2800 = vpop.xlane.xlu0 %2799
    %v2801 = vsel %vm1394, %v2637, 0.0
    %2802 = vadd.xlane.f32.xlu0 %v2801
    %v2803 = vpop.xlane.xlu0 %2802
    %v2804 = vsel %vm1394, %v2638, 0.0
    %2805 = vadd.xlane.f32.xlu0 %v2804
    %v2806 = vpop.xlane.xlu0 %2805
    %v2807 = vsel %vm1394, %v2639, 0.0
    %2808 = vadd.xlane.f32.xlu0 %v2807
    %v2809 = vpop.xlane.xlu0 %2808
    %v2810 = vsel %vm1394, %v2640, 0.0
    %2811 = vadd.xlane.f32.xlu0 %v2810
    %v2812 = vpop.xlane.xlu0 %2811
    %v2813 = vsel %vm1394, %v2641, 0.0
    %2814 = vadd.xlane.f32.xlu0 %v2813
    %v2815 = vpop.xlane.xlu0 %2814
    %v2816 = vsel %vm1394, %v2642, 0.0
    %2817 = vadd.xlane.f32.xlu0 %v2816
    %v2818 = vpop.xlane.xlu0 %2817
    %v2819 = vsel %vm1394, %v2643, 0.0
    %2820 = vadd.xlane.f32.xlu0 %v2819
    %v2821 = vpop.xlane.xlu0 %2820
    %v2822 = vsel %vm1394, %v2644, 0.0
    %2823 = vadd.xlane.f32.xlu0 %v2822
    %v2824 = vpop.xlane.xlu0 %2823
    %v2825 = vsel %vm1394, %v2645, 0.0
    %2826 = vadd.xlane.f32.xlu0 %v2825
    %v2827 = vpop.xlane.xlu0 %2826
    %v2828 = vsel %vm1394, %v2646, 0.0
    %2829 = vadd.xlane.f32.xlu0 %v2828
    %v2830 = vpop.xlane.xlu0 %2829
    %v2831 = vsel %vm1394, %v2647, 0.0
    %2832 = vadd.xlane.f32.xlu0 %v2831
    %v2833 = vpop.xlane.xlu0 %2832
    %v2834 = vsel %vm1394, %v2648, 0.0
    %2835 = vadd.xlane.f32.xlu0 %v2834
    %v2836 = vpop.xlane.xlu0 %2835
    %v2837 = vsel %vm1394, %v2649, 0.0
    %2838 = vadd.xlane.f32.xlu0 %v2837
    %v2839 = vpop.xlane.xlu0 %2838
    %v2840 = vsel %vm1394, %v2650, 0.0
    %2841 = vadd.xlane.f32.xlu0 %v2840
    %v2842 = vpop.xlane.xlu0 %2841
    %v2843 = vsel %vm1394, %v2651, 0.0
    %2844 = vadd.xlane.f32.xlu0 %v2843
    %v2845 = vpop.xlane.xlu0 %2844
    %v2846 = vsel %vm1394, %v2652, 0.0
    %2847 = vadd.xlane.f32.xlu0 %v2846
    %v2848 = vpop.xlane.xlu0 %2847
    %v2849 = vsel %vm1394, %v2653, 0.0
    %2850 = vadd.xlane.f32.xlu0 %v2849
    %v2851 = vpop.xlane.xlu0 %2850
    %v2852 = vsel %vm1394, %v2654, 0.0
    %2853 = vadd.xlane.f32.xlu0 %v2852
    %v2854 = vpop.xlane.xlu0 %2853
    %v2855 = vsel %vm1394, %v2655, 0.0
    %2856 = vadd.xlane.f32.xlu0 %v2855
    %v2857 = vpop.xlane.xlu0 %2856
    %v2858 = vsel %vm1394, %v2656, 0.0
    %2859 = vadd.xlane.f32.xlu0 %v2858
    %v2860 = vpop.xlane.xlu0 %2859
    %v2861 = vsel %vm1394, %v2657, 0.0
    %2862 = vadd.xlane.f32.xlu0 %v2861
    %v2863 = vpop.xlane.xlu0 %2862
    %v2864 = vsel %vm1394, %v2658, 0.0
    %2865 = vadd.xlane.f32.xlu0 %v2864
    %v2866 = vpop.xlane.xlu0 %2865
    %v2867 = vsel %vm1394, %v2659, 0.0
    %2868 = vadd.xlane.f32.xlu0 %v2867
    %v2869 = vpop.xlane.xlu0 %2868
    %v2870 = vsel %vm1394, %v2660, 0.0
    %2871 = vadd.xlane.f32.xlu0 %v2870
    %v2872 = vpop.xlane.xlu0 %2871
    %v2873 = vsel %vm1394, %v2661, 0.0
    %2874 = vadd.xlane.f32.xlu0 %v2873
    %v2875 = vpop.xlane.xlu0 %2874
    %v2876 = vsel %vm1394, %v2662, 0.0
    %2877 = vadd.xlane.f32.xlu0 %v2876
    %v2878 = vpop.xlane.xlu0 %2877
    %v2879 = vsel %vm1394, %v2663, 0.0
    %2880 = vadd.xlane.f32.xlu0 %v2879
    %v2881 = vpop.xlane.xlu0 %2880
    %v2882 = vsel %vm1394, %v2664, 0.0
    %2883 = vadd.xlane.f32.xlu0 %v2882
    %v2884 = vpop.xlane.xlu0 %2883
    %v2885 = vsel %vm1394, %v2665, 0.0
    %2886 = vadd.xlane.f32.xlu0 %v2885
    %v2887 = vpop.xlane.xlu0 %2886
    %v2888 = vsel %vm1394, %v2666, 0.0
    %2889 = vadd.xlane.f32.xlu0 %v2888
    %v2890 = vpop.xlane.xlu0 %2889
    %v2891 = vsel %vm1394, %v2667, 0.0
    %2892 = vadd.xlane.f32.xlu0 %v2891
    %v2893 = vpop.xlane.xlu0 %2892
    %v2894 = vsel %vm1394, %v2668, 0.0
    %2895 = vadd.xlane.f32.xlu0 %v2894
    %v2896 = vpop.xlane.xlu0 %2895
    %v2897 = vsel %vm1394, %v2669, 0.0
    %2898 = vadd.xlane.f32.xlu0 %v2897
    %v2899 = vpop.xlane.xlu0 %2898
    %v2900 = vsel %vm1394, %v2670, 0.0
    %2901 = vadd.xlane.f32.xlu0 %v2900
    %v2902 = vpop.xlane.xlu0 %2901
    %v2903 = vsel %vm1394, %v2671, 0.0
    %2904 = vadd.xlane.f32.xlu0 %v2903
    %v2905 = vpop.xlane.xlu0 %2904
    %v2906 = vsel %vm1394, %v2672, 0.0
    %2907 = vadd.xlane.f32.xlu0 %v2906
    %v2908 = vpop.xlane.xlu0 %2907
    %v2909 = vsel %vm1394, %v2673, 0.0
    %2910 = vadd.xlane.f32.xlu0 %v2909
    %v2911 = vpop.xlane.xlu0 %2910
    %v2912 = vsel %vm1394, %v2674, 0.0
    %2913 = vadd.xlane.f32.xlu0 %v2912
    %v2914 = vpop.xlane.xlu0 %2913
    %v2915 = vsel %vm1394, %v2675, 0.0
    %2916 = vadd.xlane.f32.xlu0 %v2915
    %v2917 = vpop.xlane.xlu0 %2916
    %v2918 = vsel %vm1394, %v2676, 0.0
    %2919 = vadd.xlane.f32.xlu0 %v2918
    %v2920 = vpop.xlane.xlu0 %2919
    %v2921 = vsel %vm1394, %v2677, 0.0
    %2922 = vadd.xlane.f32.xlu0 %v2921
    %v2923 = vpop.xlane.xlu0 %2922
    %v2924 = vsel %vm1394, %v2678, 0.0
    %2925 = vadd.xlane.f32.xlu0 %v2924
    %v2926 = vpop.xlane.xlu0 %2925
    %v2927 = vsel %vm1394, %v2679, 0.0
    %2928 = vadd.xlane.f32.xlu0 %v2927
    %v2929 = vpop.xlane.xlu0 %2928
    %v2930 = vsel %vm1394, %v2680, 0.0
    %2931 = vadd.xlane.f32.xlu0 %v2930
    %v2932 = vpop.xlane.xlu0 %2931
    %v2933 = vsel %vm1394, %v2681, 0.0
    %2934 = vadd.xlane.f32.xlu0 %v2933
    %v2935 = vpop.xlane.xlu0 %2934
    %v2936 = vsel %vm1394, %v2682, 0.0
    %2937 = vadd.xlane.f32.xlu0 %v2936
    %v2938 = vpop.xlane.xlu0 %2937
    %v2939 = vsel %vm1394, %v2683, 0.0
    %2940 = vadd.xlane.f32.xlu0 %v2939
    %v2941 = vpop.xlane.xlu0 %2940
    %v2942 = vsel %vm1394, %v2684, 0.0
    %2943 = vadd.xlane.f32.xlu0 %v2942
    %v2944 = vpop.xlane.xlu0 %2943
    %v2945 = vsel %vm1394, %v2685, 0.0
    %2946 = vadd.xlane.f32.xlu0 %v2945
    %v2947 = vpop.xlane.xlu0 %2946
    %v2948 = vsel %vm1394, %v2686, 0.0
    %2949 = vadd.xlane.f32.xlu0 %v2948
    %v2950 = vpop.xlane.xlu0 %2949
    %v2951 = vsel %vm1394, %v2687, 0.0
    %2952 = vadd.xlane.f32.xlu0 %v2951
    %v2953 = vpop.xlane.xlu0 %2952
    %v2954 = vsel %vm1394, %v2688, 0.0
    %2955 = vadd.xlane.f32.xlu0 %v2954
    %v2956 = vpop.xlane.xlu0 %2955
    %v2957 = vsel %vm1394, %v2689, 0.0
    %2958 = vadd.xlane.f32.xlu0 %v2957
    %v2959 = vpop.xlane.xlu0 %2958
    %v2960 = vsel %vm1394, %v2690, 0.0
    %2961 = vadd.xlane.f32.xlu0 %v2960
    %v2962 = vpop.xlane.xlu0 %2961
    %v2963 = vsel %vm1394, %v2691, 0.0
    %2964 = vadd.xlane.f32.xlu0 %v2963
    %v2965 = vpop.xlane.xlu0 %2964
    %v2966 = vsel %vm1394, %v2692, 0.0
    %2967 = vadd.xlane.f32.xlu0 %v2966
    %v2968 = vpop.xlane.xlu0 %2967
    %v2969 = vsel %vm1394, %v2693, 0.0
    %2970 = vadd.xlane.f32.xlu0 %v2969
    %v2971 = vpop.xlane.xlu0 %2970
    %v2972 = vsel %vm1394, %v2694, 0.0
    %2973 = vadd.xlane.f32.xlu0 %v2972
    %v2974 = vpop.xlane.xlu0 %2973
    %v2975 = vsel %vm1394, %v2695, 0.0
    %2976 = vadd.xlane.f32.xlu0 %v2975
    %v2977 = vpop.xlane.xlu0 %2976
    %v2978 = vsel %vm1394, %v2696, 0.0
    %2979 = vadd.xlane.f32.xlu0 %v2978
    %v2980 = vpop.xlane.xlu0 %2979
    %v2981 = vsel %vm1394, %v2697, 0.0
    %2982 = vadd.xlane.f32.xlu0 %v2981
    %v2983 = vpop.xlane.xlu0 %2982
    %v2984 = vsel %vm1394, %v2698, 0.0
    %2985 = vadd.xlane.f32.xlu0 %v2984
    %v2986 = vpop.xlane.xlu0 %2985
    %v2987 = vsel %vm1394, %v2699, 0.0
    %2988 = vadd.xlane.f32.xlu0 %v2987
    %v2989 = vpop.xlane.xlu0 %2988
    %v2990 = vsel %vm1394, %v2700, 0.0
    %2991 = vadd.xlane.f32.xlu0 %v2990
    %v2992 = vpop.xlane.xlu0 %2991
    %v2993 = vsel %vm1394, %v2701, 0.0
    %2994 = vadd.xlane.f32.xlu0 %v2993
    %v2995 = vpop.xlane.xlu0 %2994
    %v2996 = vsel %vm1394, %v2702, 0.0
    %2997 = vadd.xlane.f32.xlu0 %v2996
    %v2998 = vpop.xlane.xlu0 %2997
    %v2999 = vsel %vm1394, %v2703, 0.0
    %3000 = vadd.xlane.f32.xlu0 %v2999
    %v3001 = vpop.xlane.xlu0 %3000
    %v3002 = vsel %vm1394, %v2704, 0.0
    %3003 = vadd.xlane.f32.xlu0 %v3002
    %v3004 = vpop.xlane.xlu0 %3003
    %v3005 = vsel %vm1394, %v2705, 0.0
    %3006 = vadd.xlane.f32.xlu0 %v3005
    %v3007 = vpop.xlane.xlu0 %3006
    %v3008 = vsel %vm1394, %v2706, 0.0
    %3009 = vadd.xlane.f32.xlu0 %v3008
    %v3010 = vpop.xlane.xlu0 %3009
    %v3011 = vsel %vm1394, %v2707, 0.0
    %3012 = vadd.xlane.f32.xlu0 %v3011
    %v3013 = vpop.xlane.xlu0 %3012
    %v3014 = vsel %vm1394, %v2708, 0.0
    %3015 = vadd.xlane.f32.xlu0 %v3014
    %v3016 = vpop.xlane.xlu0 %3015
    %v3017 = vsel %vm1394, %v2709, 0.0
    %3018 = vadd.xlane.f32.xlu0 %v3017
    %v3019 = vpop.xlane.xlu0 %3018
    %v3020 = vsel %vm1394, %v2710, 0.0
    %3021 = vadd.xlane.f32.xlu0 %v3020
    %v3022 = vpop.xlane.xlu0 %3021
    %v3023 = vsel %vm1394, %v2711, 0.0
    %3024 = vadd.xlane.f32.xlu0 %v3023
    %v3025 = vpop.xlane.xlu0 %3024
    %v3026 = vsel %vm1394, %v2712, 0.0
    %3027 = vadd.xlane.f32.xlu0 %v3026
    %v3028 = vpop.xlane.xlu0 %3027
    %v3029 = vsel %vm1394, %v2713, 0.0
    %3030 = vadd.xlane.f32.xlu0 %v3029
    %v3031 = vpop.xlane.xlu0 %3030
    %v3032 = vsel %vm1394, %v2714, 0.0
    %3033 = vadd.xlane.f32.xlu0 %v3032
    %v3034 = vpop.xlane.xlu0 %3033
    %v3035 = vsel %vm1394, %v2715, 0.0
    %3036 = vadd.xlane.f32.xlu0 %v3035
    %v3037 = vpop.xlane.xlu0 %3036
    %v3038 = vsel %vm1394, %v2716, 0.0
    %3039 = vadd.xlane.f32.xlu0 %v3038
    %v3040 = vpop.xlane.xlu0 %3039
    %v3041 = vsel %vm1394, %v2717, 0.0
    %3042 = vadd.xlane.f32.xlu0 %v3041
    %v3043 = vpop.xlane.xlu0 %3042
    %v3044 = vsel %vm1394, %v2718, 0.0
    %3045 = vadd.xlane.f32.xlu0 %v3044
    %v3046 = vpop.xlane.xlu0 %3045
    %v3047 = vsel %vm1394, %v2719, 0.0
    %3048 = vadd.xlane.f32.xlu0 %v3047
    %v3049 = vpop.xlane.xlu0 %3048
    %v3050 = vsel %vm1394, %v2720, 0.0
    %3051 = vadd.xlane.f32.xlu0 %v3050
    %v3052 = vpop.xlane.xlu0 %3051
    %v3053 = vsel %vm1394, %v2721, 0.0
    %3054 = vadd.xlane.f32.xlu0 %v3053
    %v3055 = vpop.xlane.xlu0 %3054
    %v3056 = vsel %vm1394, %v2722, 0.0
    %3057 = vadd.xlane.f32.xlu0 %v3056
    %v3058 = vpop.xlane.xlu0 %3057
    %v3059 = vsel %vm1394, %v2723, 0.0
    %3060 = vadd.xlane.f32.xlu0 %v3059
    %v3061 = vpop.xlane.xlu0 %3060
    %v3062 = vsel %vm1394, %v2724, 0.0
    %3063 = vadd.xlane.f32.xlu0 %v3062
    %v3064 = vpop.xlane.xlu0 %3063
    %v3065 = vsel %vm1394, %v2725, 0.0
    %3066 = vadd.xlane.f32.xlu0 %v3065
    %v3067 = vpop.xlane.xlu0 %3066
    %v3068 = vsel %vm1394, %v2726, 0.0
    %3069 = vadd.xlane.f32.xlu0 %v3068
    %v3070 = vpop.xlane.xlu0 %3069
    %v3071 = vsel %vm1394, %v2727, 0.0
    %3072 = vadd.xlane.f32.xlu0 %v3071
    %v3073 = vpop.xlane.xlu0 %3072
    %v3074 = vsel %vm1394, %v2728, 0.0
    %3075 = vadd.xlane.f32.xlu0 %v3074
    %v3076 = vpop.xlane.xlu0 %3075
    %v3077 = vsel %vm1394, %v2729, 0.0
    %3078 = vadd.xlane.f32.xlu0 %v3077
    %v3079 = vpop.xlane.xlu0 %3078
    %v3080 = vsel %vm1394, %v2730, 0.0
    %3081 = vadd.xlane.f32.xlu0 %v3080
    %v3082 = vpop.xlane.xlu0 %3081
    %v3083 = vsel %vm1394, %v2731, 0.0
    %3084 = vadd.xlane.f32.xlu0 %v3083
    %v3085 = vpop.xlane.xlu0 %3084
    %v3086 = vsel %vm1394, %v2732, 0.0
    %3087 = vadd.xlane.f32.xlu0 %v3086
    %v3088 = vpop.xlane.xlu0 %3087
    %v3089 = vsel %vm1394, %v2733, 0.0
    %3090 = vadd.xlane.f32.xlu0 %v3089
    %v3091 = vpop.xlane.xlu0 %3090
    %v3092 = vsel %vm1394, %v2734, 0.0
    %3093 = vadd.xlane.f32.xlu0 %v3092
    %v3094 = vpop.xlane.xlu0 %3093
    %v3095 = vsel %vm1394, %v2735, 0.0
    %3096 = vadd.xlane.f32.xlu0 %v3095
    %v3097 = vpop.xlane.xlu0 %3096
    %v3098 = vsel %vm1394, %v2736, 0.0
    %3099 = vadd.xlane.f32.xlu0 %v3098
    %v3100 = vpop.xlane.xlu0 %3099
    %v3101 = vsel %vm1394, %v2737, 0.0
    %3102 = vadd.xlane.f32.xlu0 %v3101
    %v3103 = vpop.xlane.xlu0 %3102
    %v3104 = vsel %vm1394, %v2738, 0.0
    %3105 = vadd.xlane.f32.xlu0 %v3104
    %v3106 = vpop.xlane.xlu0 %3105
    %v3107 = vsel %vm1394, %v2739, 0.0
    %3108 = vadd.xlane.f32.xlu0 %v3107
    %v3109 = vpop.xlane.xlu0 %3108
    %v3110 = vsel %vm1394, %v2740, 0.0
    %3111 = vadd.xlane.f32.xlu0 %v3110
    %v3112 = vpop.xlane.xlu0 %3111
    %v3113 = vsel %vm1394, %v2741, 0.0
    %3114 = vadd.xlane.f32.xlu0 %v3113
    %v3115 = vpop.xlane.xlu0 %3114
    %v3116 = vsel %vm1394, %v2742, 0.0
    %3117 = vadd.xlane.f32.xlu0 %v3116
    %v3118 = vpop.xlane.xlu0 %3117
    %v3119 = vsel %vm1394, %v2743, 0.0
    %3120 = vadd.xlane.f32.xlu0 %v3119
    %v3121 = vpop.xlane.xlu0 %3120
    %v3122 = vsel %vm1394, %v2744, 0.0
    %3123 = vadd.xlane.f32.xlu0 %v3122
    %v3124 = vpop.xlane.xlu0 %3123
    %v3125 = vsel %vm1394, %v2745, 0.0
    %3126 = vadd.xlane.f32.xlu0 %v3125
    %v3127 = vpop.xlane.xlu0 %3126
    %v3128 = vsel %vm1394, %v2746, 0.0
    %3129 = vadd.xlane.f32.xlu0 %v3128
    %v3130 = vpop.xlane.xlu0 %3129
    %s3131 = sld [smem:[#allocation2]]
    %v3132 = vstv %s3131
    %v3133 = vadd.f32 %v2749, %v3132
    %v3134 = vadd.f32 %v2752, %v3132
    %v3135 = vadd.f32 %v2755, %v3132
    %v3136 = vadd.f32 %v2758, %v3132
    %v3137 = vadd.f32 %v2761, %v3132
    %v3138 = vadd.f32 %v2764, %v3132
    %v3139 = vadd.f32 %v2767, %v3132
    %v3140 = vadd.f32 %v2770, %v3132
    %v3141 = vadd.f32 %v2773, %v3132
    %v3142 = vadd.f32 %v2776, %v3132
    %v3143 = vadd.f32 %v2779, %v3132
    %v3144 = vadd.f32 %v2782, %v3132
    %v3145 = vadd.f32 %v2785, %v3132
    %v3146 = vadd.f32 %v2788, %v3132
    %v3147 = vadd.f32 %v2791, %v3132
    %v3148 = vadd.f32 %v2794, %v3132
    %v3149 = vadd.f32 %v2797, %v3132
    %v3150 = vadd.f32 %v2800, %v3132
    %v3151 = vadd.f32 %v2803, %v3132
    %v3152 = vadd.f32 %v2806, %v3132
    %v3153 = vadd.f32 %v2809, %v3132
    %v3154 = vadd.f32 %v2812, %v3132
    %v3155 = vadd.f32 %v2815, %v3132
    %v3156 = vadd.f32 %v2818, %v3132
    %v3157 = vadd.f32 %v2821, %v3132
    %v3158 = vadd.f32 %v2824, %v3132
    %v3159 = vadd.f32 %v2827, %v3132
    %v3160 = vadd.f32 %v2830, %v3132
    %v3161 = vadd.f32 %v2833, %v3132
    %v3162 = vadd.f32 %v2836, %v3132
    %v3163 = vadd.f32 %v2839, %v3132
    %v3164 = vadd.f32 %v2842, %v3132
    %v3165 = vadd.f32 %v2845, %v3132
    %v3166 = vadd.f32 %v2848, %v3132
    %v3167 = vadd.f32 %v2851, %v3132
    %v3168 = vadd.f32 %v2854, %v3132
    %v3169 = vadd.f32 %v2857, %v3132
    %v3170 = vadd.f32 %v2860, %v3132
    %v3171 = vadd.f32 %v2863, %v3132
    %v3172 = vadd.f32 %v2866, %v3132
    %v3173 = vadd.f32 %v2869, %v3132
    %v3174 = vadd.f32 %v2872, %v3132
    %v3175 = vadd.f32 %v2875, %v3132
    %v3176 = vadd.f32 %v2878, %v3132
    %v3177 = vadd.f32 %v2881, %v3132
    %v3178 = vadd.f32 %v2884, %v3132
    %v3179 = vadd.f32 %v2887, %v3132
    %v3180 = vadd.f32 %v2890, %v3132
    %v3181 = vadd.f32 %v2893, %v3132
    %v3182 = vadd.f32 %v2896, %v3132
    %v3183 = vadd.f32 %v2899, %v3132
    %v3184 = vadd.f32 %v2902, %v3132
    %v3185 = vadd.f32 %v2905, %v3132
    %v3186 = vadd.f32 %v2908, %v3132
    %v3187 = vadd.f32 %v2911, %v3132
    %v3188 = vadd.f32 %v2914, %v3132
    %v3189 = vadd.f32 %v2917, %v3132
    %v3190 = vadd.f32 %v2920, %v3132
    %v3191 = vadd.f32 %v2923, %v3132
    %v3192 = vadd.f32 %v2926, %v3132
    %v3193 = vadd.f32 %v2929, %v3132
    %v3194 = vadd.f32 %v2932, %v3132
    %v3195 = vadd.f32 %v2935, %v3132
    %v3196 = vadd.f32 %v2938, %v3132
    %v3197 = vadd.f32 %v2941, %v3132
    %v3198 = vadd.f32 %v2944, %v3132
    %v3199 = vadd.f32 %v2947, %v3132
    %v3200 = vadd.f32 %v2950, %v3132
    %v3201 = vadd.f32 %v2953, %v3132
    %v3202 = vadd.f32 %v2956, %v3132
    %v3203 = vadd.f32 %v2959, %v3132
    %v3204 = vadd.f32 %v2962, %v3132
    %v3205 = vadd.f32 %v2965, %v3132
    %v3206 = vadd.f32 %v2968, %v3132
    %v3207 = vadd.f32 %v2971, %v3132
    %v3208 = vadd.f32 %v2974, %v3132
    %v3209 = vadd.f32 %v2977, %v3132
    %v3210 = vadd.f32 %v2980, %v3132
    %v3211 = vadd.f32 %v2983, %v3132
    %v3212 = vadd.f32 %v2986, %v3132
    %v3213 = vadd.f32 %v2989, %v3132
    %v3214 = vadd.f32 %v2992, %v3132
    %v3215 = vadd.f32 %v2995, %v3132
    %v3216 = vadd.f32 %v2998, %v3132
    %v3217 = vadd.f32 %v3001, %v3132
    %v3218 = vadd.f32 %v3004, %v3132
    %v3219 = vadd.f32 %v3007, %v3132
    %v3220 = vadd.f32 %v3010, %v3132
    %v3221 = vadd.f32 %v3013, %v3132
    %v3222 = vadd.f32 %v3016, %v3132
    %v3223 = vadd.f32 %v3019, %v3132
    %v3224 = vadd.f32 %v3022, %v3132
    %v3225 = vadd.f32 %v3025, %v3132
    %v3226 = vadd.f32 %v3028, %v3132
    %v3227 = vadd.f32 %v3031, %v3132
    %v3228 = vadd.f32 %v3034, %v3132
    %v3229 = vadd.f32 %v3037, %v3132
    %v3230 = vadd.f32 %v3040, %v3132
    %v3231 = vadd.f32 %v3043, %v3132
    %v3232 = vadd.f32 %v3046, %v3132
    %v3233 = vadd.f32 %v3049, %v3132
    %v3234 = vadd.f32 %v3052, %v3132
    %v3235 = vadd.f32 %v3055, %v3132
    %v3236 = vadd.f32 %v3058, %v3132
    %v3237 = vadd.f32 %v3061, %v3132
    %v3238 = vadd.f32 %v3064, %v3132
    %v3239 = vadd.f32 %v3067, %v3132
    %v3240 = vadd.f32 %v3070, %v3132
    %v3241 = vadd.f32 %v3073, %v3132
    %v3242 = vadd.f32 %v3076, %v3132
    %v3243 = vadd.f32 %v3079, %v3132
    %v3244 = vadd.f32 %v3082, %v3132
    %v3245 = vadd.f32 %v3085, %v3132
    %v3246 = vadd.f32 %v3088, %v3132
    %v3247 = vadd.f32 %v3091, %v3132
    %v3248 = vadd.f32 %v3094, %v3132
    %v3249 = vadd.f32 %v3097, %v3132
    %v3250 = vadd.f32 %v3100, %v3132
    %v3251 = vadd.f32 %v3103, %v3132
    %v3252 = vadd.f32 %v3106, %v3132
    %v3253 = vadd.f32 %v3109, %v3132
    %v3254 = vadd.f32 %v3112, %v3132
    %v3255 = vadd.f32 %v3115, %v3132
    %v3256 = vadd.f32 %v3118, %v3132
    %v3257 = vadd.f32 %v3121, %v3132
    %v3258 = vadd.f32 %v3124, %v3132
    %v3259 = vadd.f32 %v3127, %v3132
    %v3260 = vadd.f32 %v3130, %v3132
    %v3389 = vlaneseq
    %v3390 = vand.u32 %v3389, 127
    %v3391 = vlaneseq
    %v3392 = vshrl.u32 %v3391, 7
    %v3393 = vsub.s32 %v3390, %v3392
    %v3394 = vrot.slane %v3133, %v3393
    %v3395 = vadd.s32 %v3390, 4294967288
    %v3396 = vlaneseq
    %v3397 = vshrl.u32 %v3396, 7
    %v3398 = vsub.s32 %v3395, %v3397
    %v3399 = vrot.slane %v3134, %v3398
    %vm3400 = vcmask 130112
    %v3401 = vsel %vm3400, %v3399, %v3394
    %v3402 = vadd.s32 %v3390, 4294967280
    %v3403 = vlaneseq
    %v3404 = vshrl.u32 %v3403, 7
    %v3405 = vsub.s32 %v3402, %v3404
    %v3406 = vrot.slane %v3135, %v3405
    %vm3407 = vcmask 195712
    %v3408 = vsel %vm3407, %v3406, %v3401
    %v3409 = vadd.s32 %v3390, 4294967272
    %v3410 = vlaneseq
    %v3411 = vshrl.u32 %v3410, 7
    %v3412 = vsub.s32 %v3409, %v3411
    %v3413 = vrot.slane %v3136, %v3412
    %vm3414 = vcmask 261312
    %v3415 = vsel %vm3414, %v3413, %v3408
    %v3416 = vadd.s32 %v3390, 4294967264
    %v3417 = vlaneseq
    %v3418 = vshrl.u32 %v3417, 7
    %v3419 = vsub.s32 %v3416, %v3418
    %v3420 = vrot.slane %v3137, %v3419
    %vm3421 = vcmask 326912
    %v3422 = vsel %vm3421, %v3420, %v3415
    %v3423 = vadd.s32 %v3390, 4294967256
    %v3424 = vlaneseq
    %v3425 = vshrl.u32 %v3424, 7
    %v3426 = vsub.s32 %v3423, %v3425
    %v3427 = vrot.slane %v3138, %v3426
    %vm3428 = vcmask 392512
    %v3429 = vsel %vm3428, %v3427, %v3422
    %v3430 = vadd.s32 %v3390, 4294967248
    %v3431 = vlaneseq
    %v3432 = vshrl.u32 %v3431, 7
    %v3433 = vsub.s32 %v3430, %v3432
    %v3434 = vrot.slane %v3139, %v3433
    %vm3435 = vcmask 458112
    %v3436 = vsel %vm3435, %v3434, %v3429
    %v3437 = vadd.s32 %v3390, 4294967240
    %v3438 = vlaneseq
    %v3439 = vshrl.u32 %v3438, 7
    %v3440 = vsub.s32 %v3437, %v3439
    %v3441 = vrot.slane %v3140, %v3440
    %vm3442 = vcmask 523712
    %v3443 = vsel %vm3442, %v3441, %v3436
    %v3444 = vadd.s32 %v3390, 4294967232
    %v3445 = vlaneseq
    %v3446 = vshrl.u32 %v3445, 7
    %v3447 = vsub.s32 %v3444, %v3446
    %v3448 = vrot.slane %v3141, %v3447
    %vm3449 = vcmask 589312
    %v3450 = vsel %vm3449, %v3448, %v3443
    %v3451 = vadd.s32 %v3390, 4294967224
    %v3452 = vlaneseq
    %v3453 = vshrl.u32 %v3452, 7
    %v3454 = vsub.s32 %v3451, %v3453
    %v3455 = vrot.slane %v3142, %v3454
    %vm3456 = vcmask 654912
    %v3457 = vsel %vm3456, %v3455, %v3450
    %v3458 = vadd.s32 %v3390, 4294967216
    %v3459 = vlaneseq
    %v3460 = vshrl.u32 %v3459, 7
    %v3461 = vsub.s32 %v3458, %v3460
    %v3462 = vrot.slane %v3143, %v3461
    %vm3463 = vcmask 720512
    %v3464 = vsel %vm3463, %v3462, %v3457
    %v3465 = vadd.s32 %v3390, 4294967208
    %v3466 = vlaneseq
    %v3467 = vshrl.u32 %v3466, 7
    %v3468 = vsub.s32 %v3465, %v3467
    %v3469 = vrot.slane %v3144, %v3468
    %vm3470 = vcmask 786112
    %v3471 = vsel %vm3470, %v3469, %v3464
    %v3472 = vadd.s32 %v3390, 4294967200
    %v3473 = vlaneseq
    %v3474 = vshrl.u32 %v3473, 7
    %v3475 = vsub.s32 %v3472, %v3474
    %v3476 = vrot.slane %v3145, %v3475
    %vm3477 = vcmask 851712
    %v3478 = vsel %vm3477, %v3476, %v3471
    %v3479 = vadd.s32 %v3390, 4294967192
    %v3480 = vlaneseq
    %v3481 = vshrl.u32 %v3480, 7
    %v3482 = vsub.s32 %v3479, %v3481
    %v3483 = vrot.slane %v3146, %v3482
    %vm3484 = vcmask 917312
    %v3485 = vsel %vm3484, %v3483, %v3478
    %v3486 = vadd.s32 %v3390, 4294967184
    %v3487 = vlaneseq
    %v3488 = vshrl.u32 %v3487, 7
    %v3489 = vsub.s32 %v3486, %v3488
    %v3490 = vrot.slane %v3147, %v3489
    %vm3491 = vcmask 982912
    %v3492 = vsel %vm3491, %v3490, %v3485
    %v3493 = vadd.s32 %v3390, 4294967176
    %v3494 = vlaneseq
    %v3495 = vshrl.u32 %v3494, 7
    %v3496 = vsub.s32 %v3493, %v3495
    %v3497 = vrot.slane %v3148, %v3496
    %vm3498 = vcmask 1048512
    %v3499 = vsel %vm3498, %v3497, %v3492
    %v3500 = vlaneseq
    %v3501 = vshrl.u32 %v3500, 7
    %v3502 = vsub.s32 %v3390, %v3501
    %v3503 = vrot.slane %v3149, %v3502
    %v3504 = vlaneseq
    %v3505 = vshrl.u32 %v3504, 7
    %v3506 = vsub.s32 %v3395, %v3505
    %v3507 = vrot.slane %v3150, %v3506
    %v3508 = vsel %vm3400, %v3507, %v3503
    %v3509 = vlaneseq
    %v3510 = vshrl.u32 %v3509, 7
    %v3511 = vsub.s32 %v3402, %v3510
    %v3512 = vrot.slane %v3151, %v3511
    %v3513 = vsel %vm3407, %v3512, %v3508
    %v3514 = vlaneseq
    %v3515 = vshrl.u32 %v3514, 7
    %v3516 = vsub.s32 %v3409, %v3515
    %v3517 = vrot.slane %v3152, %v3516
    %v3518 = vsel %vm3414, %v3517, %v3513
    %v3519 = vlaneseq
    %v3520 = vshrl.u32 %v3519, 7
    %v3521 = vsub.s32 %v3416, %v3520
    %v3522 = vrot.slane %v3153, %v3521
    %v3523 = vsel %vm3421, %v3522, %v3518
    %v3524 = vlaneseq
    %v3525 = vshrl.u32 %v3524, 7
    %v3526 = vsub.s32 %v3423, %v3525
    %v3527 = vrot.slane %v3154, %v3526
    %v3528 = vsel %vm3428, %v3527, %v3523
    %v3529 = vlaneseq
    %v3530 = vshrl.u32 %v3529, 7
    %v3531 = vsub.s32 %v3430, %v3530
    %v3532 = vrot.slane %v3155, %v3531
    %v3533 = vsel %vm3435, %v3532, %v3528
    %v3534 = vlaneseq
    %v3535 = vshrl.u32 %v3534, 7
    %v3536 = vsub.s32 %v3437, %v3535
    %v3537 = vrot.slane %v3156, %v3536
    %v3538 = vsel %vm3442, %v3537, %v3533
    %v3539 = vlaneseq
    %v3540 = vshrl.u32 %v3539, 7
    %v3541 = vsub.s32 %v3444, %v3540
    %v3542 = vrot.slane %v3157, %v3541
    %v3543 = vsel %vm3449, %v3542, %v3538
    %v3544 = vlaneseq
    %v3545 = vshrl.u32 %v3544, 7
    %v3546 = vsub.s32 %v3451, %v3545
    %v3547 = vrot.slane %v3158, %v3546
    %v3548 = vsel %vm3456, %v3547, %v3543
    %v3549 = vlaneseq
    %v3550 = vshrl.u32 %v3549, 7
    %v3551 = vsub.s32 %v3458, %v3550
    %v3552 = vrot.slane %v3159, %v3551
    %v3553 = vsel %vm3463, %v3552, %v3548
    %v3554 = vlaneseq
    %v3555 = vshrl.u32 %v3554, 7
    %v3556 = vsub.s32 %v3465, %v3555
    %v3557 = vrot.slane %v3160, %v3556
    %v3558 = vsel %vm3470, %v3557, %v3553
    %v3559 = vlaneseq
    %v3560 = vshrl.u32 %v3559, 7
    %v3561 = vsub.s32 %v3472, %v3560
    %v3562 = vrot.slane %v3161, %v3561
    %v3563 = vsel %vm3477, %v3562, %v3558
    %v3564 = vlaneseq
    %v3565 = vshrl.u32 %v3564, 7
    %v3566 = vsub.s32 %v3479, %v3565
    %v3567 = vrot.slane %v3162, %v3566
    %v3568 = vsel %vm3484, %v3567, %v3563
    %v3569 = vlaneseq
    %v3570 = vshrl.u32 %v3569, 7
    %v3571 = vsub.s32 %v3486, %v3570
    %v3572 = vrot.slane %v3163, %v3571
    %v3573 = vsel %vm3491, %v3572, %v3568
    %v3574 = vlaneseq
    %v3575 = vshrl.u32 %v3574, 7
    %v3576 = vsub.s32 %v3493, %v3575
    %v3577 = vrot.slane %v3164, %v3576
    %v3578 = vsel %vm3498, %v3577, %v3573
    %v3579 = vlaneseq
    %v3580 = vshrl.u32 %v3579, 7
    %v3581 = vsub.s32 %v3390, %v3580
    %v3582 = vrot.slane %v3165, %v3581
    %v3583 = vlaneseq
    %v3584 = vshrl.u32 %v3583, 7
    %v3585 = vsub.s32 %v3395, %v3584
    %v3586 = vrot.slane %v3166, %v3585
    %v3587 = vsel %vm3400, %v3586, %v3582
    %v3588 = vlaneseq
    %v3589 = vshrl.u32 %v3588, 7
    %v3590 = vsub.s32 %v3402, %v3589
    %v3591 = vrot.slane %v3167, %v3590
    %v3592 = vsel %vm3407, %v3591, %v3587
    %v3593 = vlaneseq
    %v3594 = vshrl.u32 %v3593, 7
    %v3595 = vsub.s32 %v3409, %v3594
    %v3596 = vrot.slane %v3168, %v3595
    %v3597 = vsel %vm3414, %v3596, %v3592
    %v3598 = vlaneseq
    %v3599 = vshrl.u32 %v3598, 7
    %v3600 = vsub.s32 %v3416, %v3599
    %v3601 = vrot.slane %v3169, %v3600
    %v3602 = vsel %vm3421, %v3601, %v3597
    %v3603 = vlaneseq
    %v3604 = vshrl.u32 %v3603, 7
    %v3605 = vsub.s32 %v3423, %v3604
    %v3606 = vrot.slane %v3170, %v3605
    %v3607 = vsel %vm3428, %v3606, %v3602
    %v3608 = vlaneseq
    %v3609 = vshrl.u32 %v3608, 7
    %v3610 = vsub.s32 %v3430, %v3609
    %v3611 = vrot.slane %v3171, %v3610
    %v3612 = vsel %vm3435, %v3611, %v3607
    %v3613 = vlaneseq
    %v3614 = vshrl.u32 %v3613, 7
    %v3615 = vsub.s32 %v3437, %v3614
    %v3616 = vrot.slane %v3172, %v3615
    %v3617 = vsel %vm3442, %v3616, %v3612
    %v3618 = vlaneseq
    %v3619 = vshrl.u32 %v3618, 7
    %v3620 = vsub.s32 %v3444, %v3619
    %v3621 = vrot.slane %v3173, %v3620
    %v3622 = vsel %vm3449, %v3621, %v3617
    %v3623 = vlaneseq
    %v3624 = vshrl.u32 %v3623, 7
    %v3625 = vsub.s32 %v3451, %v3624
    %v3626 = vrot.slane %v3174, %v3625
    %v3627 = vsel %vm3456, %v3626, %v3622
    %v3628 = vlaneseq
    %v3629 = vshrl.u32 %v3628, 7
    %v3630 = vsub.s32 %v3458, %v3629
    %v3631 = vrot.slane %v3175, %v3630
    %v3632 = vsel %vm3463, %v3631, %v3627
    %v3633 = vlaneseq
    %v3634 = vshrl.u32 %v3633, 7
    %v3635 = vsub.s32 %v3465, %v3634
    %v3636 = vrot.slane %v3176, %v3635
    %v3637 = vsel %vm3470, %v3636, %v3632
    %v3638 = vlaneseq
    %v3639 = vshrl.u32 %v3638, 7
    %v3640 = vsub.s32 %v3472, %v3639
    %v3641 = vrot.slane %v3177, %v3640
    %v3642 = vsel %vm3477, %v3641, %v3637
    %v3643 = vlaneseq
    %v3644 = vshrl.u32 %v3643, 7
    %v3645 = vsub.s32 %v3479, %v3644
    %v3646 = vrot.slane %v3178, %v3645
    %v3647 = vsel %vm3484, %v3646, %v3642
    %v3648 = vlaneseq
    %v3649 = vshrl.u32 %v3648, 7
    %v3650 = vsub.s32 %v3486, %v3649
    %v3651 = vrot.slane %v3179, %v3650
    %v3652 = vsel %vm3491, %v3651, %v3647
    %v3653 = vlaneseq
    %v3654 = vshrl.u32 %v3653, 7
    %v3655 = vsub.s32 %v3493, %v3654
    %v3656 = vrot.slane %v3180, %v3655
    %v3657 = vsel %vm3498, %v3656, %v3652
    %v3658 = vlaneseq
    %v3659 = vshrl.u32 %v3658, 7
    %v3660 = vsub.s32 %v3390, %v3659
    %v3661 = vrot.slane %v3181, %v3660
    %v3662 = vlaneseq
    %v3663 = vshrl.u32 %v3662, 7
    %v3664 = vsub.s32 %v3395, %v3663
    %v3665 = vrot.slane %v3182, %v3664
    %v3666 = vsel %vm3400, %v3665, %v3661
    %v3667 = vlaneseq
    %v3668 = vshrl.u32 %v3667, 7
    %v3669 = vsub.s32 %v3402, %v3668
    %v3670 = vrot.slane %v3183, %v3669
    %v3671 = vsel %vm3407, %v3670, %v3666
    %v3672 = vlaneseq
    %v3673 = vshrl.u32 %v3672, 7
    %v3674 = vsub.s32 %v3409, %v3673
    %v3675 = vrot.slane %v3184, %v3674
    %v3676 = vsel %vm3414, %v3675, %v3671
    %v3677 = vlaneseq
    %v3678 = vshrl.u32 %v3677, 7
    %v3679 = vsub.s32 %v3416, %v3678
    %v3680 = vrot.slane %v3185, %v3679
    %v3681 = vsel %vm3421, %v3680, %v3676
    %v3682 = vlaneseq
    %v3683 = vshrl.u32 %v3682, 7
    %v3684 = vsub.s32 %v3423, %v3683
    %v3685 = vrot.slane %v3186, %v3684
    %v3686 = vsel %vm3428, %v3685, %v3681
    %v3687 = vlaneseq
    %v3688 = vshrl.u32 %v3687, 7
    %v3689 = vsub.s32 %v3430, %v3688
    %v3690 = vrot.slane %v3187, %v3689
    %v3691 = vsel %vm3435, %v3690, %v3686
    %v3692 = vlaneseq
    %v3693 = vshrl.u32 %v3692, 7
    %v3694 = vsub.s32 %v3437, %v3693
    %v3695 = vrot.slane %v3188, %v3694
    %v3696 = vsel %vm3442, %v3695, %v3691
    %v3697 = vlaneseq
    %v3698 = vshrl.u32 %v3697, 7
    %v3699 = vsub.s32 %v3444, %v3698
    %v3700 = vrot.slane %v3189, %v3699
    %v3701 = vsel %vm3449, %v3700, %v3696
    %v3702 = vlaneseq
    %v3703 = vshrl.u32 %v3702, 7
    %v3704 = vsub.s32 %v3451, %v3703
    %v3705 = vrot.slane %v3190, %v3704
    %v3706 = vsel %vm3456, %v3705, %v3701
    %v3707 = vlaneseq
    %v3708 = vshrl.u32 %v3707, 7
    %v3709 = vsub.s32 %v3458, %v3708
    %v3710 = vrot.slane %v3191, %v3709
    %v3711 = vsel %vm3463, %v3710, %v3706
    %v3712 = vlaneseq
    %v3713 = vshrl.u32 %v3712, 7
    %v3714 = vsub.s32 %v3465, %v3713
    %v3715 = vrot.slane %v3192, %v3714
    %v3716 = vsel %vm3470, %v3715, %v3711
    %v3717 = vlaneseq
    %v3718 = vshrl.u32 %v3717, 7
    %v3719 = vsub.s32 %v3472, %v3718
    %v3720 = vrot.slane %v3193, %v3719
    %v3721 = vsel %vm3477, %v3720, %v3716
    %v3722 = vlaneseq
    %v3723 = vshrl.u32 %v3722, 7
    %v3724 = vsub.s32 %v3479, %v3723
    %v3725 = vrot.slane %v3194, %v3724
    %v3726 = vsel %vm3484, %v3725, %v3721
    %v3727 = vlaneseq
    %v3728 = vshrl.u32 %v3727, 7
    %v3729 = vsub.s32 %v3486, %v3728
    %v3730 = vrot.slane %v3195, %v3729
    %v3731 = vsel %vm3491, %v3730, %v3726
    %v3732 = vlaneseq
    %v3733 = vshrl.u32 %v3732, 7
    %v3734 = vsub.s32 %v3493, %v3733
    %v3735 = vrot.slane %v3196, %v3734
    %v3736 = vsel %vm3498, %v3735, %v3731
    %v3737 = vlaneseq
    %v3738 = vshrl.u32 %v3737, 7
    %v3739 = vsub.s32 %v3390, %v3738
    %v3740 = vrot.slane %v3197, %v3739
    %v3741 = vlaneseq
    %v3742 = vshrl.u32 %v3741, 7
    %v3743 = vsub.s32 %v3395, %v3742
    %v3744 = vrot.slane %v3198, %v3743
    %v3745 = vsel %vm3400, %v3744, %v3740
    %v3746 = vlaneseq
    %v3747 = vshrl.u32 %v3746, 7
    %v3748 = vsub.s32 %v3402, %v3747
    %v3749 = vrot.slane %v3199, %v3748
    %v3750 = vsel %vm3407, %v3749, %v3745
    %v3751 = vlaneseq
    %v3752 = vshrl.u32 %v3751, 7
    %v3753 = vsub.s32 %v3409, %v3752
    %v3754 = vrot.slane %v3200, %v3753
    %v3755 = vsel %vm3414, %v3754, %v3750
    %v3756 = vlaneseq
    %v3757 = vshrl.u32 %v3756, 7
    %v3758 = vsub.s32 %v3416, %v3757
    %v3759 = vrot.slane %v3201, %v3758
    %v3760 = vsel %vm3421, %v3759, %v3755
    %v3761 = vlaneseq
    %v3762 = vshrl.u32 %v3761, 7
    %v3763 = vsub.s32 %v3423, %v3762
    %v3764 = vrot.slane %v3202, %v3763
    %v3765 = vsel %vm3428, %v3764, %v3760
    %v3766 = vlaneseq
    %v3767 = vshrl.u32 %v3766, 7
    %v3768 = vsub.s32 %v3430, %v3767
    %v3769 = vrot.slane %v3203, %v3768
    %v3770 = vsel %vm3435, %v3769, %v3765
    %v3771 = vlaneseq
    %v3772 = vshrl.u32 %v3771, 7
    %v3773 = vsub.s32 %v3437, %v3772
    %v3774 = vrot.slane %v3204, %v3773
    %v3775 = vsel %vm3442, %v3774, %v3770
    %v3776 = vlaneseq
    %v3777 = vshrl.u32 %v3776, 7
    %v3778 = vsub.s32 %v3444, %v3777
    %v3779 = vrot.slane %v3205, %v3778
    %v3780 = vsel %vm3449, %v3779, %v3775
    %v3781 = vlaneseq
    %v3782 = vshrl.u32 %v3781, 7
    %v3783 = vsub.s32 %v3451, %v3782
    %v3784 = vrot.slane %v3206, %v3783
    %v3785 = vsel %vm3456, %v3784, %v3780
    %v3786 = vlaneseq
    %v3787 = vshrl.u32 %v3786, 7
    %v3788 = vsub.s32 %v3458, %v3787
    %v3789 = vrot.slane %v3207, %v3788
    %v3790 = vsel %vm3463, %v3789, %v3785
    %v3791 = vlaneseq
    %v3792 = vshrl.u32 %v3791, 7
    %v3793 = vsub.s32 %v3465, %v3792
    %v3794 = vrot.slane %v3208, %v3793
    %v3795 = vsel %vm3470, %v3794, %v3790
    %v3796 = vlaneseq
    %v3797 = vshrl.u32 %v3796, 7
    %v3798 = vsub.s32 %v3472, %v3797
    %v3799 = vrot.slane %v3209, %v3798
    %v3800 = vsel %vm3477, %v3799, %v3795
    %v3801 = vlaneseq
    %v3802 = vshrl.u32 %v3801, 7
    %v3803 = vsub.s32 %v3479, %v3802
    %v3804 = vrot.slane %v3210, %v3803
    %v3805 = vsel %vm3484, %v3804, %v3800
    %v3806 = vlaneseq
    %v3807 = vshrl.u32 %v3806, 7
    %v3808 = vsub.s32 %v3486, %v3807
    %v3809 = vrot.slane %v3211, %v3808
    %v3810 = vsel %vm3491, %v3809, %v3805
    %v3811 = vlaneseq
    %v3812 = vshrl.u32 %v3811, 7
    %v3813 = vsub.s32 %v3493, %v3812
    %v3814 = vrot.slane %v3212, %v3813
    %v3815 = vsel %vm3498, %v3814, %v3810
    %v3816 = vlaneseq
    %v3817 = vshrl.u32 %v3816, 7
    %v3818 = vsub.s32 %v3390, %v3817
    %v3819 = vrot.slane %v3213, %v3818
    %v3820 = vlaneseq
    %v3821 = vshrl.u32 %v3820, 7
    %v3822 = vsub.s32 %v3395, %v3821
    %v3823 = vrot.slane %v3214, %v3822
    %v3824 = vsel %vm3400, %v3823, %v3819
    %v3825 = vlaneseq
    %v3826 = vshrl.u32 %v3825, 7
    %v3827 = vsub.s32 %v3402, %v3826
    %v3828 = vrot.slane %v3215, %v3827
    %v3829 = vsel %vm3407, %v3828, %v3824
    %v3830 = vlaneseq
    %v3831 = vshrl.u32 %v3830, 7
    %v3832 = vsub.s32 %v3409, %v3831
    %v3833 = vrot.slane %v3216, %v3832
    %v3834 = vsel %vm3414, %v3833, %v3829
    %v3835 = vlaneseq
    %v3836 = vshrl.u32 %v3835, 7
    %v3837 = vsub.s32 %v3416, %v3836
    %v3838 = vrot.slane %v3217, %v3837
    %v3839 = vsel %vm3421, %v3838, %v3834
    %v3840 = vlaneseq
    %v3841 = vshrl.u32 %v3840, 7
    %v3842 = vsub.s32 %v3423, %v3841
    %v3843 = vrot.slane %v3218, %v3842
    %v3844 = vsel %vm3428, %v3843, %v3839
    %v3845 = vlaneseq
    %v3846 = vshrl.u32 %v3845, 7
    %v3847 = vsub.s32 %v3430, %v3846
    %v3848 = vrot.slane %v3219, %v3847
    %v3849 = vsel %vm3435, %v3848, %v3844
    %v3850 = vlaneseq
    %v3851 = vshrl.u32 %v3850, 7
    %v3852 = vsub.s32 %v3437, %v3851
    %v3853 = vrot.slane %v3220, %v3852
    %v3854 = vsel %vm3442, %v3853, %v3849
    %v3855 = vlaneseq
    %v3856 = vshrl.u32 %v3855, 7
    %v3857 = vsub.s32 %v3444, %v3856
    %v3858 = vrot.slane %v3221, %v3857
    %v3859 = vsel %vm3449, %v3858, %v3854
    %v3860 = vlaneseq
    %v3861 = vshrl.u32 %v3860, 7
    %v3862 = vsub.s32 %v3451, %v3861
    %v3863 = vrot.slane %v3222, %v3862
    %v3864 = vsel %vm3456, %v3863, %v3859
    %v3865 = vlaneseq
    %v3866 = vshrl.u32 %v3865, 7
    %v3867 = vsub.s32 %v3458, %v3866
    %v3868 = vrot.slane %v3223, %v3867
    %v3869 = vsel %vm3463, %v3868, %v3864
    %v3870 = vlaneseq
    %v3871 = vshrl.u32 %v3870, 7
    %v3872 = vsub.s32 %v3465, %v3871
    %v3873 = vrot.slane %v3224, %v3872
    %v3874 = vsel %vm3470, %v3873, %v3869
    %v3875 = vlaneseq
    %v3876 = vshrl.u32 %v3875, 7
    %v3877 = vsub.s32 %v3472, %v3876
    %v3878 = vrot.slane %v3225, %v3877
    %v3879 = vsel %vm3477, %v3878, %v3874
    %v3880 = vlaneseq
    %v3881 = vshrl.u32 %v3880, 7
    %v3882 = vsub.s32 %v3479, %v3881
    %v3883 = vrot.slane %v3226, %v3882
    %v3884 = vsel %vm3484, %v3883, %v3879
    %v3885 = vlaneseq
    %v3886 = vshrl.u32 %v3885, 7
    %v3887 = vsub.s32 %v3486, %v3886
    %v3888 = vrot.slane %v3227, %v3887
    %v3889 = vsel %vm3491, %v3888, %v3884
    %v3890 = vlaneseq
    %v3891 = vshrl.u32 %v3890, 7
    %v3892 = vsub.s32 %v3493, %v3891
    %v3893 = vrot.slane %v3228, %v3892
    %v3894 = vsel %vm3498, %v3893, %v3889
    %v3895 = vlaneseq
    %v3896 = vshrl.u32 %v3895, 7
    %v3897 = vsub.s32 %v3390, %v3896
    %v3898 = vrot.slane %v3229, %v3897
    %v3899 = vlaneseq
    %v3900 = vshrl.u32 %v3899, 7
    %v3901 = vsub.s32 %v3395, %v3900
    %v3902 = vrot.slane %v3230, %v3901
    %v3903 = vsel %vm3400, %v3902, %v3898
    %v3904 = vlaneseq
    %v3905 = vshrl.u32 %v3904, 7
    %v3906 = vsub.s32 %v3402, %v3905
    %v3907 = vrot.slane %v3231, %v3906
    %v3908 = vsel %vm3407, %v3907, %v3903
    %v3909 = vlaneseq
    %v3910 = vshrl.u32 %v3909, 7
    %v3911 = vsub.s32 %v3409, %v3910
    %v3912 = vrot.slane %v3232, %v3911
    %v3913 = vsel %vm3414, %v3912, %v3908
    %v3914 = vlaneseq
    %v3915 = vshrl.u32 %v3914, 7
    %v3916 = vsub.s32 %v3416, %v3915
    %v3917 = vrot.slane %v3233, %v3916
    %v3918 = vsel %vm3421, %v3917, %v3913
    %v3919 = vlaneseq
    %v3920 = vshrl.u32 %v3919, 7
    %v3921 = vsub.s32 %v3423, %v3920
    %v3922 = vrot.slane %v3234, %v3921
    %v3923 = vsel %vm3428, %v3922, %v3918
    %v3924 = vlaneseq
    %v3925 = vshrl.u32 %v3924, 7
    %v3926 = vsub.s32 %v3430, %v3925
    %v3927 = vrot.slane %v3235, %v3926
    %v3928 = vsel %vm3435, %v3927, %v3923
    %v3929 = vlaneseq
    %v3930 = vshrl.u32 %v3929, 7
    %v3931 = vsub.s32 %v3437, %v3930
    %v3932 = vrot.slane %v3236, %v3931
    %v3933 = vsel %vm3442, %v3932, %v3928
    %v3934 = vlaneseq
    %v3935 = vshrl.u32 %v3934, 7
    %v3936 = vsub.s32 %v3444, %v3935
    %v3937 = vrot.slane %v3237, %v3936
    %v3938 = vsel %vm3449, %v3937, %v3933
    %v3939 = vlaneseq
    %v3940 = vshrl.u32 %v3939, 7
    %v3941 = vsub.s32 %v3451, %v3940
    %v3942 = vrot.slane %v3238, %v3941
    %v3943 = vsel %vm3456, %v3942, %v3938
    %v3944 = vlaneseq
    %v3945 = vshrl.u32 %v3944, 7
    %v3946 = vsub.s32 %v3458, %v3945
    %v3947 = vrot.slane %v3239, %v3946
    %v3948 = vsel %vm3463, %v3947, %v3943
    %v3949 = vlaneseq
    %v3950 = vshrl.u32 %v3949, 7
    %v3951 = vsub.s32 %v3465, %v3950
    %v3952 = vrot.slane %v3240, %v3951
    %v3953 = vsel %vm3470, %v3952, %v3948
    %v3954 = vlaneseq
    %v3955 = vshrl.u32 %v3954, 7
    %v3956 = vsub.s32 %v3472, %v3955
    %v3957 = vrot.slane %v3241, %v3956
    %v3958 = vsel %vm3477, %v3957, %v3953
    %v3959 = vlaneseq
    %v3960 = vshrl.u32 %v3959, 7
    %v3961 = vsub.s32 %v3479, %v3960
    %v3962 = vrot.slane %v3242, %v3961
    %v3963 = vsel %vm3484, %v3962, %v3958
    %v3964 = vlaneseq
    %v3965 = vshrl.u32 %v3964, 7
    %v3966 = vsub.s32 %v3486, %v3965
    %v3967 = vrot.slane %v3243, %v3966
    %v3968 = vsel %vm3491, %v3967, %v3963
    %v3969 = vlaneseq
    %v3970 = vshrl.u32 %v3969, 7
    %v3971 = vsub.s32 %v3493, %v3970
    %v3972 = vrot.slane %v3244, %v3971
    %v3973 = vsel %vm3498, %v3972, %v3968
    %v3974 = vlaneseq
    %v3975 = vshrl.u32 %v3974, 7
    %v3976 = vsub.s32 %v3390, %v3975
    %v3977 = vrot.slane %v3245, %v3976
    %v3978 = vlaneseq
    %v3979 = vshrl.u32 %v3978, 7
    %v3980 = vsub.s32 %v3395, %v3979
    %v3981 = vrot.slane %v3246, %v3980
    %v3982 = vsel %vm3400, %v3981, %v3977
    %v3983 = vlaneseq
    %v3984 = vshrl.u32 %v3983, 7
    %v3985 = vsub.s32 %v3402, %v3984
    %v3986 = vrot.slane %v3247, %v3985
    %v3987 = vsel %vm3407, %v3986, %v3982
    %v3988 = vlaneseq
    %v3989 = vshrl.u32 %v3988, 7
    %v3990 = vsub.s32 %v3409, %v3989
    %v3991 = vrot.slane %v3248, %v3990
    %v3992 = vsel %vm3414, %v3991, %v3987
    %v3993 = vlaneseq
    %v3994 = vshrl.u32 %v3993, 7
    %v3995 = vsub.s32 %v3416, %v3994
    %v3996 = vrot.slane %v3249, %v3995
    %v3997 = vsel %vm3421, %v3996, %v3992
    %v3998 = vlaneseq
    %v3999 = vshrl.u32 %v3998, 7
    %v4000 = vsub.s32 %v3423, %v3999
    %v4001 = vrot.slane %v3250, %v4000
    %v4002 = vsel %vm3428, %v4001, %v3997
    %v4003 = vlaneseq
    %v4004 = vshrl.u32 %v4003, 7
    %v4005 = vsub.s32 %v3430, %v4004
    %v4006 = vrot.slane %v3251, %v4005
    %v4007 = vsel %vm3435, %v4006, %v4002
    %v4008 = vlaneseq
    %v4009 = vshrl.u32 %v4008, 7
    %v4010 = vsub.s32 %v3437, %v4009
    %v4011 = vrot.slane %v3252, %v4010
    %v4012 = vsel %vm3442, %v4011, %v4007
    %v4013 = vlaneseq
    %v4014 = vshrl.u32 %v4013, 7
    %v4015 = vsub.s32 %v3444, %v4014
    %v4016 = vrot.slane %v3253, %v4015
    %v4017 = vsel %vm3449, %v4016, %v4012
    %v4018 = vlaneseq
    %v4019 = vshrl.u32 %v4018, 7
    %v4020 = vsub.s32 %v3451, %v4019
    %v4021 = vrot.slane %v3254, %v4020
    %v4022 = vsel %vm3456, %v4021, %v4017
    %v4023 = vlaneseq
    %v4024 = vshrl.u32 %v4023, 7
    %v4025 = vsub.s32 %v3458, %v4024
    %v4026 = vrot.slane %v3255, %v4025
    %v4027 = vsel %vm3463, %v4026, %v4022
    %v4028 = vlaneseq
    %v4029 = vshrl.u32 %v4028, 7
    %v4030 = vsub.s32 %v3465, %v4029
    %v4031 = vrot.slane %v3256, %v4030
    %v4032 = vsel %vm3470, %v4031, %v4027
    %v4033 = vlaneseq
    %v4034 = vshrl.u32 %v4033, 7
    %v4035 = vsub.s32 %v3472, %v4034
    %v4036 = vrot.slane %v3257, %v4035
    %v4037 = vsel %vm3477, %v4036, %v4032
    %v4038 = vlaneseq
    %v4039 = vshrl.u32 %v4038, 7
    %v4040 = vsub.s32 %v3479, %v4039
    %v4041 = vrot.slane %v3258, %v4040
    %v4042 = vsel %vm3484, %v4041, %v4037
    %v4043 = vlaneseq
    %v4044 = vshrl.u32 %v4043, 7
    %v4045 = vsub.s32 %v3486, %v4044
    %v4046 = vrot.slane %v3259, %v4045
    %v4047 = vsel %vm3491, %v4046, %v4042
    %v4048 = vlaneseq
    %v4049 = vshrl.u32 %v4048, 7
    %v4050 = vsub.s32 %v3493, %v4049
    %v4051 = vrot.slane %v3260, %v4050
    %v4052 = vsel %vm3498, %v4051, %v4047
    %vm4053 = vcmask 1041409
    %v4054 = vsel %vm4053, %v3578, %v3499
    %vm4055 = vcmask 1042434
    %v4056 = vsel %vm4055, %v3657, %v4054
    %vm4057 = vcmask 1043459
    %v4058 = vsel %vm4057, %v3736, %v4056
    %vm4059 = vcmask 1044484
    %v4060 = vsel %vm4059, %v3815, %v4058
    %vm4061 = vcmask 1045509
    %v4062 = vsel %vm4061, %v3894, %v4060
    %vm4063 = vcmask 1046534
    %v4064 = vsel %vm4063, %v3973, %v4062
    %vm4065 = vcmask 1047559
    %v4066 = vsel %vm4065, %v4052, %v4064
    %4068 = vst [vmem:[#allocation3] sm:$0xff] %v4066
    // Predicated region
    $region30: #{tpu_custom_call.1} parent=1 // pred_check
      _
    $region31: #{tpu_custom_call.1} parent=1 // pred_check_branch
      %4070 = sbr.rel (0) target = $region33
    $region32: #{tpu_custom_call.1} parent=1 // pred_region
      %s4072 = ssub.s32 128, 128
      %4073 = vsyncadd [#allocation4], %s4072
      %s4075 = sshll.u32 [#allocation3], 4
      %s4076 = int_to_ptr.vmem [resolvable:$true] %s4075
      %4078 = dma.vmem_to_hbm [thread:$0]  %s4076, 128, %s7, [#allocation4]
    $region33: #{tpu_custom_call.1} parent=1 // pred_fallthru
      _
    // Predicated region
    $region34: #{tpu_custom_call.1} parent=1 // pred_check
      _
    $region35: #{tpu_custom_call.1} parent=1 // pred_check_branch
      %4080 = sbr.rel (0) target = $region37
    $region36: #{tpu_custom_call.1} parent=1 // pred_region
      %4081 = dma.done [#allocation4], 128
    $region37: #{tpu_custom_call.1} parent=1 // pred_fallthru
      _
    %4082 = vsyncpa [#allocation4], 1

</llo_original>
